<compile_context>
chip_gen: v6e
topology: v6e:2x2x1
jax: 0.10.0
libtpu: 0.0.40
codegen_flags: <defaults>
</compile_context>

<pallas_src>
import functools

import jax
import jax.numpy as jnp
from jax import lax
from jax.experimental import pallas as pl
from jax.experimental.pallas import tpu as pltpu


# ----------------------------- shared helpers -----------------------------

def _layernorm(x, g, b):
    """LayerNorm over the last (channel) dim, eps=1e-5 (PyTorch default)."""
    mu = jnp.mean(x, axis=-1, keepdims=True)
    xc = x - mu
    var = jnp.mean(xc * xc, axis=-1, keepdims=True)
    return xc * lax.rsqrt(var + 1e-5) * g + b


def _mxu(a, b):
    """(M,K)@(K,N) with bf16 operands, f32 MXU accumulation."""
    return jnp.dot(a.astype(jnp.bfloat16), b.astype(jnp.bfloat16),
                   preferred_element_type=jnp.float32)


# --------------------------- fused SAFECount kernel ---------------------------

def _safecount_fused_kernel(q0_ref, in_w_ref, in_b_ref, ln_g_ref, ln_b_ref,
                            kmat_ref, group_ref, vfold_ref, out_b_ref,
                            n1_g_ref, n1_b_ref,
                            c1_w_ref, c1_b_ref, c2_w_ref, c2_b_ref,
                            n2_g_ref, n2_b_ref,
                            o_ref,
                            qpad_ref, apad_ref, tpad_ref, hpad_ref,
                            *, head, head_dim, hp, wp, hq, wq, mn, mid):
    C = head * head_dim
    HM = head * mn
    HW = hq * wq
    T = hp * wp
    ph, pw = hp // 2, wp // 2
    scale = float(C * hp * wp) ** -0.5

    # One-time init: zero the padded-scratch halos (interior is overwritten
    # every block so the halo stays zero) and load the initial activation into
    # the resident output block, which carries the activation across blocks.
    @pl.when(pl.program_id(0) == 0)
    def _():
        qpad_ref[...] = jnp.zeros_like(qpad_ref)
        apad_ref[...] = jnp.zeros_like(apad_ref)
        tpad_ref[...] = jnp.zeros_like(tpad_ref)
        hpad_ref[...] = jnp.zeros_like(hpad_ref)
        o_ref[...] = q0_ref[...]

    act = o_ref[...]                                      # (HW, C) carried activation

    # ---- aggt: query path (in_conv 1x1 + LayerNorm); depends on act ----
    q = _layernorm(_mxu(act, in_w_ref[...]) + in_b_ref[...],
                   ln_g_ref[...], ln_b_ref[...])

    # ---- similarity: one im2col matmul against the pre-masked key matrix ----
    qpad_ref[ph:ph + hq, pw:pw + wq, :] = q.reshape(hq, wq, C)
    q_im = jnp.concatenate(
        [qpad_ref[t // wp:t // wp + hq, t % wp:t % wp + wq, :].reshape(HW, C)
         for t in range(T)], axis=-1)                     # (HW, T*C)
    s = _mxu(q_im, kmat_ref[...]) * scale                 # (HW, HM)

    # Double normalization (exact, a global exp constant cancels):
    #   attn = exp(s)^2 / (spatial-max per (head,exemplar) * exemplar-sum per (head,pixel))
    e = jnp.exp(s - jnp.max(s, keepdims=True))
    sn_den = jnp.max(e, axis=0, keepdims=True)            # (1, HM)
    en_den = jnp.dot(e, group_ref[...],
                     preferred_element_type=jnp.float32)  # (HW, HM) same-head sums
    attn = (e * e) / (sn_den * en_den)

    # ---- aggregation (+ out_conv folded into vfold) as one im2col matmul ----
    apad_ref[ph:ph + hq, pw:pw + wq, :] = attn.reshape(hq, wq, HM)
    a_im = jnp.concatenate(
        [apad_ref[t // wp:t // wp + hq, t % wp:t % wp + wq, :].reshape(HW, HM)
         for t in range(T)], axis=-1)                     # (HW, T*HM)
    tgt2 = _mxu(a_im, vfold_ref[...]) + out_b_ref[...]    # (HW, C)

    # residual + norm1
    t1 = _layernorm(act + tgt2, n1_g_ref[...], n1_b_ref[...])

    # ---- conv1 (3x3, C->mid) + ReLU as one im2col matmul ----
    tpad_ref[1:1 + hq, 1:1 + wq, :] = t1.reshape(hq, wq, C)
    t_im = jnp.concatenate(
        [tpad_ref[t // 3:t // 3 + hq, t % 3:t % 3 + wq, :].reshape(HW, C)
         for t in range(9)], axis=-1)                     # (HW, 9*C)
    h = jnp.maximum(_mxu(t_im, c1_w_ref[...]) + c1_b_ref[...], 0.0)

    # ---- conv2 (3x3, mid->C) as one im2col matmul ----
    hpad_ref[1:1 + hq, 1:1 + wq, :] = h.reshape(hq, wq, mid)
    h_im = jnp.concatenate(
        [hpad_ref[t // 3:t // 3 + hq, t % 3:t % 3 + wq, :].reshape(HW, mid)
         for t in range(9)], axis=-1)                     # (HW, 9*mid)
    t2 = _mxu(h_im, c2_w_ref[...]) + c2_b_ref[...]

    # residual (against the NORMED tensor, as in the reference) + norm2
    o_ref[...] = _layernorm(t1 + t2, n2_g_ref[...], n2_b_ref[...])


# ------------------------------ pallas wrapper ------------------------------

def _cspec(shape):
    zeros = (0,) * len(shape)
    return pl.BlockSpec(shape, lambda b, _z=zeros: _z)


def safecount_multiblock_forward(params, feat, feat_boxes, *, head, hp, wp,
                                 num_blocks):
    """feat: (1, C, H, W); feat_boxes: (MN, C, hp, wp)  -- NCHW like torch."""
    _, C, hq, wq = feat.shape
    mn = feat_boxes.shape[0]
    head_dim = C // head
    HW = hq * wq
    HM = head * mn
    T = hp * wp
    ph, pw = hp // 2, wp // 2
    bp = params["block"]          # get_clones deepcopies one block -> shared weights
    ap = bp["aggt"]
    mid = bp["c1_b"].shape[-1]

    # ---- layout glue + block-invariant precompute (plain JAX, done once) ----
    q0 = jnp.transpose(feat, (0, 2, 3, 1)).reshape(HW, C)
    kv_tap = jnp.transpose(feat_boxes, (2, 3, 0, 1)).reshape(T * mn, C)

    proj = kv_tap @ ap["in_w"] + ap["in_b"]               # in_conv(keys/values)
    kproj = _layernorm(proj, ap["ln_g"], ap["ln_b"])      # keys get LayerNorm
    vproj = proj                                          # values do not

    # block-diagonal head mask: row h*mn+m couples only to channels of head h
    headmask = ((jnp.arange(HM)[:, None] // mn) ==
                (jnp.arange(C)[None, :] // head_dim)).astype(jnp.float32)

    # similarity key matrix, tap-major rows: (T*C, HM)
    k_rep = jnp.tile(kproj.reshape(T, 1, mn, C), (1, head, 1, 1)).reshape(T, HM, C)
    k_rep = k_rep * headmask[None]
    kmat = jnp.transpose(k_rep, (0, 2, 1)).reshape(T * C, HM).astype(jnp.bfloat16)

    # value matrix: spatially flipped taps, head-masked, out_conv folded in
    v_rep = jnp.tile(vproj.reshape(T, 1, mn, C), (1, head, 1, 1)).reshape(T, HM, C)
    v_rep = (v_rep * headmask[None])[::-1]                # tap flip (conv w/ flipped v)
    vfold = jnp.einsum("thc,cd->thd", v_rep, ap["out_w"])
    vfold = vfold.reshape(T * HM, C).astype(jnp.bfloat16)

    # same-head summing matrix for the exemplar-sum normalization
    group = ((jnp.arange(HM)[:, None] // mn) ==
             (jnp.arange(HM)[None, :] // mn)).astype(jnp.float32)

    in_w = ap["in_w"].astype(jnp.bfloat16)
    c1_w = bp["c1_w"].reshape(9 * C, mid).astype(jnp.bfloat16)   # im2col layout
    c2_w = bp["c2_w"].reshape(9 * mid, C).astype(jnp.bfloat16)

    kern = functools.partial(_safecount_fused_kernel, head=head,
                             head_dim=head_dim, hp=hp, wp=wp, hq=hq, wq=wq,
                             mn=mn, mid=mid)

    operands = (q0, in_w, ap["in_b"], ap["ln_g"], ap["ln_b"],
                kmat, group, vfold, ap["out_b"], bp["n1_g"], bp["n1_b"],
                c1_w, bp["c1_b"], c2_w, bp["c2_b"], bp["n2_g"], bp["n2_b"])

    out = pl.pallas_call(
        kern,
        out_shape=jax.ShapeDtypeStruct((HW, C), jnp.float32),
        grid=(num_blocks,),
        in_specs=[_cspec(x.shape) for x in operands],
        out_specs=_cspec((HW, C)),
        scratch_shapes=[
            pltpu.VMEM((hq + 2 * ph, wq + 2 * pw, C), jnp.float32),   # qpad
            pltpu.VMEM((hq + 2 * ph, wq + 2 * pw, HM), jnp.float32),  # apad
            pltpu.VMEM((hq + 2, wq + 2, C), jnp.float32),             # tpad
            pltpu.VMEM((hq + 2, wq + 2, mid), jnp.float32),           # hpad
        ],
        compiler_params=pltpu.CompilerParams(
            dimension_semantics=("arbitrary",)),
    )(*operands)

    return jnp.transpose(out.reshape(1, hq, wq, C), (0, 3, 1, 2))


# --------------------------------- param init ----------------------------------

def _uniform(key, shape, fan_in):
    lim = 1.0 / (fan_in ** 0.5)
    return jax.random.uniform(key, shape, jnp.float32, -lim, lim)


def init_params(key, c, mid):
    ks = jax.random.split(key, 8)
    ones = jnp.ones((1, c), jnp.float32)
    zeros = jnp.zeros((1, c), jnp.float32)
    return {
        "block": {
            "aggt": {
                "in_w": _uniform(ks[0], (c, c), c),        # 1x1 conv: (Cin, Cout)
                "in_b": _uniform(ks[1], (1, c), c),
                "out_w": _uniform(ks[2], (c, c), c),
                "out_b": _uniform(ks[3], (1, c), c),
                "ln_g": ones, "ln_b": zeros,
            },
            # 3x3 convs stored as (tap=j*3+i, Cin, Cout)
            "c1_w": _uniform(ks[4], (9, c, mid), 9 * c),
            "c1_b": _uniform(ks[5], (1, mid), 9 * c),
            "c2_w": _uniform(ks[6], (9, mid, c), 9 * mid),
            "c2_b": _uniform(ks[7], (1, c), 9 * mid),
            "n1_g": ones, "n1_b": zeros,
            "n2_g": ones, "n2_b": zeros,
        },
    }


# ------------------------------------ main --------------------------------------

if __name__ == "__main__":
    EMBED, MID = 32, 16        # embed_dim, mid_dim
    HEAD = 4
    HQ = WQ = 8                # image feature spatial size
    HP = WP = 3                # exemplar spatial size (odd)
    MN = 3                     # number of exemplars
    BLOCKS = 2

    root = jax.random.PRNGKey(0)
    kp, k1, k2 = jax.random.split(root, 3)
    params = init_params(kp, EMBED, MID)
    feat = jax.random.normal(k1, (1, EMBED, HQ, WQ), jnp.float32)          # NCHW
    feat_boxes = jax.random.normal(k2, (MN, EMBED, HP, WP), jnp.float32)   # NCHW

    fwd = jax.jit(functools.partial(safecount_multiblock_forward,
                                    head=HEAD, hp=HP, wp=WP, num_blocks=BLOCKS))
    out = fwd(params, feat, feat_boxes)
    jax.block_until_ready(out)
    assert out.shape == (1, EMBED, HQ, WQ)
    print("KERNEL_OK")
</pallas_src>

<mosaic_0001>
module attributes {stable_mosaic.version = 11 : i64} {
  func.func @_safecount_fused_kernel(%arg0: i32, %arg1: memref<64x32xf32, #tpu.memory_space<vmem>>, %arg2: memref<32x32xbf16, #tpu.memory_space<vmem>>, %arg3: memref<1x32xf32, #tpu.memory_space<vmem>>, %arg4: memref<1x32xf32, #tpu.memory_space<vmem>>, %arg5: memref<1x32xf32, #tpu.memory_space<vmem>>, %arg6: memref<288x12xbf16, #tpu.memory_space<vmem>>, %arg7: memref<12x12xf32, #tpu.memory_space<vmem>>, %arg8: memref<108x32xbf16, #tpu.memory_space<vmem>>, %arg9: memref<1x32xf32, #tpu.memory_space<vmem>>, %arg10: memref<1x32xf32, #tpu.memory_space<vmem>>, %arg11: memref<1x32xf32, #tpu.memory_space<vmem>>, %arg12: memref<288x16xbf16, #tpu.memory_space<vmem>>, %arg13: memref<1x16xf32, #tpu.memory_space<vmem>>, %arg14: memref<144x32xbf16, #tpu.memory_space<vmem>>, %arg15: memref<1x32xf32, #tpu.memory_space<vmem>>, %arg16: memref<1x32xf32, #tpu.memory_space<vmem>>, %arg17: memref<1x32xf32, #tpu.memory_space<vmem>>, %arg18: memref<64x32xf32, #tpu.memory_space<vmem>>, %arg19: memref<10x10x32xf32, #tpu.memory_space<vmem>>, %arg20: memref<10x10x12xf32, #tpu.memory_space<vmem>>, %arg21: memref<10x10x32xf32, #tpu.memory_space<vmem>>, %arg22: memref<10x10x16xf32, #tpu.memory_space<vmem>>) attributes {dimension_semantics = [#tpu.dimension_semantics<arbitrary>], iteration_bounds = array<i64: 2>, scalar_prefetch = 0 : i64, scratch_operands = 4 : i64, tpu.core_type = #tpu.core_type<tc>, window_params = [{pipeline_mode = #tpu.pipeline_mode<synchronous>, transform_indices = @transform_0, window_bounds = array<i64: 64, 32>}, {pipeline_mode = #tpu.pipeline_mode<synchronous>, transform_indices = @transform_1, window_bounds = array<i64: 32, 32>}, {pipeline_mode = #tpu.pipeline_mode<synchronous>, transform_indices = @transform_2, window_bounds = array<i64: 1, 32>}, {pipeline_mode = #tpu.pipeline_mode<synchronous>, transform_indices = @transform_3, window_bounds = array<i64: 1, 32>}, {pipeline_mode = #tpu.pipeline_mode<synchronous>, transform_indices = @transform_4, window_bounds = array<i64: 1, 32>}, {pipeline_mode = #tpu.pipeline_mode<synchronous>, transform_indices = @transform_5, window_bounds = array<i64: 288, 12>}, {pipeline_mode = #tpu.pipeline_mode<synchronous>, transform_indices = @transform_6, window_bounds = array<i64: 12, 12>}, {pipeline_mode = #tpu.pipeline_mode<synchronous>, transform_indices = @transform_7, window_bounds = array<i64: 108, 32>}, {pipeline_mode = #tpu.pipeline_mode<synchronous>, transform_indices = @transform_8, window_bounds = array<i64: 1, 32>}, {pipeline_mode = #tpu.pipeline_mode<synchronous>, transform_indices = @transform_9, window_bounds = array<i64: 1, 32>}, {pipeline_mode = #tpu.pipeline_mode<synchronous>, transform_indices = @transform_10, window_bounds = array<i64: 1, 32>}, {pipeline_mode = #tpu.pipeline_mode<synchronous>, transform_indices = @transform_11, window_bounds = array<i64: 288, 16>}, {pipeline_mode = #tpu.pipeline_mode<synchronous>, transform_indices = @transform_12, window_bounds = array<i64: 1, 16>}, {pipeline_mode = #tpu.pipeline_mode<synchronous>, transform_indices = @transform_13, window_bounds = array<i64: 144, 32>}, {pipeline_mode = #tpu.pipeline_mode<synchronous>, transform_indices = @transform_14, window_bounds = array<i64: 1, 32>}, {pipeline_mode = #tpu.pipeline_mode<synchronous>, transform_indices = @transform_15, window_bounds = array<i64: 1, 32>}, {pipeline_mode = #tpu.pipeline_mode<synchronous>, transform_indices = @transform_16, window_bounds = array<i64: 1, 32>}, {pipeline_mode = #tpu.pipeline_mode<synchronous>, transform_indices = @transform_17, window_bounds = array<i64: 64, 32>}]} {
    %c0_i32 = arith.constant 0 : i32
    %0 = arith.cmpi eq, %arg0, %c0_i32 : i32
    %1 = arith.extui %0 : i1 to i32
    %c0_i32_0 = arith.constant 0 : i32
    %2 = arith.cmpi ne, %1, %c0_i32_0 : i32
    scf.if %2 {
      %cst_178 = arith.constant 0.000000e+00 : f32
      %204 = vector.broadcast %cst_178 : f32 to vector<10x10x32xf32>
      %c0_179 = arith.constant 0 : index
      %c0_180 = arith.constant 0 : index
      %c0_181 = arith.constant 0 : index
      %205 = vector.load %arg19[%c0_179, %c0_180, %c0_181] : memref<10x10x32xf32, #tpu.memory_space<vmem>>, vector<10x10x32xf32>
      tpu.vector_store %arg19[%c0_179, %c0_180, %c0_181], %204 {strides = array<i32>} : memref<10x10x32xf32, #tpu.memory_space<vmem>>, vector<10x10x32xf32>,
      %cst_182 = arith.constant 0.000000e+00 : f32
      %206 = vector.broadcast %cst_182 : f32 to vector<10x10x12xf32>
      %c0_183 = arith.constant 0 : index
      %c0_184 = arith.constant 0 : index
      %c0_185 = arith.constant 0 : index
      %207 = vector.load %arg20[%c0_183, %c0_184, %c0_185] : memref<10x10x12xf32, #tpu.memory_space<vmem>>, vector<10x10x12xf32>
      tpu.vector_store %arg20[%c0_183, %c0_184, %c0_185], %206 {strides = array<i32>} : memref<10x10x12xf32, #tpu.memory_space<vmem>>, vector<10x10x12xf32>,
      %cst_186 = arith.constant 0.000000e+00 : f32
      %208 = vector.broadcast %cst_186 : f32 to vector<10x10x32xf32>
      %c0_187 = arith.constant 0 : index
      %c0_188 = arith.constant 0 : index
      %c0_189 = arith.constant 0 : index
      %209 = vector.load %arg21[%c0_187, %c0_188, %c0_189] : memref<10x10x32xf32, #tpu.memory_space<vmem>>, vector<10x10x32xf32>
      tpu.vector_store %arg21[%c0_187, %c0_188, %c0_189], %208 {strides = array<i32>} : memref<10x10x32xf32, #tpu.memory_space<vmem>>, vector<10x10x32xf32>,
      %cst_190 = arith.constant 0.000000e+00 : f32
      %210 = vector.broadcast %cst_190 : f32 to vector<10x10x16xf32>
      %c0_191 = arith.constant 0 : index
      %c0_192 = arith.constant 0 : index
      %c0_193 = arith.constant 0 : index
      %211 = vector.load %arg22[%c0_191, %c0_192, %c0_193] : memref<10x10x16xf32, #tpu.memory_space<vmem>>, vector<10x10x16xf32>
      tpu.vector_store %arg22[%c0_191, %c0_192, %c0_193], %210 {strides = array<i32>} : memref<10x10x16xf32, #tpu.memory_space<vmem>>, vector<10x10x16xf32>,
      %c0_194 = arith.constant 0 : index
      %c0_195 = arith.constant 0 : index
      %212 = vector.load %arg1[%c0_194, %c0_195] : memref<64x32xf32, #tpu.memory_space<vmem>>, vector<64x32xf32>
      %c0_196 = arith.constant 0 : index
      %c0_197 = arith.constant 0 : index
      %213 = vector.load %arg18[%c0_196, %c0_197] : memref<64x32xf32, #tpu.memory_space<vmem>>, vector<64x32xf32>
      tpu.vector_store %arg18[%c0_196, %c0_197], %212 {strides = array<i32>} : memref<64x32xf32, #tpu.memory_space<vmem>>, vector<64x32xf32>,
    } else {
    }
    %c0 = arith.constant 0 : index
    %c0_1 = arith.constant 0 : index
    %3 = vector.load %arg18[%c0, %c0_1] : memref<64x32xf32, #tpu.memory_space<vmem>>, vector<64x32xf32>
    %c0_2 = arith.constant 0 : index
    %c0_3 = arith.constant 0 : index
    %4 = vector.load %arg2[%c0_2, %c0_3] : memref<32x32xbf16, #tpu.memory_space<vmem>>, vector<32x32xbf16>
    %5 = arith.truncf %3 : vector<64x32xf32> to vector<64x32xbf16>
    %cst = arith.constant dense<0.000000e+00> : vector<64x32xf32>
    %6 = tpu.matmul %5, %4, %cst {dimension_numbers = #tpu.dot_dimension_numbers<[1], [0], [0], [1], [0, 0, 1, 1], [], []>} : vector<64x32xbf16>, vector<32x32xbf16>, vector<64x32xf32> -> vector<64x32xf32>
    %c0_4 = arith.constant 0 : index
    %c0_5 = arith.constant 0 : index
    %7 = vector.load %arg3[%c0_4, %c0_5] : memref<1x32xf32, #tpu.memory_space<vmem>>, vector<1x32xf32>
    %8 = vector.broadcast %7 : vector<1x32xf32> to vector<64x32xf32>
    %9 = arith.addf %6, %8 : vector<64x32xf32>
    %c0_6 = arith.constant 0 : index
    %c0_7 = arith.constant 0 : index
    %10 = vector.load %arg4[%c0_6, %c0_7] : memref<1x32xf32, #tpu.memory_space<vmem>>, vector<1x32xf32>
    %c0_8 = arith.constant 0 : index
    %c0_9 = arith.constant 0 : index
    %11 = vector.load %arg5[%c0_8, %c0_9] : memref<1x32xf32, #tpu.memory_space<vmem>>, vector<1x32xf32>
    %cst_10 = arith.constant dense<0.000000e+00> : vector<64xf32>
    %12 = vector.multi_reduction <add>, %9, %cst_10 [1] : vector<64x32xf32> to vector<64xf32>
    %13 = vector.shape_cast %12 : vector<64xf32> to vector<64x1xf32>
    %cst_11 = arith.constant 3.200000e+01 : f32
    %14 = vector.broadcast %cst_11 : f32 to vector<64x1xf32>
    %15 = arith.divf %13, %14 : vector<64x1xf32>
    %16 = vector.broadcast %15 : vector<64x1xf32> to vector<64x32xf32>
    %17 = arith.subf %9, %16 : vector<64x32xf32>
    %18 = arith.mulf %17, %17 : vector<64x32xf32>
    %cst_12 = arith.constant dense<0.000000e+00> : vector<64xf32>
    %19 = vector.multi_reduction <add>, %18, %cst_12 [1] : vector<64x32xf32> to vector<64xf32>
    %20 = vector.shape_cast %19 : vector<64xf32> to vector<64x1xf32>
    %cst_13 = arith.constant 3.200000e+01 : f32
    %21 = vector.broadcast %cst_13 : f32 to vector<64x1xf32>
    %22 = arith.divf %20, %21 : vector<64x1xf32>
    %cst_14 = arith.constant 9.99999974E-6 : f32
    %23 = vector.broadcast %cst_14 : f32 to vector<64x1xf32>
    %24 = arith.addf %22, %23 : vector<64x1xf32>
    %25 = math.rsqrt %24 : vector<64x1xf32>
    %26 = vector.broadcast %25 : vector<64x1xf32> to vector<64x32xf32>
    %27 = arith.mulf %17, %26 : vector<64x32xf32>
    %28 = vector.broadcast %10 : vector<1x32xf32> to vector<64x32xf32>
    %29 = arith.mulf %27, %28 : vector<64x32xf32>
    %30 = vector.broadcast %11 : vector<1x32xf32> to vector<64x32xf32>
    %31 = arith.addf %29, %30 : vector<64x32xf32>
    %32 = vector.shape_cast %31 : vector<64x32xf32> to vector<8x8x32xf32>
    %c1 = arith.constant 1 : index
    %c1_15 = arith.constant 1 : index
    %c0_16 = arith.constant 0 : index
    %33 = vector.load %arg19[%c1, %c1_15, %c0_16] : memref<10x10x32xf32, #tpu.memory_space<vmem>>, vector<8x8x32xf32>
    tpu.vector_store %arg19[%c1, %c1_15, %c0_16], %32 {strides = array<i32>} : memref<10x10x32xf32, #tpu.memory_space<vmem>>, vector<8x8x32xf32>,
    %c0_17 = arith.constant 0 : index
    %c0_18 = arith.constant 0 : index
    %c0_19 = arith.constant 0 : index
    %34 = vector.load %arg19[%c0_17, %c0_18, %c0_19] : memref<10x10x32xf32, #tpu.memory_space<vmem>>, vector<8x8x32xf32>
    %35 = vector.shape_cast %34 : vector<8x8x32xf32> to vector<64x32xf32>
    %c0_20 = arith.constant 0 : index
    %c1_21 = arith.constant 1 : index
    %c0_22 = arith.constant 0 : index
    %36 = vector.load %arg19[%c0_20, %c1_21, %c0_22] : memref<10x10x32xf32, #tpu.memory_space<vmem>>, vector<8x8x32xf32>
    %37 = vector.shape_cast %36 : vector<8x8x32xf32> to vector<64x32xf32>
    %c0_23 = arith.constant 0 : index
    %c2 = arith.constant 2 : index
    %c0_24 = arith.constant 0 : index
    %38 = vector.load %arg19[%c0_23, %c2, %c0_24] : memref<10x10x32xf32, #tpu.memory_space<vmem>>, vector<8x8x32xf32>
    %39 = vector.shape_cast %38 : vector<8x8x32xf32> to vector<64x32xf32>
    %c1_25 = arith.constant 1 : index
    %c0_26 = arith.constant 0 : index
    %c0_27 = arith.constant 0 : index
    %40 = vector.load %arg19[%c1_25, %c0_26, %c0_27] : memref<10x10x32xf32, #tpu.memory_space<vmem>>, vector<8x8x32xf32>
    %41 = vector.shape_cast %40 : vector<8x8x32xf32> to vector<64x32xf32>
    %c1_28 = arith.constant 1 : index
    %c1_29 = arith.constant 1 : index
    %c0_30 = arith.constant 0 : index
    %42 = vector.load %arg19[%c1_28, %c1_29, %c0_30] : memref<10x10x32xf32, #tpu.memory_space<vmem>>, vector<8x8x32xf32>
    %43 = vector.shape_cast %42 : vector<8x8x32xf32> to vector<64x32xf32>
    %c1_31 = arith.constant 1 : index
    %c2_32 = arith.constant 2 : index
    %c0_33 = arith.constant 0 : index
    %44 = vector.load %arg19[%c1_31, %c2_32, %c0_33] : memref<10x10x32xf32, #tpu.memory_space<vmem>>, vector<8x8x32xf32>
    %45 = vector.shape_cast %44 : vector<8x8x32xf32> to vector<64x32xf32>
    %c2_34 = arith.constant 2 : index
    %c0_35 = arith.constant 0 : index
    %c0_36 = arith.constant 0 : index
    %46 = vector.load %arg19[%c2_34, %c0_35, %c0_36] : memref<10x10x32xf32, #tpu.memory_space<vmem>>, vector<8x8x32xf32>
    %47 = vector.shape_cast %46 : vector<8x8x32xf32> to vector<64x32xf32>
    %c2_37 = arith.constant 2 : index
    %c1_38 = arith.constant 1 : index
    %c0_39 = arith.constant 0 : index
    %48 = vector.load %arg19[%c2_37, %c1_38, %c0_39] : memref<10x10x32xf32, #tpu.memory_space<vmem>>, vector<8x8x32xf32>
    %49 = vector.shape_cast %48 : vector<8x8x32xf32> to vector<64x32xf32>
    %c2_40 = arith.constant 2 : index
    %c2_41 = arith.constant 2 : index
    %c0_42 = arith.constant 0 : index
    %50 = vector.load %arg19[%c2_40, %c2_41, %c0_42] : memref<10x10x32xf32, #tpu.memory_space<vmem>>, vector<8x8x32xf32>
    %51 = vector.shape_cast %50 : vector<8x8x32xf32> to vector<64x32xf32>
    %52 = tpu.concatenate %35, %37, %39, %41, %43, %45, %47, %49, %51 in 1 : vector<64x32xf32>, vector<64x32xf32>, vector<64x32xf32>, vector<64x32xf32>, vector<64x32xf32>, vector<64x32xf32>, vector<64x32xf32>, vector<64x32xf32>, vector<64x32xf32> -> vector<64x288xf32>
    %c0_43 = arith.constant 0 : index
    %c0_44 = arith.constant 0 : index
    %53 = vector.load %arg6[%c0_43, %c0_44] : memref<288x12xbf16, #tpu.memory_space<vmem>>, vector<288x12xbf16>
    %54 = arith.truncf %52 : vector<64x288xf32> to vector<64x288xbf16>
    %cst_45 = arith.constant dense<0.000000e+00> : vector<64x12xf32>
    %55 = tpu.matmul %54, %53, %cst_45 {dimension_numbers = #tpu.dot_dimension_numbers<[1], [0], [0], [1], [0, 0, 1, 1], [], []>} : vector<64x288xbf16>, vector<288x12xbf16>, vector<64x12xf32> -> vector<64x12xf32>
    %cst_46 = arith.constant 0.0589255653 : f32
    %56 = vector.broadcast %cst_46 : f32 to vector<64x12xf32>
    %57 = arith.mulf %55, %56 : vector<64x12xf32>
    %58 = vector.shape_cast %57 : vector<64x12xf32> to vector<1x64x12xf32>
    %cst_47 = arith.constant dense<0xFF800000> : vector<1xf32>
    %59 = vector.multi_reduction <maximumf>, %58, %cst_47 [1, 2] : vector<1x64x12xf32> to vector<1xf32>
    %60 = vector.shape_cast %59 : vector<1xf32> to vector<1x1x1xf32>
    %61 = vector.extract %60[0, 0, 0] : f32 from vector<1x1x1xf32>
    %62 = vector.broadcast %61 : f32 to vector<1x1xf32>
    %63 = vector.broadcast %62 : vector<1x1xf32> to vector<64x12xf32>
    %64 = arith.subf %57, %63 : vector<64x12xf32>
    %65 = math.exp %64 : vector<64x12xf32>
    %cst_48 = arith.constant dense<0xFF800000> : vector<12xf32>
    %66 = vector.multi_reduction <maximumf>, %65, %cst_48 [0] : vector<64x12xf32> to vector<12xf32>
    %67 = vector.shape_cast %66 : vector<12xf32> to vector<1x12xf32>
    %c0_49 = arith.constant 0 : index
    %c0_50 = arith.constant 0 : index
    %68 = vector.load %arg7[%c0_49, %c0_50] : memref<12x12xf32, #tpu.memory_space<vmem>>, vector<12x12xf32>
    %cst_51 = arith.constant dense<0.000000e+00> : vector<64x12xf32>
    %69 = tpu.matmul %65, %68, %cst_51 {dimension_numbers = #tpu.dot_dimension_numbers<[1], [0], [0], [1], [0, 0, 1, 1], [], []>} : vector<64x12xf32>, vector<12x12xf32>, vector<64x12xf32> -> vector<64x12xf32>
    %70 = arith.mulf %65, %65 : vector<64x12xf32>
    %71 = vector.broadcast %67 : vector<1x12xf32> to vector<64x12xf32>
    %72 = arith.mulf %71, %69 : vector<64x12xf32>
    %73 = arith.divf %70, %72 : vector<64x12xf32>
    %74 = vector.shape_cast %73 : vector<64x12xf32> to vector<8x8x12xf32>
    %c1_52 = arith.constant 1 : index
    %c1_53 = arith.constant 1 : index
    %c0_54 = arith.constant 0 : index
    %75 = vector.load %arg20[%c1_52, %c1_53, %c0_54] : memref<10x10x12xf32, #tpu.memory_space<vmem>>, vector<8x8x12xf32>
    tpu.vector_store %arg20[%c1_52, %c1_53, %c0_54], %74 {strides = array<i32>} : memref<10x10x12xf32, #tpu.memory_space<vmem>>, vector<8x8x12xf32>,
    %c0_55 = arith.constant 0 : index
    %c0_56 = arith.constant 0 : index
    %c0_57 = arith.constant 0 : index
    %76 = vector.load %arg20[%c0_55, %c0_56, %c0_57] : memref<10x10x12xf32, #tpu.memory_space<vmem>>, vector<8x8x12xf32>
    %77 = vector.shape_cast %76 : vector<8x8x12xf32> to vector<64x12xf32>
    %c0_58 = arith.constant 0 : index
    %c1_59 = arith.constant 1 : index
    %c0_60 = arith.constant 0 : index
    %78 = vector.load %arg20[%c0_58, %c1_59, %c0_60] : memref<10x10x12xf32, #tpu.memory_space<vmem>>, vector<8x8x12xf32>
    %79 = vector.shape_cast %78 : vector<8x8x12xf32> to vector<64x12xf32>
    %c0_61 = arith.constant 0 : index
    %c2_62 = arith.constant 2 : index
    %c0_63 = arith.constant 0 : index
    %80 = vector.load %arg20[%c0_61, %c2_62, %c0_63] : memref<10x10x12xf32, #tpu.memory_space<vmem>>, vector<8x8x12xf32>
    %81 = vector.shape_cast %80 : vector<8x8x12xf32> to vector<64x12xf32>
    %c1_64 = arith.constant 1 : index
    %c0_65 = arith.constant 0 : index
    %c0_66 = arith.constant 0 : index
    %82 = vector.load %arg20[%c1_64, %c0_65, %c0_66] : memref<10x10x12xf32, #tpu.memory_space<vmem>>, vector<8x8x12xf32>
    %83 = vector.shape_cast %82 : vector<8x8x12xf32> to vector<64x12xf32>
    %c1_67 = arith.constant 1 : index
    %c1_68 = arith.constant 1 : index
    %c0_69 = arith.constant 0 : index
    %84 = vector.load %arg20[%c1_67, %c1_68, %c0_69] : memref<10x10x12xf32, #tpu.memory_space<vmem>>, vector<8x8x12xf32>
    %85 = vector.shape_cast %84 : vector<8x8x12xf32> to vector<64x12xf32>
    %c1_70 = arith.constant 1 : index
    %c2_71 = arith.constant 2 : index
    %c0_72 = arith.constant 0 : index
    %86 = vector.load %arg20[%c1_70, %c2_71, %c0_72] : memref<10x10x12xf32, #tpu.memory_space<vmem>>, vector<8x8x12xf32>
    %87 = vector.shape_cast %86 : vector<8x8x12xf32> to vector<64x12xf32>
    %c2_73 = arith.constant 2 : index
    %c0_74 = arith.constant 0 : index
    %c0_75 = arith.constant 0 : index
    %88 = vector.load %arg20[%c2_73, %c0_74, %c0_75] : memref<10x10x12xf32, #tpu.memory_space<vmem>>, vector<8x8x12xf32>
    %89 = vector.shape_cast %88 : vector<8x8x12xf32> to vector<64x12xf32>
    %c2_76 = arith.constant 2 : index
    %c1_77 = arith.constant 1 : index
    %c0_78 = arith.constant 0 : index
    %90 = vector.load %arg20[%c2_76, %c1_77, %c0_78] : memref<10x10x12xf32, #tpu.memory_space<vmem>>, vector<8x8x12xf32>
    %91 = vector.shape_cast %90 : vector<8x8x12xf32> to vector<64x12xf32>
    %c2_79 = arith.constant 2 : index
    %c2_80 = arith.constant 2 : index
    %c0_81 = arith.constant 0 : index
    %92 = vector.load %arg20[%c2_79, %c2_80, %c0_81] : memref<10x10x12xf32, #tpu.memory_space<vmem>>, vector<8x8x12xf32>
    %93 = vector.shape_cast %92 : vector<8x8x12xf32> to vector<64x12xf32>
    %94 = tpu.concatenate %77, %79, %81, %83, %85, %87, %89, %91, %93 in 1 : vector<64x12xf32>, vector<64x12xf32>, vector<64x12xf32>, vector<64x12xf32>, vector<64x12xf32>, vector<64x12xf32>, vector<64x12xf32>, vector<64x12xf32>, vector<64x12xf32> -> vector<64x108xf32>
    %c0_82 = arith.constant 0 : index
    %c0_83 = arith.constant 0 : index
    %95 = vector.load %arg8[%c0_82, %c0_83] : memref<108x32xbf16, #tpu.memory_space<vmem>>, vector<108x32xbf16>
    %96 = arith.truncf %94 : vector<64x108xf32> to vector<64x108xbf16>
    %cst_84 = arith.constant dense<0.000000e+00> : vector<64x32xf32>
    %97 = tpu.matmul %96, %95, %cst_84 {dimension_numbers = #tpu.dot_dimension_numbers<[1], [0], [0], [1], [0, 0, 1, 1], [], []>} : vector<64x108xbf16>, vector<108x32xbf16>, vector<64x32xf32> -> vector<64x32xf32>
    %c0_85 = arith.constant 0 : index
    %c0_86 = arith.constant 0 : index
    %98 = vector.load %arg9[%c0_85, %c0_86] : memref<1x32xf32, #tpu.memory_space<vmem>>, vector<1x32xf32>
    %99 = vector.broadcast %98 : vector<1x32xf32> to vector<64x32xf32>
    %100 = arith.addf %97, %99 : vector<64x32xf32>
    %101 = arith.addf %3, %100 : vector<64x32xf32>
    %c0_87 = arith.constant 0 : index
    %c0_88 = arith.constant 0 : index
    %102 = vector.load %arg10[%c0_87, %c0_88] : memref<1x32xf32, #tpu.memory_space<vmem>>, vector<1x32xf32>
    %c0_89 = arith.constant 0 : index
    %c0_90 = arith.constant 0 : index
    %103 = vector.load %arg11[%c0_89, %c0_90] : memref<1x32xf32, #tpu.memory_space<vmem>>, vector<1x32xf32>
    %cst_91 = arith.constant dense<0.000000e+00> : vector<64xf32>
    %104 = vector.multi_reduction <add>, %101, %cst_91 [1] : vector<64x32xf32> to vector<64xf32>
    %105 = vector.shape_cast %104 : vector<64xf32> to vector<64x1xf32>
    %cst_92 = arith.constant 3.200000e+01 : f32
    %106 = vector.broadcast %cst_92 : f32 to vector<64x1xf32>
    %107 = arith.divf %105, %106 : vector<64x1xf32>
    %108 = vector.broadcast %107 : vector<64x1xf32> to vector<64x32xf32>
    %109 = arith.subf %101, %108 : vector<64x32xf32>
    %110 = arith.mulf %109, %109 : vector<64x32xf32>
    %cst_93 = arith.constant dense<0.000000e+00> : vector<64xf32>
    %111 = vector.multi_reduction <add>, %110, %cst_93 [1] : vector<64x32xf32> to vector<64xf32>
    %112 = vector.shape_cast %111 : vector<64xf32> to vector<64x1xf32>
    %cst_94 = arith.constant 3.200000e+01 : f32
    %113 = vector.broadcast %cst_94 : f32 to vector<64x1xf32>
    %114 = arith.divf %112, %113 : vector<64x1xf32>
    %cst_95 = arith.constant 9.99999974E-6 : f32
    %115 = vector.broadcast %cst_95 : f32 to vector<64x1xf32>
    %116 = arith.addf %114, %115 : vector<64x1xf32>
    %117 = math.rsqrt %116 : vector<64x1xf32>
    %118 = vector.broadcast %117 : vector<64x1xf32> to vector<64x32xf32>
    %119 = arith.mulf %109, %118 : vector<64x32xf32>
    %120 = vector.broadcast %102 : vector<1x32xf32> to vector<64x32xf32>
    %121 = arith.mulf %119, %120 : vector<64x32xf32>
    %122 = vector.broadcast %103 : vector<1x32xf32> to vector<64x32xf32>
    %123 = arith.addf %121, %122 : vector<64x32xf32>
    %124 = vector.shape_cast %123 : vector<64x32xf32> to vector<8x8x32xf32>
    %c1_96 = arith.constant 1 : index
    %c1_97 = arith.constant 1 : index
    %c0_98 = arith.constant 0 : index
    %125 = vector.load %arg21[%c1_96, %c1_97, %c0_98] : memref<10x10x32xf32, #tpu.memory_space<vmem>>, vector<8x8x32xf32>
    tpu.vector_store %arg21[%c1_96, %c1_97, %c0_98], %124 {strides = array<i32>} : memref<10x10x32xf32, #tpu.memory_space<vmem>>, vector<8x8x32xf32>,
    %c0_99 = arith.constant 0 : index
    %c0_100 = arith.constant 0 : index
    %c0_101 = arith.constant 0 : index
    %126 = vector.load %arg21[%c0_99, %c0_100, %c0_101] : memref<10x10x32xf32, #tpu.memory_space<vmem>>, vector<8x8x32xf32>
    %127 = vector.shape_cast %126 : vector<8x8x32xf32> to vector<64x32xf32>
    %c0_102 = arith.constant 0 : index
    %c1_103 = arith.constant 1 : index
    %c0_104 = arith.constant 0 : index
    %128 = vector.load %arg21[%c0_102, %c1_103, %c0_104] : memref<10x10x32xf32, #tpu.memory_space<vmem>>, vector<8x8x32xf32>
    %129 = vector.shape_cast %128 : vector<8x8x32xf32> to vector<64x32xf32>
    %c0_105 = arith.constant 0 : index
    %c2_106 = arith.constant 2 : index
    %c0_107 = arith.constant 0 : index
    %130 = vector.load %arg21[%c0_105, %c2_106, %c0_107] : memref<10x10x32xf32, #tpu.memory_space<vmem>>, vector<8x8x32xf32>
    %131 = vector.shape_cast %130 : vector<8x8x32xf32> to vector<64x32xf32>
    %c1_108 = arith.constant 1 : index
    %c0_109 = arith.constant 0 : index
    %c0_110 = arith.constant 0 : index
    %132 = vector.load %arg21[%c1_108, %c0_109, %c0_110] : memref<10x10x32xf32, #tpu.memory_space<vmem>>, vector<8x8x32xf32>
    %133 = vector.shape_cast %132 : vector<8x8x32xf32> to vector<64x32xf32>
    %c1_111 = arith.constant 1 : index
    %c1_112 = arith.constant 1 : index
    %c0_113 = arith.constant 0 : index
    %134 = vector.load %arg21[%c1_111, %c1_112, %c0_113] : memref<10x10x32xf32, #tpu.memory_space<vmem>>, vector<8x8x32xf32>
    %135 = vector.shape_cast %134 : vector<8x8x32xf32> to vector<64x32xf32>
    %c1_114 = arith.constant 1 : index
    %c2_115 = arith.constant 2 : index
    %c0_116 = arith.constant 0 : index
    %136 = vector.load %arg21[%c1_114, %c2_115, %c0_116] : memref<10x10x32xf32, #tpu.memory_space<vmem>>, vector<8x8x32xf32>
    %137 = vector.shape_cast %136 : vector<8x8x32xf32> to vector<64x32xf32>
    %c2_117 = arith.constant 2 : index
    %c0_118 = arith.constant 0 : index
    %c0_119 = arith.constant 0 : index
    %138 = vector.load %arg21[%c2_117, %c0_118, %c0_119] : memref<10x10x32xf32, #tpu.memory_space<vmem>>, vector<8x8x32xf32>
    %139 = vector.shape_cast %138 : vector<8x8x32xf32> to vector<64x32xf32>
    %c2_120 = arith.constant 2 : index
    %c1_121 = arith.constant 1 : index
    %c0_122 = arith.constant 0 : index
    %140 = vector.load %arg21[%c2_120, %c1_121, %c0_122] : memref<10x10x32xf32, #tpu.memory_space<vmem>>, vector<8x8x32xf32>
    %141 = vector.shape_cast %140 : vector<8x8x32xf32> to vector<64x32xf32>
    %c2_123 = arith.constant 2 : index
    %c2_124 = arith.constant 2 : index
    %c0_125 = arith.constant 0 : index
    %142 = vector.load %arg21[%c2_123, %c2_124, %c0_125] : memref<10x10x32xf32, #tpu.memory_space<vmem>>, vector<8x8x32xf32>
    %143 = vector.shape_cast %142 : vector<8x8x32xf32> to vector<64x32xf32>
    %144 = tpu.concatenate %127, %129, %131, %133, %135, %137, %139, %141, %143 in 1 : vector<64x32xf32>, vector<64x32xf32>, vector<64x32xf32>, vector<64x32xf32>, vector<64x32xf32>, vector<64x32xf32>, vector<64x32xf32>, vector<64x32xf32>, vector<64x32xf32> -> vector<64x288xf32>
    %c0_126 = arith.constant 0 : index
    %c0_127 = arith.constant 0 : index
    %145 = vector.load %arg12[%c0_126, %c0_127] : memref<288x16xbf16, #tpu.memory_space<vmem>>, vector<288x16xbf16>
    %146 = arith.truncf %144 : vector<64x288xf32> to vector<64x288xbf16>
    %cst_128 = arith.constant dense<0.000000e+00> : vector<64x16xf32>
    %147 = tpu.matmul %146, %145, %cst_128 {dimension_numbers = #tpu.dot_dimension_numbers<[1], [0], [0], [1], [0, 0, 1, 1], [], []>} : vector<64x288xbf16>, vector<288x16xbf16>, vector<64x16xf32> -> vector<64x16xf32>
    %c0_129 = arith.constant 0 : index
    %c0_130 = arith.constant 0 : index
    %148 = vector.load %arg13[%c0_129, %c0_130] : memref<1x16xf32, #tpu.memory_space<vmem>>, vector<1x16xf32>
    %149 = vector.broadcast %148 : vector<1x16xf32> to vector<64x16xf32>
    %150 = arith.addf %147, %149 : vector<64x16xf32>
    %cst_131 = arith.constant 0.000000e+00 : f32
    %151 = vector.broadcast %cst_131 : f32 to vector<64x16xf32>
    %152 = arith.maximumf %150, %151 : vector<64x16xf32>
    %153 = vector.shape_cast %152 : vector<64x16xf32> to vector<8x8x16xf32>
    %c1_132 = arith.constant 1 : index
    %c1_133 = arith.constant 1 : index
    %c0_134 = arith.constant 0 : index
    %154 = vector.load %arg22[%c1_132, %c1_133, %c0_134] : memref<10x10x16xf32, #tpu.memory_space<vmem>>, vector<8x8x16xf32>
    tpu.vector_store %arg22[%c1_132, %c1_133, %c0_134], %153 {strides = array<i32>} : memref<10x10x16xf32, #tpu.memory_space<vmem>>, vector<8x8x16xf32>,
    %c0_135 = arith.constant 0 : index
    %c0_136 = arith.constant 0 : index
    %c0_137 = arith.constant 0 : index
    %155 = vector.load %arg22[%c0_135, %c0_136, %c0_137] : memref<10x10x16xf32, #tpu.memory_space<vmem>>, vector<8x8x16xf32>
    %156 = vector.shape_cast %155 : vector<8x8x16xf32> to vector<64x16xf32>
    %c0_138 = arith.constant 0 : index
    %c1_139 = arith.constant 1 : index
    %c0_140 = arith.constant 0 : index
    %157 = vector.load %arg22[%c0_138, %c1_139, %c0_140] : memref<10x10x16xf32, #tpu.memory_space<vmem>>, vector<8x8x16xf32>
    %158 = vector.shape_cast %157 : vector<8x8x16xf32> to vector<64x16xf32>
    %c0_141 = arith.constant 0 : index
    %c2_142 = arith.constant 2 : index
    %c0_143 = arith.constant 0 : index
    %159 = vector.load %arg22[%c0_141, %c2_142, %c0_143] : memref<10x10x16xf32, #tpu.memory_space<vmem>>, vector<8x8x16xf32>
    %160 = vector.shape_cast %159 : vector<8x8x16xf32> to vector<64x16xf32>
    %c1_144 = arith.constant 1 : index
    %c0_145 = arith.constant 0 : index
    %c0_146 = arith.constant 0 : index
    %161 = vector.load %arg22[%c1_144, %c0_145, %c0_146] : memref<10x10x16xf32, #tpu.memory_space<vmem>>, vector<8x8x16xf32>
    %162 = vector.shape_cast %161 : vector<8x8x16xf32> to vector<64x16xf32>
    %c1_147 = arith.constant 1 : index
    %c1_148 = arith.constant 1 : index
    %c0_149 = arith.constant 0 : index
    %163 = vector.load %arg22[%c1_147, %c1_148, %c0_149] : memref<10x10x16xf32, #tpu.memory_space<vmem>>, vector<8x8x16xf32>
    %164 = vector.shape_cast %163 : vector<8x8x16xf32> to vector<64x16xf32>
    %c1_150 = arith.constant 1 : index
    %c2_151 = arith.constant 2 : index
    %c0_152 = arith.constant 0 : index
    %165 = vector.load %arg22[%c1_150, %c2_151, %c0_152] : memref<10x10x16xf32, #tpu.memory_space<vmem>>, vector<8x8x16xf32>
    %166 = vector.shape_cast %165 : vector<8x8x16xf32> to vector<64x16xf32>
    %c2_153 = arith.constant 2 : index
    %c0_154 = arith.constant 0 : index
    %c0_155 = arith.constant 0 : index
    %167 = vector.load %arg22[%c2_153, %c0_154, %c0_155] : memref<10x10x16xf32, #tpu.memory_space<vmem>>, vector<8x8x16xf32>
    %168 = vector.shape_cast %167 : vector<8x8x16xf32> to vector<64x16xf32>
    %c2_156 = arith.constant 2 : index
    %c1_157 = arith.constant 1 : index
    %c0_158 = arith.constant 0 : index
    %169 = vector.load %arg22[%c2_156, %c1_157, %c0_158] : memref<10x10x16xf32, #tpu.memory_space<vmem>>, vector<8x8x16xf32>
    %170 = vector.shape_cast %169 : vector<8x8x16xf32> to vector<64x16xf32>
    %c2_159 = arith.constant 2 : index
    %c2_160 = arith.constant 2 : index
    %c0_161 = arith.constant 0 : index
    %171 = vector.load %arg22[%c2_159, %c2_160, %c0_161] : memref<10x10x16xf32, #tpu.memory_space<vmem>>, vector<8x8x16xf32>
    %172 = vector.shape_cast %171 : vector<8x8x16xf32> to vector<64x16xf32>
    %173 = tpu.concatenate %156, %158, %160, %162, %164, %166, %168, %170, %172 in 1 : vector<64x16xf32>, vector<64x16xf32>, vector<64x16xf32>, vector<64x16xf32>, vector<64x16xf32>, vector<64x16xf32>, vector<64x16xf32>, vector<64x16xf32>, vector<64x16xf32> -> vector<64x144xf32>
    %c0_162 = arith.constant 0 : index
    %c0_163 = arith.constant 0 : index
    %174 = vector.load %arg14[%c0_162, %c0_163] : memref<144x32xbf16, #tpu.memory_space<vmem>>, vector<144x32xbf16>
    %175 = arith.truncf %173 : vector<64x144xf32> to vector<64x144xbf16>
    %cst_164 = arith.constant dense<0.000000e+00> : vector<64x32xf32>
    %176 = tpu.matmul %175, %174, %cst_164 {dimension_numbers = #tpu.dot_dimension_numbers<[1], [0], [0], [1], [0, 0, 1, 1], [], []>} : vector<64x144xbf16>, vector<144x32xbf16>, vector<64x32xf32> -> vector<64x32xf32>
    %c0_165 = arith.constant 0 : index
    %c0_166 = arith.constant 0 : index
    %177 = vector.load %arg15[%c0_165, %c0_166] : memref<1x32xf32, #tpu.memory_space<vmem>>, vector<1x32xf32>
    %178 = vector.broadcast %177 : vector<1x32xf32> to vector<64x32xf32>
    %179 = arith.addf %176, %178 : vector<64x32xf32>
    %180 = arith.addf %123, %179 : vector<64x32xf32>
    %c0_167 = arith.constant 0 : index
    %c0_168 = arith.constant 0 : index
    %181 = vector.load %arg16[%c0_167, %c0_168] : memref<1x32xf32, #tpu.memory_space<vmem>>, vector<1x32xf32>
    %c0_169 = arith.constant 0 : index
    %c0_170 = arith.constant 0 : index
    %182 = vector.load %arg17[%c0_169, %c0_170] : memref<1x32xf32, #tpu.memory_space<vmem>>, vector<1x32xf32>
    %cst_171 = arith.constant dense<0.000000e+00> : vector<64xf32>
    %183 = vector.multi_reduction <add>, %180, %cst_171 [1] : vector<64x32xf32> to vector<64xf32>
    %184 = vector.shape_cast %183 : vector<64xf32> to vector<64x1xf32>
    %cst_172 = arith.constant 3.200000e+01 : f32
    %185 = vector.broadcast %cst_172 : f32 to vector<64x1xf32>
    %186 = arith.divf %184, %185 : vector<64x1xf32>
    %187 = vector.broadcast %186 : vector<64x1xf32> to vector<64x32xf32>
    %188 = arith.subf %180, %187 : vector<64x32xf32>
    %189 = arith.mulf %188, %188 : vector<64x32xf32>
    %cst_173 = arith.constant dense<0.000000e+00> : vector<64xf32>
    %190 = vector.multi_reduction <add>, %189, %cst_173 [1] : vector<64x32xf32> to vector<64xf32>
    %191 = vector.shape_cast %190 : vector<64xf32> to vector<64x1xf32>
    %cst_174 = arith.constant 3.200000e+01 : f32
    %192 = vector.broadcast %cst_174 : f32 to vector<64x1xf32>
    %193 = arith.divf %191, %192 : vector<64x1xf32>
    %cst_175 = arith.constant 9.99999974E-6 : f32
    %194 = vector.broadcast %cst_175 : f32 to vector<64x1xf32>
    %195 = arith.addf %193, %194 : vector<64x1xf32>
    %196 = math.rsqrt %195 : vector<64x1xf32>
    %197 = vector.broadcast %196 : vector<64x1xf32> to vector<64x32xf32>
    %198 = arith.mulf %188, %197 : vector<64x32xf32>
    %199 = vector.broadcast %181 : vector<1x32xf32> to vector<64x32xf32>
    %200 = arith.mulf %198, %199 : vector<64x32xf32>
    %201 = vector.broadcast %182 : vector<1x32xf32> to vector<64x32xf32>
    %202 = arith.addf %200, %201 : vector<64x32xf32>
    %c0_176 = arith.constant 0 : index
    %c0_177 = arith.constant 0 : index
    %203 = vector.load %arg18[%c0_176, %c0_177] : memref<64x32xf32, #tpu.memory_space<vmem>>, vector<64x32xf32>
    tpu.vector_store %arg18[%c0_176, %c0_177], %202 {strides = array<i32>} : memref<64x32xf32, #tpu.memory_space<vmem>>, vector<64x32xf32>,
    return
  }
  func.func @transform_0(%arg0: i32) -> (i32, i32) {
    %c0_i32 = arith.constant 0 : i32
    %c0_i32_0 = arith.constant 0 : i32
    %c0_i32_1 = arith.constant 0 : i32
    return %c0_i32, %c0_i32_0 : i32, i32
  }
  func.func @transform_1(%arg0: i32) -> (i32, i32) {
    %c0_i32 = arith.constant 0 : i32
    %c0_i32_0 = arith.constant 0 : i32
    %c0_i32_1 = arith.constant 0 : i32
    return %c0_i32, %c0_i32_0 : i32, i32
  }
  func.func @transform_2(%arg0: i32) -> (i32, i32) {
    %c0_i32 = arith.constant 0 : i32
    %c0_i32_0 = arith.constant 0 : i32
    %c0_i32_1 = arith.constant 0 : i32
    return %c0_i32, %c0_i32_0 : i32, i32
  }
  func.func @transform_3(%arg0: i32) -> (i32, i32) {
    %c0_i32 = arith.constant 0 : i32
    %c0_i32_0 = arith.constant 0 : i32
    %c0_i32_1 = arith.constant 0 : i32
    return %c0_i32, %c0_i32_0 : i32, i32
  }
  func.func @transform_4(%arg0: i32) -> (i32, i32) {
    %c0_i32 = arith.constant 0 : i32
    %c0_i32_0 = arith.constant 0 : i32
    %c0_i32_1 = arith.constant 0 : i32
    return %c0_i32, %c0_i32_0 : i32, i32
  }
  func.func @transform_5(%arg0: i32) -> (i32, i32) {
    %c0_i32 = arith.constant 0 : i32
    %c0_i32_0 = arith.constant 0 : i32
    %c0_i32_1 = arith.constant 0 : i32
    return %c0_i32, %c0_i32_0 : i32, i32
  }
  func.func @transform_6(%arg0: i32) -> (i32, i32) {
    %c0_i32 = arith.constant 0 : i32
    %c0_i32_0 = arith.constant 0 : i32
    %c0_i32_1 = arith.constant 0 : i32
    return %c0_i32, %c0_i32_0 : i32, i32
  }
  func.func @transform_7(%arg0: i32) -> (i32, i32) {
    %c0_i32 = arith.constant 0 : i32
    %c0_i32_0 = arith.constant 0 : i32
    %c0_i32_1 = arith.constant 0 : i32
    return %c0_i32, %c0_i32_0 : i32, i32
  }
  func.func @transform_8(%arg0: i32) -> (i32, i32) {
    %c0_i32 = arith.constant 0 : i32
    %c0_i32_0 = arith.constant 0 : i32
    %c0_i32_1 = arith.constant 0 : i32
    return %c0_i32, %c0_i32_0 : i32, i32
  }
  func.func @transform_9(%arg0: i32) -> (i32, i32) {
    %c0_i32 = arith.constant 0 : i32
    %c0_i32_0 = arith.constant 0 : i32
    %c0_i32_1 = arith.constant 0 : i32
    return %c0_i32, %c0_i32_0 : i32, i32
  }
  func.func @transform_10(%arg0: i32) -> (i32, i32) {
    %c0_i32 = arith.constant 0 : i32
    %c0_i32_0 = arith.constant 0 : i32
    %c0_i32_1 = arith.constant 0 : i32
    return %c0_i32, %c0_i32_0 : i32, i32
  }
  func.func @transform_11(%arg0: i32) -> (i32, i32) {
    %c0_i32 = arith.constant 0 : i32
    %c0_i32_0 = arith.constant 0 : i32
    %c0_i32_1 = arith.constant 0 : i32
    return %c0_i32, %c0_i32_0 : i32, i32
  }
  func.func @transform_12(%arg0: i32) -> (i32, i32) {
    %c0_i32 = arith.constant 0 : i32
    %c0_i32_0 = arith.constant 0 : i32
    %c0_i32_1 = arith.constant 0 : i32
    return %c0_i32, %c0_i32_0 : i32, i32
  }
  func.func @transform_13(%arg0: i32) -> (i32, i32) {
    %c0_i32 = arith.constant 0 : i32
    %c0_i32_0 = arith.constant 0 : i32
    %c0_i32_1 = arith.constant 0 : i32
    return %c0_i32, %c0_i32_0 : i32, i32
  }
  func.func @transform_14(%arg0: i32) -> (i32, i32) {
    %c0_i32 = arith.constant 0 : i32
    %c0_i32_0 = arith.constant 0 : i32
    %c0_i32_1 = arith.constant 0 : i32
    return %c0_i32, %c0_i32_0 : i32, i32
  }
  func.func @transform_15(%arg0: i32) -> (i32, i32) {
    %c0_i32 = arith.constant 0 : i32
    %c0_i32_0 = arith.constant 0 : i32
    %c0_i32_1 = arith.constant 0 : i32
    return %c0_i32, %c0_i32_0 : i32, i32
  }
  func.func @transform_16(%arg0: i32) -> (i32, i32) {
    %c0_i32 = arith.constant 0 : i32
    %c0_i32_0 = arith.constant 0 : i32
    %c0_i32_1 = arith.constant 0 : i32
    return %c0_i32, %c0_i32_0 : i32, i32
  }
  func.func @transform_17(%arg0: i32) -> (i32, i32) {
    %c0_i32 = arith.constant 0 : i32
    %c0_i32_0 = arith.constant 0 : i32
    %c0_i32_1 = arith.constant 0 : i32
    return %c0_i32, %c0_i32_0 : i32, i32
  }
}

</mosaic_0001>

<llo_original>
// kernel: tile.11
$region0: #{tile.11}
  %s0 = inlined_call_operand.vmem [shape: f32[9,4,1,1,3,32], index: 0, kind: input, shape index: {}]
  %s1 = inlined_call_operand.vmem [shape: f32[9,12,32], index: 1, kind: output, shape index: {}]
  $region1: #{tile.11} parent=0
    #allocation0 [shape = 'u8[147456]{0}', space=vmem, size = 0x24000, scoped, tag = 'scoped mem for input reshape']
    %s3 = sshll.u32 1, 4
    %s4 = ssub.s32 %s3, 1
    %s5 = smul.addr 4, 35
    %s6 = scalar_lea.vmem %s0, %s5
    %v7 = vld [vmem:[%s6] sm:%s4]
    %s8 = scalar_lea.vmem [#allocation0], 280
    %9 = vst [vmem:[%s8] sm:%s4] %v7
    %s10 = smul.addr 4, 34
    %s11 = scalar_lea.vmem %s0, %s10
    %v12 = vld [vmem:[%s11] sm:%s4]
    %s13 = scalar_lea.vmem [#allocation0], 272
    %14 = vst [vmem:[%s13] sm:%s4] %v12
    %s15 = smul.addr 4, 33
    %s16 = scalar_lea.vmem %s0, %s15
    %v17 = vld [vmem:[%s16] sm:%s4]
    %s18 = scalar_lea.vmem [#allocation0], 264
    %19 = vst [vmem:[%s18] sm:%s4] %v17
    %s20 = smul.addr 4, 32
    %s21 = scalar_lea.vmem %s0, %s20
    %v22 = vld [vmem:[%s21] sm:%s4]
    %s23 = scalar_lea.vmem [#allocation0], 256
    %24 = vst [vmem:[%s23] sm:%s4] %v22
    %s25 = smul.addr 4, 31
    %s26 = scalar_lea.vmem %s0, %s25
    %v27 = vld [vmem:[%s26] sm:%s4]
    %s28 = scalar_lea.vmem [#allocation0], 248
    %29 = vst [vmem:[%s28] sm:%s4] %v27
    %s30 = smul.addr 4, 30
    %s31 = scalar_lea.vmem %s0, %s30
    %v32 = vld [vmem:[%s31] sm:%s4]
    %s33 = scalar_lea.vmem [#allocation0], 240
    %34 = vst [vmem:[%s33] sm:%s4] %v32
    %s35 = smul.addr 4, 29
    %s36 = scalar_lea.vmem %s0, %s35
    %v37 = vld [vmem:[%s36] sm:%s4]
    %s38 = scalar_lea.vmem [#allocation0], 232
    %39 = vst [vmem:[%s38] sm:%s4] %v37
    %s40 = smul.addr 4, 28
    %s41 = scalar_lea.vmem %s0, %s40
    %v42 = vld [vmem:[%s41] sm:%s4]
    %s43 = scalar_lea.vmem [#allocation0], 224
    %44 = vst [vmem:[%s43] sm:%s4] %v42
    %s45 = smul.addr 4, 27
    %s46 = scalar_lea.vmem %s0, %s45
    %v47 = vld [vmem:[%s46] sm:%s4]
    %s48 = scalar_lea.vmem [#allocation0], 216
    %49 = vst [vmem:[%s48] sm:%s4] %v47
    %s50 = smul.addr 4, 26
    %s51 = scalar_lea.vmem %s0, %s50
    %v52 = vld [vmem:[%s51] sm:%s4]
    %s53 = scalar_lea.vmem [#allocation0], 208
    %54 = vst [vmem:[%s53] sm:%s4] %v52
    %s55 = smul.addr 4, 25
    %s56 = scalar_lea.vmem %s0, %s55
    %v57 = vld [vmem:[%s56] sm:%s4]
    %s58 = scalar_lea.vmem [#allocation0], 200
    %59 = vst [vmem:[%s58] sm:%s4] %v57
    %s60 = smul.addr 4, 24
    %s61 = scalar_lea.vmem %s0, %s60
    %v62 = vld [vmem:[%s61] sm:%s4]
    %s63 = scalar_lea.vmem [#allocation0], 192
    %64 = vst [vmem:[%s63] sm:%s4] %v62
    %s65 = smul.addr 4, 23
    %s66 = scalar_lea.vmem %s0, %s65
    %v67 = vld [vmem:[%s66] sm:%s4]
    %s68 = scalar_lea.vmem [#allocation0], 184
    %69 = vst [vmem:[%s68] sm:%s4] %v67
    %s70 = smul.addr 4, 22
    %s71 = scalar_lea.vmem %s0, %s70
    %v72 = vld [vmem:[%s71] sm:%s4]
    %s73 = scalar_lea.vmem [#allocation0], 176
    %74 = vst [vmem:[%s73] sm:%s4] %v72
    %s75 = smul.addr 4, 21
    %s76 = scalar_lea.vmem %s0, %s75
    %v77 = vld [vmem:[%s76] sm:%s4]
    %s78 = scalar_lea.vmem [#allocation0], 168
    %79 = vst [vmem:[%s78] sm:%s4] %v77
    %s80 = smul.addr 4, 20
    %s81 = scalar_lea.vmem %s0, %s80
    %v82 = vld [vmem:[%s81] sm:%s4]
    %s83 = scalar_lea.vmem [#allocation0], 160
    %84 = vst [vmem:[%s83] sm:%s4] %v82
    %s85 = smul.addr 4, 19
    %s86 = scalar_lea.vmem %s0, %s85
    %v87 = vld [vmem:[%s86] sm:%s4]
    %s88 = scalar_lea.vmem [#allocation0], 152
    %89 = vst [vmem:[%s88] sm:%s4] %v87
    %s90 = smul.addr 4, 18
    %s91 = scalar_lea.vmem %s0, %s90
    %v92 = vld [vmem:[%s91] sm:%s4]
    %s93 = scalar_lea.vmem [#allocation0], 144
    %94 = vst [vmem:[%s93] sm:%s4] %v92
    %s95 = smul.addr 4, 17
    %s96 = scalar_lea.vmem %s0, %s95
    %v97 = vld [vmem:[%s96] sm:%s4]
    %s98 = scalar_lea.vmem [#allocation0], 136
    %99 = vst [vmem:[%s98] sm:%s4] %v97
    %s100 = smul.addr 4, 16
    %s101 = scalar_lea.vmem %s0, %s100
    %v102 = vld [vmem:[%s101] sm:%s4]
    %s103 = scalar_lea.vmem [#allocation0], 128
    %104 = vst [vmem:[%s103] sm:%s4] %v102
    %s105 = smul.addr 4, 15
    %s106 = scalar_lea.vmem %s0, %s105
    %v107 = vld [vmem:[%s106] sm:%s4]
    %s108 = scalar_lea.vmem [#allocation0], 120
    %109 = vst [vmem:[%s108] sm:%s4] %v107
    %s110 = smul.addr 4, 14
    %s111 = scalar_lea.vmem %s0, %s110
    %v112 = vld [vmem:[%s111] sm:%s4]
    %s113 = scalar_lea.vmem [#allocation0], 112
    %114 = vst [vmem:[%s113] sm:%s4] %v112
    %s115 = smul.addr 4, 13
    %s116 = scalar_lea.vmem %s0, %s115
    %v117 = vld [vmem:[%s116] sm:%s4]
    %s118 = scalar_lea.vmem [#allocation0], 104
    %119 = vst [vmem:[%s118] sm:%s4] %v117
    %s120 = smul.addr 4, 12
    %s121 = scalar_lea.vmem %s0, %s120
    %v122 = vld [vmem:[%s121] sm:%s4]
    %s123 = scalar_lea.vmem [#allocation0], 96
    %124 = vst [vmem:[%s123] sm:%s4] %v122
    %s125 = smul.addr 4, 11
    %s126 = scalar_lea.vmem %s0, %s125
    %v127 = vld [vmem:[%s126] sm:%s4]
    %s128 = scalar_lea.vmem [#allocation0], 88
    %129 = vst [vmem:[%s128] sm:%s4] %v127
    %s130 = smul.addr 4, 10
    %s131 = scalar_lea.vmem %s0, %s130
    %v132 = vld [vmem:[%s131] sm:%s4]
    %s133 = scalar_lea.vmem [#allocation0], 80
    %134 = vst [vmem:[%s133] sm:%s4] %v132
    %s135 = smul.addr 4, 9
    %s136 = scalar_lea.vmem %s0, %s135
    %v137 = vld [vmem:[%s136] sm:%s4]
    %s138 = scalar_lea.vmem [#allocation0], 72
    %139 = vst [vmem:[%s138] sm:%s4] %v137
    %s140 = smul.addr 4, 8
    %s141 = scalar_lea.vmem %s0, %s140
    %v142 = vld [vmem:[%s141] sm:%s4]
    %s143 = scalar_lea.vmem [#allocation0], 64
    %144 = vst [vmem:[%s143] sm:%s4] %v142
    %s145 = smul.addr 4, 7
    %s146 = scalar_lea.vmem %s0, %s145
    %v147 = vld [vmem:[%s146] sm:%s4]
    %s148 = scalar_lea.vmem [#allocation0], 56
    %149 = vst [vmem:[%s148] sm:%s4] %v147
    %s150 = smul.addr 4, 6
    %s151 = scalar_lea.vmem %s0, %s150
    %v152 = vld [vmem:[%s151] sm:%s4]
    %s153 = scalar_lea.vmem [#allocation0], 48
    %154 = vst [vmem:[%s153] sm:%s4] %v152
    %s155 = smul.addr 4, 5
    %s156 = scalar_lea.vmem %s0, %s155
    %v157 = vld [vmem:[%s156] sm:%s4]
    %s158 = scalar_lea.vmem [#allocation0], 40
    %159 = vst [vmem:[%s158] sm:%s4] %v157
    %s160 = smul.addr 4, 4
    %s161 = scalar_lea.vmem %s0, %s160
    %v162 = vld [vmem:[%s161] sm:%s4]
    %s163 = scalar_lea.vmem [#allocation0], 32
    %164 = vst [vmem:[%s163] sm:%s4] %v162
    %s165 = smul.addr 4, 3
    %s166 = scalar_lea.vmem %s0, %s165
    %v167 = vld [vmem:[%s166] sm:%s4]
    %s168 = scalar_lea.vmem [#allocation0], 24
    %169 = vst [vmem:[%s168] sm:%s4] %v167
    %s170 = smul.addr 4, 2
    %s171 = scalar_lea.vmem %s0, %s170
    %v172 = vld [vmem:[%s171] sm:%s4]
    %s173 = scalar_lea.vmem [#allocation0], 16
    %174 = vst [vmem:[%s173] sm:%s4] %v172
    %s175 = scalar_lea.vmem %s0, 4
    %v176 = vld [vmem:[%s175] sm:%s4]
    %s177 = scalar_lea.vmem [#allocation0], 8
    %178 = vst [vmem:[%s177] sm:%s4] %v176
    %v179 = vld [vmem:[%s0] sm:%s4]
    %180 = vst [vmem:[#allocation0] sm:%s4] %v179
    %v181 = vld [vmem:[#allocation0] sm:$0x7]
    %vm182 = vcmask 261120
    %183 = vst.msk [vmem:[%s1] sm:$0x7] %vm182, %v181
    %s184 = scalar_lea.vmem [#allocation0], 8
    %v185 = vld [vmem:[%s184] sm:$0x7]
    %vm186 = vcmask 261120
    %s187 = scalar_lea.vmem %s1, 3
    %188 = vst.msk [vmem:[%s187] sm:$0x7] %vm186, %v185
    %s189 = scalar_lea.vmem [#allocation0], 16
    %v190 = vld [vmem:[%s189] sm:$0x7]
    %vm191 = vcmask 261120
    %s192 = scalar_lea.vmem %s1, 6
    %193 = vst.msk [vmem:[%s192] sm:$0x7] %vm191, %v190
    %s194 = scalar_lea.vmem [#allocation0], 24
    %v195 = vld [vmem:[%s194] sm:$0x7]
    %vm196 = vcmask 261120
    %s197 = scalar_lea.vmem %s1, 9
    %198 = vst.msk [vmem:[%s197] sm:$0x7] %vm196, %v195
    %s199 = scalar_lea.vmem [#allocation0], 32
    %v200 = vld [vmem:[%s199] sm:$0x7]
    %vm201 = vcmask 261120
    %s202 = scalar_lea.vmem %s1, 16
    %203 = vst.msk [vmem:[%s202] sm:$0x7] %vm201, %v200
    %s204 = scalar_lea.vmem [#allocation0], 40
    %v205 = vld [vmem:[%s204] sm:$0x7]
    %vm206 = vcmask 261120
    %s207 = scalar_lea.vmem %s1, 19
    %208 = vst.msk [vmem:[%s207] sm:$0x7] %vm206, %v205
    %s209 = scalar_lea.vmem [#allocation0], 48
    %v210 = vld [vmem:[%s209] sm:$0x7]
    %vm211 = vcmask 261120
    %s212 = scalar_lea.vmem %s1, 22
    %213 = vst.msk [vmem:[%s212] sm:$0x7] %vm211, %v210
    %s214 = scalar_lea.vmem [#allocation0], 56
    %v215 = vld [vmem:[%s214] sm:$0x7]
    %vm216 = vcmask 261120
    %s217 = scalar_lea.vmem %s1, 25
    %218 = vst.msk [vmem:[%s217] sm:$0x7] %vm216, %v215
    %s219 = scalar_lea.vmem [#allocation0], 64
    %v220 = vld [vmem:[%s219] sm:$0x7]
    %vm221 = vcmask 261120
    %s222 = scalar_lea.vmem %s1, 32
    %223 = vst.msk [vmem:[%s222] sm:$0x7] %vm221, %v220
    %s224 = scalar_lea.vmem [#allocation0], 72
    %v225 = vld [vmem:[%s224] sm:$0x7]
    %vm226 = vcmask 261120
    %s227 = scalar_lea.vmem %s1, 35
    %228 = vst.msk [vmem:[%s227] sm:$0x7] %vm226, %v225
    %s229 = scalar_lea.vmem [#allocation0], 80
    %v230 = vld [vmem:[%s229] sm:$0x7]
    %vm231 = vcmask 261120
    %s232 = scalar_lea.vmem %s1, 38
    %233 = vst.msk [vmem:[%s232] sm:$0x7] %vm231, %v230
    %s234 = scalar_lea.vmem [#allocation0], 88
    %v235 = vld [vmem:[%s234] sm:$0x7]
    %vm236 = vcmask 261120
    %s237 = scalar_lea.vmem %s1, 41
    %238 = vst.msk [vmem:[%s237] sm:$0x7] %vm236, %v235
    %s239 = scalar_lea.vmem [#allocation0], 96
    %v240 = vld [vmem:[%s239] sm:$0x7]
    %vm241 = vcmask 261120
    %s242 = scalar_lea.vmem %s1, 48
    %243 = vst.msk [vmem:[%s242] sm:$0x7] %vm241, %v240
    %s244 = scalar_lea.vmem [#allocation0], 104
    %v245 = vld [vmem:[%s244] sm:$0x7]
    %vm246 = vcmask 261120
    %s247 = scalar_lea.vmem %s1, 51
    %248 = vst.msk [vmem:[%s247] sm:$0x7] %vm246, %v245
    %s249 = scalar_lea.vmem [#allocation0], 112
    %v250 = vld [vmem:[%s249] sm:$0x7]
    %vm251 = vcmask 261120
    %s252 = scalar_lea.vmem %s1, 54
    %253 = vst.msk [vmem:[%s252] sm:$0x7] %vm251, %v250
    %s254 = scalar_lea.vmem [#allocation0], 120
    %v255 = vld [vmem:[%s254] sm:$0x7]
    %vm256 = vcmask 261120
    %s257 = scalar_lea.vmem %s1, 57
    %258 = vst.msk [vmem:[%s257] sm:$0x7] %vm256, %v255
    %s259 = scalar_lea.vmem [#allocation0], 128
    %v260 = vld [vmem:[%s259] sm:$0x7]
    %vm261 = vcmask 261120
    %s262 = scalar_lea.vmem %s1, 64
    %263 = vst.msk [vmem:[%s262] sm:$0x7] %vm261, %v260
    %s264 = scalar_lea.vmem [#allocation0], 136
    %v265 = vld [vmem:[%s264] sm:$0x7]
    %vm266 = vcmask 261120
    %s267 = scalar_lea.vmem %s1, 67
    %268 = vst.msk [vmem:[%s267] sm:$0x7] %vm266, %v265
    %s269 = scalar_lea.vmem [#allocation0], 144
    %v270 = vld [vmem:[%s269] sm:$0x7]
    %vm271 = vcmask 261120
    %s272 = scalar_lea.vmem %s1, 70
    %273 = vst.msk [vmem:[%s272] sm:$0x7] %vm271, %v270
    %s274 = scalar_lea.vmem [#allocation0], 152
    %v275 = vld [vmem:[%s274] sm:$0x7]
    %vm276 = vcmask 261120
    %s277 = scalar_lea.vmem %s1, 73
    %278 = vst.msk [vmem:[%s277] sm:$0x7] %vm276, %v275
    %s279 = scalar_lea.vmem [#allocation0], 160
    %v280 = vld [vmem:[%s279] sm:$0x7]
    %vm281 = vcmask 261120
    %s282 = scalar_lea.vmem %s1, 80
    %283 = vst.msk [vmem:[%s282] sm:$0x7] %vm281, %v280
    %s284 = scalar_lea.vmem [#allocation0], 168
    %v285 = vld [vmem:[%s284] sm:$0x7]
    %vm286 = vcmask 261120
    %s287 = scalar_lea.vmem %s1, 83
    %288 = vst.msk [vmem:[%s287] sm:$0x7] %vm286, %v285
    %s289 = scalar_lea.vmem [#allocation0], 176
    %v290 = vld [vmem:[%s289] sm:$0x7]
    %vm291 = vcmask 261120
    %s292 = scalar_lea.vmem %s1, 86
    %293 = vst.msk [vmem:[%s292] sm:$0x7] %vm291, %v290
    %s294 = scalar_lea.vmem [#allocation0], 184
    %v295 = vld [vmem:[%s294] sm:$0x7]
    %vm296 = vcmask 261120
    %s297 = scalar_lea.vmem %s1, 89
    %298 = vst.msk [vmem:[%s297] sm:$0x7] %vm296, %v295
    %s299 = scalar_lea.vmem [#allocation0], 192
    %v300 = vld [vmem:[%s299] sm:$0x7]
    %vm301 = vcmask 261120
    %s302 = scalar_lea.vmem %s1, 96
    %303 = vst.msk [vmem:[%s302] sm:$0x7] %vm301, %v300
    %s304 = scalar_lea.vmem [#allocation0], 200
    %v305 = vld [vmem:[%s304] sm:$0x7]
    %vm306 = vcmask 261120
    %s307 = scalar_lea.vmem %s1, 99
    %308 = vst.msk [vmem:[%s307] sm:$0x7] %vm306, %v305
    %s309 = scalar_lea.vmem [#allocation0], 208
    %v310 = vld [vmem:[%s309] sm:$0x7]
    %vm311 = vcmask 261120
    %s312 = scalar_lea.vmem %s1, 102
    %313 = vst.msk [vmem:[%s312] sm:$0x7] %vm311, %v310
    %s314 = scalar_lea.vmem [#allocation0], 216
    %v315 = vld [vmem:[%s314] sm:$0x7]
    %vm316 = vcmask 261120
    %s317 = scalar_lea.vmem %s1, 105
    %318 = vst.msk [vmem:[%s317] sm:$0x7] %vm316, %v315
    %s319 = scalar_lea.vmem [#allocation0], 224
    %v320 = vld [vmem:[%s319] sm:$0x7]
    %vm321 = vcmask 261120
    %s322 = scalar_lea.vmem %s1, 112
    %323 = vst.msk [vmem:[%s322] sm:$0x7] %vm321, %v320
    %s324 = scalar_lea.vmem [#allocation0], 232
    %v325 = vld [vmem:[%s324] sm:$0x7]
    %vm326 = vcmask 261120
    %s327 = scalar_lea.vmem %s1, 115
    %328 = vst.msk [vmem:[%s327] sm:$0x7] %vm326, %v325
    %s329 = scalar_lea.vmem [#allocation0], 240
    %v330 = vld [vmem:[%s329] sm:$0x7]
    %vm331 = vcmask 261120
    %s332 = scalar_lea.vmem %s1, 118
    %333 = vst.msk [vmem:[%s332] sm:$0x7] %vm331, %v330
    %s334 = scalar_lea.vmem [#allocation0], 248
    %v335 = vld [vmem:[%s334] sm:$0x7]
    %vm336 = vcmask 261120
    %s337 = scalar_lea.vmem %s1, 121
    %338 = vst.msk [vmem:[%s337] sm:$0x7] %vm336, %v335
    %s339 = scalar_lea.vmem [#allocation0], 256
    %v340 = vld [vmem:[%s339] sm:$0x7]
    %vm341 = vcmask 261120
    %s342 = scalar_lea.vmem %s1, 128
    %343 = vst.msk [vmem:[%s342] sm:$0x7] %vm341, %v340
    %s344 = scalar_lea.vmem [#allocation0], 264
    %v345 = vld [vmem:[%s344] sm:$0x7]
    %vm346 = vcmask 261120
    %s347 = scalar_lea.vmem %s1, 131
    %348 = vst.msk [vmem:[%s347] sm:$0x7] %vm346, %v345
    %s349 = scalar_lea.vmem [#allocation0], 272
    %v350 = vld [vmem:[%s349] sm:$0x7]
    %vm351 = vcmask 261120
    %s352 = scalar_lea.vmem %s1, 134
    %353 = vst.msk [vmem:[%s352] sm:$0x7] %vm351, %v350
    %s354 = scalar_lea.vmem [#allocation0], 280
    %v355 = vld [vmem:[%s354] sm:$0x7]
    %vm356 = vcmask 261120
    %s357 = scalar_lea.vmem %s1, 137
    %358 = vst.msk [vmem:[%s357] sm:$0x7] %vm356, %v355

// kernel: safecount_multiblock_forward.1
$region0: #{safecount_multiblock_forward.1}
  #allocation0 [shape = 'u32[]', space=smem, size = 0x4, offset = 0x4, fixed_abs, tag = 'smem constant byte address 0x4 - core index']
  #allocation1 [shape = 'u32[144,128]{1,0:T(1,128)}', space=vmem, size = 0x12000, scoped, tag = 'internal scratch']
  #allocation2 [shape = 'f32[10,10,32]{2,1,0:T(8,128)}', space=vmem, size = 0x14000, scoped, tag = 'scratch operand']
  #allocation3 [shape = 'f32[10,10,12]{2,1,0:T(8,128)}', space=vmem, size = 0x14000, scoped, tag = 'scratch operand']
  #allocation4 [shape = 'f32[10,10,32]{2,1,0:T(8,128)}', space=vmem, size = 0x14000, scoped, tag = 'scratch operand']
  #allocation5 [shape = 'f32[10,10,16]{2,1,0:T(8,128)}', space=vmem, size = 0x14000, scoped, tag = 'scratch operand']
  %s0 = inlined_call_operand.vmem [shape: f32[64,32], index: 0, kind: input, shape index: {}]
  %s1 = inlined_call_operand.vmem [shape: bf16[32,32], index: 1, kind: input, shape index: {}]
  %s2 = inlined_call_operand.vmem [shape: f32[1,32], index: 2, kind: input, shape index: {}]
  %s3 = inlined_call_operand.vmem [shape: f32[1,32], index: 3, kind: input, shape index: {}]
  %s4 = inlined_call_operand.vmem [shape: f32[1,32], index: 4, kind: input, shape index: {}]
  %s5 = inlined_call_operand.vmem [shape: bf16[288,12], index: 5, kind: input, shape index: {}]
  %s6 = inlined_call_operand.vmem [shape: f32[12,12], index: 6, kind: input, shape index: {}]
  %s7 = inlined_call_operand.vmem [shape: bf16[108,32], index: 7, kind: input, shape index: {}]
  %s8 = inlined_call_operand.vmem [shape: f32[1,32], index: 8, kind: input, shape index: {}]
  %s9 = inlined_call_operand.vmem [shape: f32[1,32], index: 9, kind: input, shape index: {}]
  %s10 = inlined_call_operand.vmem [shape: f32[1,32], index: 10, kind: input, shape index: {}]
  %s11 = inlined_call_operand.vmem [shape: bf16[288,16], index: 11, kind: input, shape index: {}]
  %s12 = inlined_call_operand.vmem [shape: f32[1,16], index: 12, kind: input, shape index: {}]
  %s13 = inlined_call_operand.vmem [shape: bf16[144,32], index: 13, kind: input, shape index: {}]
  %s14 = inlined_call_operand.vmem [shape: f32[1,32], index: 14, kind: input, shape index: {}]
  %s15 = inlined_call_operand.vmem [shape: f32[1,32], index: 15, kind: input, shape index: {}]
  %s16 = inlined_call_operand.vmem [shape: f32[1,32], index: 16, kind: input, shape index: {}]
  %s17 = inlined_call_operand.hbm [shape: f32[64,32], index: 17, kind: output, shape index: {}]
  %s18 = sld [smem:[#allocation0]]
  $region105: #{safecount_multiblock_forward.1} parent=0
    _
  %s20 = ssub.s32 1, %s18
  %s21 = scalar_select 0, %s20, %s18
  $region1: #{safecount_multiblock_forward.1} parent=0
    #allocation6 [shape = 'u8[32768]{0}', space=vmem, size = 0x8000, scoped, tag = 'output window, operand 0, single buffered']
    #allocation7 [shape = 's32[2]{0}', space=sflag, size = 0x8, scoped, tag = 'scoped memory for safecount_multiblock_forward.1']
    %22 = vsyncpa [#allocation7], 0
    loop: start=0, step=1, limit=4
    $region2: #{safecount_multiblock_forward.1} parent=1 // loop_pre_header
      _
    $region3: #{safecount_multiblock_forward.1} parent=1 // loop_header
      %s24 = sphi 0, %s28
      %p25 = scmp.ge.s32.totalorder %s24, 4
      %s32 = sphi 0, %s32
      %s34 = sphi 0, %s32
      %s35 = sphi 0, %s34
      %s49 = sphi 0, %s35
      %s53 = sphi 0, %s53
      %s55 = sphi 0, %s53
      %s56 = sphi 0, %s55
      %s70 = sphi 0, %s56
      %s74 = sphi 0, %s74
      %s76 = sphi 0, %s74
      %s77 = sphi 0, %s76
      %s91 = sphi 0, %s77
      %s95 = sphi 0, %s95
      %s97 = sphi 0, %s95
      %s98 = sphi 0, %s97
      %s112 = sphi 0, %s98
      %s116 = sphi 0, %s116
      %s118 = sphi 0, %s116
      %s119 = sphi 0, %s118
      %s133 = sphi 0, %s119
      %s137 = sphi 0, %s137
      %s139 = sphi 0, %s137
      %s140 = sphi 0, %s139
      %s154 = sphi 0, %s140
      %s158 = sphi 0, %s158
      %s160 = sphi 0, %s158
      %s161 = sphi 0, %s160
      %s175 = sphi 0, %s161
      %s179 = sphi 0, %s179
      %s181 = sphi 0, %s179
      %s182 = sphi 0, %s181
      %s196 = sphi 0, %s182
      %s200 = sphi 0, %s200
      %s202 = sphi 0, %s200
      %s203 = sphi 0, %s202
      %s217 = sphi 0, %s203
      %s221 = sphi 0, %s221
      %s223 = sphi 0, %s221
      %s224 = sphi 0, %s223
      %s238 = sphi 0, %s224
      %s242 = sphi 0, %s242
      %s244 = sphi 0, %s242
      %s245 = sphi 0, %s244
      %s259 = sphi 0, %s245
      %s263 = sphi 0, %s263
      %s265 = sphi 0, %s263
      %s266 = sphi 0, %s265
      %s280 = sphi 0, %s266
      %s284 = sphi 0, %s284
      %s286 = sphi 0, %s284
      %s287 = sphi 0, %s286
      %s301 = sphi 0, %s287
      %s305 = sphi 0, %s305
      %s307 = sphi 0, %s305
      %s308 = sphi 0, %s307
      %s322 = sphi 0, %s308
      %s326 = sphi 0, %s326
      %s328 = sphi 0, %s326
      %s329 = sphi 0, %s328
      %s343 = sphi 0, %s329
      %s347 = sphi 0, %s347
      %s349 = sphi 0, %s347
      %s350 = sphi 0, %s349
      %s364 = sphi 0, %s350
      %s368 = sphi 0, %s368
      %s370 = sphi 0, %s368
      %s371 = sphi 0, %s370
      %s385 = sphi 0, %s371
      %s389 = sphi 0, %s389
      %s391 = sphi 0, %s389
      %s392 = sphi 0, %s391
      %s406 = sphi 0, %s392
    $region4: #{safecount_multiblock_forward.1} parent=1 // loop_header_branch
      %27 = sbr.rel (%p25) target = $region8
    $region5: #{safecount_multiblock_forward.1} parent=1 // loop_body
      %s29 = ssub.s32 %s24, 1
      %s30 = ssub.s32 %s24, 2
      %s31 = sadd.s32 %s24, 1
      %s33 = sadd.s32 %s32, 1
      %p36 = scmp.eq.s32.totalorder %s24, 1
      %p37 = scmp.ne.s32.totalorder %s32, %s34
      %p38 = scmp.eq.s32.totalorder %s24, 0
      %p39 = por %p37, %p38
      %p40 = scmp.ne.s32.totalorder %s32, %s34
      %p41 = scmp.eq.s32.totalorder %s29, 1
      %p42 = por %p40, %p41
      %p43 = scmp.ne.s32.totalorder %s34, %s35
      %p44 = scmp.eq.s32.totalorder %s29, 0
      %p45 = por %p43, %p44
      %p46 = scmp.ne.s32.totalorder %s34, %s35
      %p47 = scmp.eq.s32.totalorder %s30, 1
      %p48 = por %p46, %p47
      %p50 = scmp.ne.s32.totalorder %s35, %s49
      %p51 = scmp.eq.s32.totalorder %s30, 0
      %p52 = por %p50, %p51
      %s54 = sadd.s32 %s53, 1
      %p57 = scmp.eq.s32.totalorder %s24, 1
      %p58 = scmp.ne.s32.totalorder %s53, %s55
      %p59 = scmp.eq.s32.totalorder %s24, 0
      %p60 = por %p58, %p59
      %p61 = scmp.ne.s32.totalorder %s53, %s55
      %p62 = scmp.eq.s32.totalorder %s29, 1
      %p63 = por %p61, %p62
      %p64 = scmp.ne.s32.totalorder %s55, %s56
      %p65 = scmp.eq.s32.totalorder %s29, 0
      %p66 = por %p64, %p65
      %p67 = scmp.ne.s32.totalorder %s55, %s56
      %p68 = scmp.eq.s32.totalorder %s30, 1
      %p69 = por %p67, %p68
      %p71 = scmp.ne.s32.totalorder %s56, %s70
      %p72 = scmp.eq.s32.totalorder %s30, 0
      %p73 = por %p71, %p72
      %s75 = sadd.s32 %s74, 1
      %p78 = scmp.eq.s32.totalorder %s24, 1
      %p79 = scmp.ne.s32.totalorder %s74, %s76
      %p80 = scmp.eq.s32.totalorder %s24, 0
      %p81 = por %p79, %p80
      %p82 = scmp.ne.s32.totalorder %s74, %s76
      %p83 = scmp.eq.s32.totalorder %s29, 1
      %p84 = por %p82, %p83
      %p85 = scmp.ne.s32.totalorder %s76, %s77
      %p86 = scmp.eq.s32.totalorder %s29, 0
      %p87 = por %p85, %p86
      %p88 = scmp.ne.s32.totalorder %s76, %s77
      %p89 = scmp.eq.s32.totalorder %s30, 1
      %p90 = por %p88, %p89
      %p92 = scmp.ne.s32.totalorder %s77, %s91
      %p93 = scmp.eq.s32.totalorder %s30, 0
      %p94 = por %p92, %p93
      %s96 = sadd.s32 %s95, 1
      %p99 = scmp.eq.s32.totalorder %s24, 1
      %p100 = scmp.ne.s32.totalorder %s95, %s97
      %p101 = scmp.eq.s32.totalorder %s24, 0
      %p102 = por %p100, %p101
      %p103 = scmp.ne.s32.totalorder %s95, %s97
      %p104 = scmp.eq.s32.totalorder %s29, 1
      %p105 = por %p103, %p104
      %p106 = scmp.ne.s32.totalorder %s97, %s98
      %p107 = scmp.eq.s32.totalorder %s29, 0
      %p108 = por %p106, %p107
      %p109 = scmp.ne.s32.totalorder %s97, %s98
      %p110 = scmp.eq.s32.totalorder %s30, 1
      %p111 = por %p109, %p110
      %p113 = scmp.ne.s32.totalorder %s98, %s112
      %p114 = scmp.eq.s32.totalorder %s30, 0
      %p115 = por %p113, %p114
      %s117 = sadd.s32 %s116, 1
      %p120 = scmp.eq.s32.totalorder %s24, 1
      %p121 = scmp.ne.s32.totalorder %s116, %s118
      %p122 = scmp.eq.s32.totalorder %s24, 0
      %p123 = por %p121, %p122
      %p124 = scmp.ne.s32.totalorder %s116, %s118
      %p125 = scmp.eq.s32.totalorder %s29, 1
      %p126 = por %p124, %p125
      %p127 = scmp.ne.s32.totalorder %s118, %s119
      %p128 = scmp.eq.s32.totalorder %s29, 0
      %p129 = por %p127, %p128
      %p130 = scmp.ne.s32.totalorder %s118, %s119
      %p131 = scmp.eq.s32.totalorder %s30, 1
      %p132 = por %p130, %p131
      %p134 = scmp.ne.s32.totalorder %s119, %s133
      %p135 = scmp.eq.s32.totalorder %s30, 0
      %p136 = por %p134, %p135
      %s138 = sadd.s32 %s137, 1
      %p141 = scmp.eq.s32.totalorder %s24, 1
      %p142 = scmp.ne.s32.totalorder %s137, %s139
      %p143 = scmp.eq.s32.totalorder %s24, 0
      %p144 = por %p142, %p143
      %p145 = scmp.ne.s32.totalorder %s137, %s139
      %p146 = scmp.eq.s32.totalorder %s29, 1
      %p147 = por %p145, %p146
      %p148 = scmp.ne.s32.totalorder %s139, %s140
      %p149 = scmp.eq.s32.totalorder %s29, 0
      %p150 = por %p148, %p149
      %p151 = scmp.ne.s32.totalorder %s139, %s140
      %p152 = scmp.eq.s32.totalorder %s30, 1
      %p153 = por %p151, %p152
      %p155 = scmp.ne.s32.totalorder %s140, %s154
      %p156 = scmp.eq.s32.totalorder %s30, 0
      %p157 = por %p155, %p156
      %s159 = sadd.s32 %s158, 1
      %p162 = scmp.eq.s32.totalorder %s24, 1
      %p163 = scmp.ne.s32.totalorder %s158, %s160
      %p164 = scmp.eq.s32.totalorder %s24, 0
      %p165 = por %p163, %p164
      %p166 = scmp.ne.s32.totalorder %s158, %s160
      %p167 = scmp.eq.s32.totalorder %s29, 1
      %p168 = por %p166, %p167
      %p169 = scmp.ne.s32.totalorder %s160, %s161
      %p170 = scmp.eq.s32.totalorder %s29, 0
      %p171 = por %p169, %p170
      %p172 = scmp.ne.s32.totalorder %s160, %s161
      %p173 = scmp.eq.s32.totalorder %s30, 1
      %p174 = por %p172, %p173
      %p176 = scmp.ne.s32.totalorder %s161, %s175
      %p177 = scmp.eq.s32.totalorder %s30, 0
      %p178 = por %p176, %p177
      %s180 = sadd.s32 %s179, 1
      %p183 = scmp.eq.s32.totalorder %s24, 1
      %p184 = scmp.ne.s32.totalorder %s179, %s181
      %p185 = scmp.eq.s32.totalorder %s24, 0
      %p186 = por %p184, %p185
      %p187 = scmp.ne.s32.totalorder %s179, %s181
      %p188 = scmp.eq.s32.totalorder %s29, 1
      %p189 = por %p187, %p188
      %p190 = scmp.ne.s32.totalorder %s181, %s182
      %p191 = scmp.eq.s32.totalorder %s29, 0
      %p192 = por %p190, %p191
      %p193 = scmp.ne.s32.totalorder %s181, %s182
      %p194 = scmp.eq.s32.totalorder %s30, 1
      %p195 = por %p193, %p194
      %p197 = scmp.ne.s32.totalorder %s182, %s196
      %p198 = scmp.eq.s32.totalorder %s30, 0
      %p199 = por %p197, %p198
      %s201 = sadd.s32 %s200, 1
      %p204 = scmp.eq.s32.totalorder %s24, 1
      %p205 = scmp.ne.s32.totalorder %s200, %s202
      %p206 = scmp.eq.s32.totalorder %s24, 0
      %p207 = por %p205, %p206
      %p208 = scmp.ne.s32.totalorder %s200, %s202
      %p209 = scmp.eq.s32.totalorder %s29, 1
      %p210 = por %p208, %p209
      %p211 = scmp.ne.s32.totalorder %s202, %s203
      %p212 = scmp.eq.s32.totalorder %s29, 0
      %p213 = por %p211, %p212
      %p214 = scmp.ne.s32.totalorder %s202, %s203
      %p215 = scmp.eq.s32.totalorder %s30, 1
      %p216 = por %p214, %p215
      %p218 = scmp.ne.s32.totalorder %s203, %s217
      %p219 = scmp.eq.s32.totalorder %s30, 0
      %p220 = por %p218, %p219
      %s222 = sadd.s32 %s221, 1
      %p225 = scmp.eq.s32.totalorder %s24, 1
      %p226 = scmp.ne.s32.totalorder %s221, %s223
      %p227 = scmp.eq.s32.totalorder %s24, 0
      %p228 = por %p226, %p227
      %p229 = scmp.ne.s32.totalorder %s221, %s223
      %p230 = scmp.eq.s32.totalorder %s29, 1
      %p231 = por %p229, %p230
      %p232 = scmp.ne.s32.totalorder %s223, %s224
      %p233 = scmp.eq.s32.totalorder %s29, 0
      %p234 = por %p232, %p233
      %p235 = scmp.ne.s32.totalorder %s223, %s224
      %p236 = scmp.eq.s32.totalorder %s30, 1
      %p237 = por %p235, %p236
      %p239 = scmp.ne.s32.totalorder %s224, %s238
      %p240 = scmp.eq.s32.totalorder %s30, 0
      %p241 = por %p239, %p240
      %s243 = sadd.s32 %s242, 1
      %p246 = scmp.eq.s32.totalorder %s24, 1
      %p247 = scmp.ne.s32.totalorder %s242, %s244
      %p248 = scmp.eq.s32.totalorder %s24, 0
      %p249 = por %p247, %p248
      %p250 = scmp.ne.s32.totalorder %s242, %s244
      %p251 = scmp.eq.s32.totalorder %s29, 1
      %p252 = por %p250, %p251
      %p253 = scmp.ne.s32.totalorder %s244, %s245
      %p254 = scmp.eq.s32.totalorder %s29, 0
      %p255 = por %p253, %p254
      %p256 = scmp.ne.s32.totalorder %s244, %s245
      %p257 = scmp.eq.s32.totalorder %s30, 1
      %p258 = por %p256, %p257
      %p260 = scmp.ne.s32.totalorder %s245, %s259
      %p261 = scmp.eq.s32.totalorder %s30, 0
      %p262 = por %p260, %p261
      %s264 = sadd.s32 %s263, 1
      %p267 = scmp.eq.s32.totalorder %s24, 1
      %p268 = scmp.ne.s32.totalorder %s263, %s265
      %p269 = scmp.eq.s32.totalorder %s24, 0
      %p270 = por %p268, %p269
      %p271 = scmp.ne.s32.totalorder %s263, %s265
      %p272 = scmp.eq.s32.totalorder %s29, 1
      %p273 = por %p271, %p272
      %p274 = scmp.ne.s32.totalorder %s265, %s266
      %p275 = scmp.eq.s32.totalorder %s29, 0
      %p276 = por %p274, %p275
      %p277 = scmp.ne.s32.totalorder %s265, %s266
      %p278 = scmp.eq.s32.totalorder %s30, 1
      %p279 = por %p277, %p278
      %p281 = scmp.ne.s32.totalorder %s266, %s280
      %p282 = scmp.eq.s32.totalorder %s30, 0
      %p283 = por %p281, %p282
      %s285 = sadd.s32 %s284, 1
      %p288 = scmp.eq.s32.totalorder %s24, 1
      %p289 = scmp.ne.s32.totalorder %s284, %s286
      %p290 = scmp.eq.s32.totalorder %s24, 0
      %p291 = por %p289, %p290
      %p292 = scmp.ne.s32.totalorder %s284, %s286
      %p293 = scmp.eq.s32.totalorder %s29, 1
      %p294 = por %p292, %p293
      %p295 = scmp.ne.s32.totalorder %s286, %s287
      %p296 = scmp.eq.s32.totalorder %s29, 0
      %p297 = por %p295, %p296
      %p298 = scmp.ne.s32.totalorder %s286, %s287
      %p299 = scmp.eq.s32.totalorder %s30, 1
      %p300 = por %p298, %p299
      %p302 = scmp.ne.s32.totalorder %s287, %s301
      %p303 = scmp.eq.s32.totalorder %s30, 0
      %p304 = por %p302, %p303
      %s306 = sadd.s32 %s305, 1
      %p309 = scmp.eq.s32.totalorder %s24, 1
      %p310 = scmp.ne.s32.totalorder %s305, %s307
      %p311 = scmp.eq.s32.totalorder %s24, 0
      %p312 = por %p310, %p311
      %p313 = scmp.ne.s32.totalorder %s305, %s307
      %p314 = scmp.eq.s32.totalorder %s29, 1
      %p315 = por %p313, %p314
      %p316 = scmp.ne.s32.totalorder %s307, %s308
      %p317 = scmp.eq.s32.totalorder %s29, 0
      %p318 = por %p316, %p317
      %p319 = scmp.ne.s32.totalorder %s307, %s308
      %p320 = scmp.eq.s32.totalorder %s30, 1
      %p321 = por %p319, %p320
      %p323 = scmp.ne.s32.totalorder %s308, %s322
      %p324 = scmp.eq.s32.totalorder %s30, 0
      %p325 = por %p323, %p324
      %s327 = sadd.s32 %s326, 1
      %p330 = scmp.eq.s32.totalorder %s24, 1
      %p331 = scmp.ne.s32.totalorder %s326, %s328
      %p332 = scmp.eq.s32.totalorder %s24, 0
      %p333 = por %p331, %p332
      %p334 = scmp.ne.s32.totalorder %s326, %s328
      %p335 = scmp.eq.s32.totalorder %s29, 1
      %p336 = por %p334, %p335
      %p337 = scmp.ne.s32.totalorder %s328, %s329
      %p338 = scmp.eq.s32.totalorder %s29, 0
      %p339 = por %p337, %p338
      %p340 = scmp.ne.s32.totalorder %s328, %s329
      %p341 = scmp.eq.s32.totalorder %s30, 1
      %p342 = por %p340, %p341
      %p344 = scmp.ne.s32.totalorder %s329, %s343
      %p345 = scmp.eq.s32.totalorder %s30, 0
      %p346 = por %p344, %p345
      %s348 = sadd.s32 %s347, 1
      %p351 = scmp.eq.s32.totalorder %s24, 1
      %p352 = scmp.ne.s32.totalorder %s347, %s349
      %p353 = scmp.eq.s32.totalorder %s24, 0
      %p354 = por %p352, %p353
      %p355 = scmp.ne.s32.totalorder %s347, %s349
      %p356 = scmp.eq.s32.totalorder %s29, 1
      %p357 = por %p355, %p356
      %p358 = scmp.ne.s32.totalorder %s349, %s350
      %p359 = scmp.eq.s32.totalorder %s29, 0
      %p360 = por %p358, %p359
      %p361 = scmp.ne.s32.totalorder %s349, %s350
      %p362 = scmp.eq.s32.totalorder %s30, 1
      %p363 = por %p361, %p362
      %p365 = scmp.ne.s32.totalorder %s350, %s364
      %p366 = scmp.eq.s32.totalorder %s30, 0
      %p367 = por %p365, %p366
      %s369 = sadd.s32 %s368, 1
      %p372 = scmp.eq.s32.totalorder %s24, 1
      %p373 = scmp.ne.s32.totalorder %s368, %s370
      %p374 = scmp.eq.s32.totalorder %s24, 0
      %p375 = por %p373, %p374
      %p376 = scmp.ne.s32.totalorder %s368, %s370
      %p377 = scmp.eq.s32.totalorder %s29, 1
      %p378 = por %p376, %p377
      %p379 = scmp.ne.s32.totalorder %s370, %s371
      %p380 = scmp.eq.s32.totalorder %s29, 0
      %p381 = por %p379, %p380
      %p382 = scmp.ne.s32.totalorder %s370, %s371
      %p383 = scmp.eq.s32.totalorder %s30, 1
      %p384 = por %p382, %p383
      %p386 = scmp.ne.s32.totalorder %s371, %s385
      %p387 = scmp.eq.s32.totalorder %s30, 0
      %p388 = por %p386, %p387
      %s390 = sadd.s32 %s389, 1
      %p393 = scmp.eq.s32.totalorder %s24, 1
      %p394 = scmp.ne.s32.totalorder %s389, %s391
      %p395 = scmp.eq.s32.totalorder %s24, 0
      %p396 = por %p394, %p395
      %p397 = scmp.ne.s32.totalorder %s389, %s391
      %p398 = scmp.eq.s32.totalorder %s29, 1
      %p399 = por %p397, %p398
      %p400 = scmp.ne.s32.totalorder %s391, %s392
      %p401 = scmp.eq.s32.totalorder %s29, 0
      %p402 = por %p400, %p401
      %p403 = scmp.ne.s32.totalorder %s391, %s392
      %p404 = scmp.eq.s32.totalorder %s30, 1
      %p405 = por %p403, %p404
      %p407 = scmp.ne.s32.totalorder %s392, %s406
      %p408 = scmp.eq.s32.totalorder %s30, 0
      %p409 = por %p407, %p408
      %p410 = scmp.le.s32.totalorder 1, %s24
      %p411 = scmp.lt.s32.totalorder %s24, 3
      %p412 = pnand %p410, %p411
      %p413 = pneg %p412
      // Predicated region
      $region9: #{safecount_multiblock_forward.1} parent=5 // pred_check
        _
      $region10: #{safecount_multiblock_forward.1} parent=5 // pred_check_branch
        %415 = sbr.rel (%p412) target = $region12
      $region11: #{safecount_multiblock_forward.1} parent=5 // pred_region
        %s416 = ssub.s32 %s24, 1
        // Predicated region
        $region13: #{safecount_multiblock_forward.1} parent=11 // pred_check
          %p417 = pneg %p45
        $region14: #{safecount_multiblock_forward.1} parent=11 // pred_check_branch
          %419 = sbr.rel (%p417) target = $region16
        $region15: #{safecount_multiblock_forward.1} parent=11 // pred_region
          _
        $region16: #{safecount_multiblock_forward.1} parent=11 // pred_fallthru
          _
        // Predicated region
        $region17: #{safecount_multiblock_forward.1} parent=11 // pred_check
          %p420 = pneg %p66
        $region18: #{safecount_multiblock_forward.1} parent=11 // pred_check_branch
          %422 = sbr.rel (%p420) target = $region20
        $region19: #{safecount_multiblock_forward.1} parent=11 // pred_region
          _
        $region20: #{safecount_multiblock_forward.1} parent=11 // pred_fallthru
          _
        // Predicated region
        $region21: #{safecount_multiblock_forward.1} parent=11 // pred_check
          %p423 = pneg %p87
        $region22: #{safecount_multiblock_forward.1} parent=11 // pred_check_branch
          %425 = sbr.rel (%p423) target = $region24
        $region23: #{safecount_multiblock_forward.1} parent=11 // pred_region
          _
        $region24: #{safecount_multiblock_forward.1} parent=11 // pred_fallthru
          _
        // Predicated region
        $region25: #{safecount_multiblock_forward.1} parent=11 // pred_check
          %p426 = pneg %p108
        $region26: #{safecount_multiblock_forward.1} parent=11 // pred_check_branch
          %428 = sbr.rel (%p426) target = $region28
        $region27: #{safecount_multiblock_forward.1} parent=11 // pred_region
          _
        $region28: #{safecount_multiblock_forward.1} parent=11 // pred_fallthru
          _
        // Predicated region
        $region29: #{safecount_multiblock_forward.1} parent=11 // pred_check
          %p429 = pneg %p129
        $region30: #{safecount_multiblock_forward.1} parent=11 // pred_check_branch
          %431 = sbr.rel (%p429) target = $region32
        $region31: #{safecount_multiblock_forward.1} parent=11 // pred_region
          _
        $region32: #{safecount_multiblock_forward.1} parent=11 // pred_fallthru
          _
        // Predicated region
        $region33: #{safecount_multiblock_forward.1} parent=11 // pred_check
          %p432 = pneg %p150
        $region34: #{safecount_multiblock_forward.1} parent=11 // pred_check_branch
          %434 = sbr.rel (%p432) target = $region36
        $region35: #{safecount_multiblock_forward.1} parent=11 // pred_region
          _
        $region36: #{safecount_multiblock_forward.1} parent=11 // pred_fallthru
          _
        // Predicated region
        $region37: #{safecount_multiblock_forward.1} parent=11 // pred_check
          %p435 = pneg %p171
        $region38: #{safecount_multiblock_forward.1} parent=11 // pred_check_branch
          %437 = sbr.rel (%p435) target = $region40
        $region39: #{safecount_multiblock_forward.1} parent=11 // pred_region
          _
        $region40: #{safecount_multiblock_forward.1} parent=11 // pred_fallthru
          _
        // Predicated region
        $region41: #{safecount_multiblock_forward.1} parent=11 // pred_check
          %p438 = pneg %p192
        $region42: #{safecount_multiblock_forward.1} parent=11 // pred_check_branch
          %440 = sbr.rel (%p438) target = $region44
        $region43: #{safecount_multiblock_forward.1} parent=11 // pred_region
          _
        $region44: #{safecount_multiblock_forward.1} parent=11 // pred_fallthru
          _
        // Predicated region
        $region45: #{safecount_multiblock_forward.1} parent=11 // pred_check
          %p441 = pneg %p213
        $region46: #{safecount_multiblock_forward.1} parent=11 // pred_check_branch
          %443 = sbr.rel (%p441) target = $region48
        $region47: #{safecount_multiblock_forward.1} parent=11 // pred_region
          _
        $region48: #{safecount_multiblock_forward.1} parent=11 // pred_fallthru
          _
        // Predicated region
        $region49: #{safecount_multiblock_forward.1} parent=11 // pred_check
          %p444 = pneg %p234
        $region50: #{safecount_multiblock_forward.1} parent=11 // pred_check_branch
          %446 = sbr.rel (%p444) target = $region52
        $region51: #{safecount_multiblock_forward.1} parent=11 // pred_region
          _
        $region52: #{safecount_multiblock_forward.1} parent=11 // pred_fallthru
          _
        // Predicated region
        $region53: #{safecount_multiblock_forward.1} parent=11 // pred_check
          %p447 = pneg %p255
        $region54: #{safecount_multiblock_forward.1} parent=11 // pred_check_branch
          %449 = sbr.rel (%p447) target = $region56
        $region55: #{safecount_multiblock_forward.1} parent=11 // pred_region
          _
        $region56: #{safecount_multiblock_forward.1} parent=11 // pred_fallthru
          _
        // Predicated region
        $region57: #{safecount_multiblock_forward.1} parent=11 // pred_check
          %p450 = pneg %p276
        $region58: #{safecount_multiblock_forward.1} parent=11 // pred_check_branch
          %452 = sbr.rel (%p450) target = $region60
        $region59: #{safecount_multiblock_forward.1} parent=11 // pred_region
          _
        $region60: #{safecount_multiblock_forward.1} parent=11 // pred_fallthru
          _
        // Predicated region
        $region61: #{safecount_multiblock_forward.1} parent=11 // pred_check
          %p453 = pneg %p297
        $region62: #{safecount_multiblock_forward.1} parent=11 // pred_check_branch
          %455 = sbr.rel (%p453) target = $region64
        $region63: #{safecount_multiblock_forward.1} parent=11 // pred_region
          _
        $region64: #{safecount_multiblock_forward.1} parent=11 // pred_fallthru
          _
        // Predicated region
        $region65: #{safecount_multiblock_forward.1} parent=11 // pred_check
          %p456 = pneg %p318
        $region66: #{safecount_multiblock_forward.1} parent=11 // pred_check_branch
          %458 = sbr.rel (%p456) target = $region68
        $region67: #{safecount_multiblock_forward.1} parent=11 // pred_region
          _
        $region68: #{safecount_multiblock_forward.1} parent=11 // pred_fallthru
          _
        // Predicated region
        $region69: #{safecount_multiblock_forward.1} parent=11 // pred_check
          %p459 = pneg %p339
        $region70: #{safecount_multiblock_forward.1} parent=11 // pred_check_branch
          %461 = sbr.rel (%p459) target = $region72
        $region71: #{safecount_multiblock_forward.1} parent=11 // pred_region
          _
        $region72: #{safecount_multiblock_forward.1} parent=11 // pred_fallthru
          _
        // Predicated region
        $region73: #{safecount_multiblock_forward.1} parent=11 // pred_check
          %p462 = pneg %p360
        $region74: #{safecount_multiblock_forward.1} parent=11 // pred_check_branch
          %464 = sbr.rel (%p462) target = $region76
        $region75: #{safecount_multiblock_forward.1} parent=11 // pred_region
          _
        $region76: #{safecount_multiblock_forward.1} parent=11 // pred_fallthru
          _
        // Predicated region
        $region77: #{safecount_multiblock_forward.1} parent=11 // pred_check
          %p465 = pneg %p381
        $region78: #{safecount_multiblock_forward.1} parent=11 // pred_check_branch
          %467 = sbr.rel (%p465) target = $region80
        $region79: #{safecount_multiblock_forward.1} parent=11 // pred_region
          _
        $region80: #{safecount_multiblock_forward.1} parent=11 // pred_fallthru
          _
      $region12: #{safecount_multiblock_forward.1} parent=5 // pred_fallthru
        _
      %p468 = scmp.lt.s32.totalorder %s24, 2
      // Predicated region
      $region81: #{safecount_multiblock_forward.1} parent=5 // pred_check
        %p469 = pneg %p468
      $region82: #{safecount_multiblock_forward.1} parent=5 // pred_check_branch
        %471 = sbr.rel (%p469) target = $region84
      $region83: #{safecount_multiblock_forward.1} parent=5 // pred_region
        _
      $region84: #{safecount_multiblock_forward.1} parent=5 // pred_fallthru
        _
      %p472 = scmp.le.s32.totalorder 1, %s24
      %p473 = scmp.lt.s32.totalorder %s24, 3
      %p474 = pnand %p472, %p473
      %p475 = pneg %p474
      // Predicated region
      $region85: #{safecount_multiblock_forward.1} parent=5 // pred_check
        _
      $region86: #{safecount_multiblock_forward.1} parent=5 // pred_check_branch
        %477 = sbr.rel (%p474) target = $region88
      $region87: #{safecount_multiblock_forward.1} parent=5 // pred_region
        %s478 = ssub.s32 %s24, 1
        %p479 = pneg %p45
        %p480 = pneg %p42
        %p481 = pneg %p66
        %p482 = pneg %p63
        %p483 = pneg %p87
        %p484 = pneg %p84
        %p485 = pneg %p108
        %p486 = pneg %p105
        %p487 = pneg %p129
        %p488 = pneg %p126
        %p489 = pneg %p150
        %p490 = pneg %p147
        %p491 = pneg %p171
        %p492 = pneg %p168
        %p493 = pneg %p192
        %p494 = pneg %p189
        %p495 = pneg %p213
        %p496 = pneg %p210
        %p497 = pneg %p234
        %p498 = pneg %p231
        %p499 = pneg %p255
        %p500 = pneg %p252
        %p501 = pneg %p276
        %p502 = pneg %p273
        %p503 = pneg %p297
        %p504 = pneg %p294
        %p505 = pneg %p318
        %p506 = pneg %p315
        %p507 = pneg %p339
        %p508 = pneg %p336
        %p509 = pneg %p360
        %p510 = pneg %p357
        %p511 = pneg %p381
        %p512 = pneg %p378
        %p513 = pneg %p402
        %p514 = pneg %p399
        %p516 = scmp.eq.s32.totalorder %s29, 0
        // Predicated region
        $region89: #{safecount_multiblock_forward.1} parent=87 // pred_check
          %p517 = pneg %p516
        $region90: #{safecount_multiblock_forward.1} parent=87 // pred_check_branch
          %519 = sbr.rel (%p517) target = $region92
        $region91: #{safecount_multiblock_forward.1} parent=87 // pred_region
          %vm520 = vcmask 261120
          %521 = vst.msk [vmem:[#allocation2] sm:$0xff] %vm520, 0.0
          %vm522 = vcmask 254976
          %523 = vst.msk [vmem:[#allocation2 + $0x8] sm:$0x3] %vm522, 0.0
          %524 = vst.msk [vmem:[#allocation2 + $0x10] sm:$0xff] %vm520, 0.0
          %525 = vst.msk [vmem:[#allocation2 + $0x18] sm:$0x3] %vm522, 0.0
          %526 = vst.msk [vmem:[#allocation2 + $0x20] sm:$0xff] %vm520, 0.0
          %527 = vst.msk [vmem:[#allocation2 + $0x28] sm:$0x3] %vm522, 0.0
          %528 = vst.msk [vmem:[#allocation2 + $0x30] sm:$0xff] %vm520, 0.0
          %529 = vst.msk [vmem:[#allocation2 + $0x38] sm:$0x3] %vm522, 0.0
          %530 = vst.msk [vmem:[#allocation2 + $0x40] sm:$0xff] %vm520, 0.0
          %531 = vst.msk [vmem:[#allocation2 + $0x48] sm:$0x3] %vm522, 0.0
          %532 = vst.msk [vmem:[#allocation2 + $0x50] sm:$0xff] %vm520, 0.0
          %533 = vst.msk [vmem:[#allocation2 + $0x58] sm:$0x3] %vm522, 0.0
          %534 = vst.msk [vmem:[#allocation2 + $0x60] sm:$0xff] %vm520, 0.0
          %535 = vst.msk [vmem:[#allocation2 + $0x68] sm:$0x3] %vm522, 0.0
          %536 = vst.msk [vmem:[#allocation2 + $0x70] sm:$0xff] %vm520, 0.0
          %537 = vst.msk [vmem:[#allocation2 + $0x78] sm:$0x3] %vm522, 0.0
          %538 = vst.msk [vmem:[#allocation2 + $0x80] sm:$0xff] %vm520, 0.0
          %539 = vst.msk [vmem:[#allocation2 + $0x88] sm:$0x3] %vm522, 0.0
          %540 = vst.msk [vmem:[#allocation2 + $0x90] sm:$0xff] %vm520, 0.0
          %541 = vst.msk [vmem:[#allocation2 + $0x98] sm:$0x3] %vm522, 0.0
          %vm542 = vcmask 97280
          %543 = vst.msk [vmem:[#allocation3] sm:$0xff] %vm542, 0.0
          %vm544 = vcmask 91136
          %545 = vst.msk [vmem:[#allocation3 + $0x8] sm:$0x3] %vm544, 0.0
          %546 = vst.msk [vmem:[#allocation3 + $0x10] sm:$0xff] %vm542, 0.0
          %547 = vst.msk [vmem:[#allocation3 + $0x18] sm:$0x3] %vm544, 0.0
          %548 = vst.msk [vmem:[#allocation3 + $0x20] sm:$0xff] %vm542, 0.0
          %549 = vst.msk [vmem:[#allocation3 + $0x28] sm:$0x3] %vm544, 0.0
          %550 = vst.msk [vmem:[#allocation3 + $0x30] sm:$0xff] %vm542, 0.0
          %551 = vst.msk [vmem:[#allocation3 + $0x38] sm:$0x3] %vm544, 0.0
          %552 = vst.msk [vmem:[#allocation3 + $0x40] sm:$0xff] %vm542, 0.0
          %553 = vst.msk [vmem:[#allocation3 + $0x48] sm:$0x3] %vm544, 0.0
          %554 = vst.msk [vmem:[#allocation3 + $0x50] sm:$0xff] %vm542, 0.0
          %555 = vst.msk [vmem:[#allocation3 + $0x58] sm:$0x3] %vm544, 0.0
          %556 = vst.msk [vmem:[#allocation3 + $0x60] sm:$0xff] %vm542, 0.0
          %557 = vst.msk [vmem:[#allocation3 + $0x68] sm:$0x3] %vm544, 0.0
          %558 = vst.msk [vmem:[#allocation3 + $0x70] sm:$0xff] %vm542, 0.0
          %559 = vst.msk [vmem:[#allocation3 + $0x78] sm:$0x3] %vm544, 0.0
          %560 = vst.msk [vmem:[#allocation3 + $0x80] sm:$0xff] %vm542, 0.0
          %561 = vst.msk [vmem:[#allocation3 + $0x88] sm:$0x3] %vm544, 0.0
          %562 = vst.msk [vmem:[#allocation3 + $0x90] sm:$0xff] %vm542, 0.0
          %563 = vst.msk [vmem:[#allocation3 + $0x98] sm:$0x3] %vm544, 0.0
          %564 = vst.msk [vmem:[#allocation4] sm:$0xff] %vm520, 0.0
          %565 = vst.msk [vmem:[#allocation4 + $0x8] sm:$0x3] %vm522, 0.0
          %566 = vst.msk [vmem:[#allocation4 + $0x10] sm:$0xff] %vm520, 0.0
          %567 = vst.msk [vmem:[#allocation4 + $0x18] sm:$0x3] %vm522, 0.0
          %568 = vst.msk [vmem:[#allocation4 + $0x20] sm:$0xff] %vm520, 0.0
          %569 = vst.msk [vmem:[#allocation4 + $0x28] sm:$0x3] %vm522, 0.0
          %570 = vst.msk [vmem:[#allocation4 + $0x30] sm:$0xff] %vm520, 0.0
          %571 = vst.msk [vmem:[#allocation4 + $0x38] sm:$0x3] %vm522, 0.0
          %572 = vst.msk [vmem:[#allocation4 + $0x40] sm:$0xff] %vm520, 0.0
          %573 = vst.msk [vmem:[#allocation4 + $0x48] sm:$0x3] %vm522, 0.0
          %574 = vst.msk [vmem:[#allocation4 + $0x50] sm:$0xff] %vm520, 0.0
          %575 = vst.msk [vmem:[#allocation4 + $0x58] sm:$0x3] %vm522, 0.0
          %576 = vst.msk [vmem:[#allocation4 + $0x60] sm:$0xff] %vm520, 0.0
          %577 = vst.msk [vmem:[#allocation4 + $0x68] sm:$0x3] %vm522, 0.0
          %578 = vst.msk [vmem:[#allocation4 + $0x70] sm:$0xff] %vm520, 0.0
          %579 = vst.msk [vmem:[#allocation4 + $0x78] sm:$0x3] %vm522, 0.0
          %580 = vst.msk [vmem:[#allocation4 + $0x80] sm:$0xff] %vm520, 0.0
          %581 = vst.msk [vmem:[#allocation4 + $0x88] sm:$0x3] %vm522, 0.0
          %582 = vst.msk [vmem:[#allocation4 + $0x90] sm:$0xff] %vm520, 0.0
          %583 = vst.msk [vmem:[#allocation4 + $0x98] sm:$0x3] %vm522, 0.0
          %vm584 = vcmask 130048
          %585 = vst.msk [vmem:[#allocation5] sm:$0xff] %vm584, 0.0
          %vm586 = vcmask 123904
          %587 = vst.msk [vmem:[#allocation5 + $0x8] sm:$0x3] %vm586, 0.0
          %588 = vst.msk [vmem:[#allocation5 + $0x10] sm:$0xff] %vm584, 0.0
          %589 = vst.msk [vmem:[#allocation5 + $0x18] sm:$0x3] %vm586, 0.0
          %590 = vst.msk [vmem:[#allocation5 + $0x20] sm:$0xff] %vm584, 0.0
          %591 = vst.msk [vmem:[#allocation5 + $0x28] sm:$0x3] %vm586, 0.0
          %592 = vst.msk [vmem:[#allocation5 + $0x30] sm:$0xff] %vm584, 0.0
          %593 = vst.msk [vmem:[#allocation5 + $0x38] sm:$0x3] %vm586, 0.0
          %594 = vst.msk [vmem:[#allocation5 + $0x40] sm:$0xff] %vm584, 0.0
          %595 = vst.msk [vmem:[#allocation5 + $0x48] sm:$0x3] %vm586, 0.0
          %596 = vst.msk [vmem:[#allocation5 + $0x50] sm:$0xff] %vm584, 0.0
          %597 = vst.msk [vmem:[#allocation5 + $0x58] sm:$0x3] %vm586, 0.0
          %598 = vst.msk [vmem:[#allocation5 + $0x60] sm:$0xff] %vm584, 0.0
          %599 = vst.msk [vmem:[#allocation5 + $0x68] sm:$0x3] %vm586, 0.0
          %600 = vst.msk [vmem:[#allocation5 + $0x70] sm:$0xff] %vm584, 0.0
          %601 = vst.msk [vmem:[#allocation5 + $0x78] sm:$0x3] %vm586, 0.0
          %602 = vst.msk [vmem:[#allocation5 + $0x80] sm:$0xff] %vm584, 0.0
          %603 = vst.msk [vmem:[#allocation5 + $0x88] sm:$0x3] %vm586, 0.0
          %604 = vst.msk [vmem:[#allocation5 + $0x90] sm:$0xff] %vm584, 0.0
          %605 = vst.msk [vmem:[#allocation5 + $0x98] sm:$0x3] %vm586, 0.0
          %v606 = vld [vmem:[%s0] sm:$0xff]
          %v607 = vld [vmem:[%s0 + $0x8] sm:$0xff]
          %v608 = vld [vmem:[%s0 + $0x10] sm:$0xff]
          %v609 = vld [vmem:[%s0 + $0x18] sm:$0xff]
          %v610 = vld [vmem:[%s0 + $0x20] sm:$0xff]
          %v611 = vld [vmem:[%s0 + $0x28] sm:$0xff]
          %v612 = vld [vmem:[%s0 + $0x30] sm:$0xff]
          %v613 = vld [vmem:[%s0 + $0x38] sm:$0xff]
          %614 = vst.msk [vmem:[#allocation6] sm:$0xff] %vm520, %v606
          %615 = vst.msk [vmem:[#allocation6 + $0x8] sm:$0xff] %vm520, %v607
          %616 = vst.msk [vmem:[#allocation6 + $0x10] sm:$0xff] %vm520, %v608
          %617 = vst.msk [vmem:[#allocation6 + $0x18] sm:$0xff] %vm520, %v609
          %618 = vst.msk [vmem:[#allocation6 + $0x20] sm:$0xff] %vm520, %v610
          %619 = vst.msk [vmem:[#allocation6 + $0x28] sm:$0xff] %vm520, %v611
          %620 = vst.msk [vmem:[#allocation6 + $0x30] sm:$0xff] %vm520, %v612
          %621 = vst.msk [vmem:[#allocation6 + $0x38] sm:$0xff] %vm520, %v613
        $region92: #{safecount_multiblock_forward.1} parent=87 // pred_fallthru
          _
        %v622 = vld [vmem:[#allocation6] sm:$0xff]
        %v623 = vld [vmem:[#allocation6 + $0x8] sm:$0xff]
        %v624 = vld [vmem:[#allocation6 + $0x10] sm:$0xff]
        %v625 = vld [vmem:[#allocation6 + $0x18] sm:$0xff]
        %v626 = vld [vmem:[#allocation6 + $0x20] sm:$0xff]
        %v627 = vld [vmem:[#allocation6 + $0x28] sm:$0xff]
        %v628 = vld [vmem:[#allocation6 + $0x30] sm:$0xff]
        %v629 = vld [vmem:[#allocation6 + $0x38] sm:$0xff]
        %v630 = vld [vmem:[%s1] sm:$0xf]
        %v631 = vld [vmem:[%s1 + $0x4] sm:$0xf]
        %v632 = vld [vmem:[%s1 + $0x8] sm:$0xf]
        %v633 = vld [vmem:[%s1 + $0xc] sm:$0xf]
        %v634 = vpack.c.bf16 %v623, %v622
        %v635 = vpack.c.bf16 %v625, %v624
        %v636 = vpack.c.bf16 %v627, %v626
        %v637 = vpack.c.bf16 %v629, %v628
        %v638 = vld [vmem:[%s2] sm:$0x1]
        %v640 = vlaneseq
        %v641 = vshrl.u32 %v640, 7
        %v642 = vsub.s32 0, %v641
        %v643 = vrot.slane %v638, %v642
        %v649 = vunpack.c.l.b16 %v630
        %v650 = vunpack.c.l.b16 %v631
        %v651 = vunpack.c.l.b16 %v632
        %v652 = vunpack.c.l.b16 %v633
        %v653 = vpack.c.b16 %v650, %v649
        %v654 = vpack.c.b16 %v652, %v651
        %vm657 = vcmask 261120
        %v659 = vsel %vm657, %v634, 0
        %v662 = vsel %vm657, %v635, 0
        %v665 = vsel %vm657, %v636, 0
        %v668 = vsel %vm657, %v637, 0
        %670 = vmatprep.subr.bf16.mxu0 0
        %671 = vmatpush1.bf16.msra.mxu0 0
        %672 = vmatprep.subr.bf16.mxu0 0
        %673 = vmatpush1.bf16.msra.mxu0 0
        %674 = vmatprep.subr.bf16.mxu0 0
        %675 = vmatpush1.bf16.msra.mxu0 0
        %676 = vmatprep.subr.bf16.mxu0 0
        %677 = vmatpush1.bf16.msra.mxu0 0
        %678 = vmatprep.subr.bf16.mxu0 0
        %679 = vmatpush1.bf16.msra.mxu0 0
        %680 = vmatprep.subr.bf16.mxu0 0
        %681 = vmatpush1.bf16.msra.mxu0 0
        %682 = vmatprep.subr.bf16.mxu0 0
        %683 = vmatpush1.bf16.msra.mxu0 %v654
        %684 = vmatprep.subr.bf16.mxu0 0
        %685 = vmatpush1.bf16.msra.mxu0 %v653
        %686 = vmatprep.subr.bf16.mxu0 0
        %687 = vmatpush2.bf16.msra.mxu0 0
        %688 = vmatprep.subr.bf16.mxu0 0
        %689 = vmatpush2.bf16.msra.mxu0 0
        %690 = vmatprep.subr.bf16.mxu0 0
        %691 = vmatpush2.bf16.msra.mxu0 0
        %692 = vmatprep.subr.bf16.mxu0 0
        %693 = vmatpush2.bf16.msra.mxu0 0
        %694 = vmatprep.subr.bf16.mxu0 0
        %695 = vmatpush2.bf16.msra.mxu0 0
        %696 = vmatprep.subr.bf16.mxu0 0
        %697 = vmatpush2.bf16.msra.mxu0 0
        %698 = vmatprep.subr.bf16.mxu0 0
        %699 = vmatpush2.bf16.msra.mxu0 0
        %700 = vmatprep.subr.bf16.mxu0 0
        %701 = vmatpush2.bf16.msra.mxu0 0
        %702 = vmatprep.mubr.bf16.mxu0 0
        %703 = vmatmul.mubr.bf16.gmra.mxu0 %v659
        %v704 = vpop.f32.mrf.mxu0
        %v705 = vadd.f32 %v643, %v704
        %v706 = vpop.f32.mrf.mxu0
        %v707 = vpop.f32.mrf.mxu0
        %v708 = vadd.f32 %v643, %v707
        %v709 = vpop.f32.mrf.mxu0
        %710 = vmatprep.mubr.bf16.mxu0 0
        %711 = vmatmul.mubr.bf16.gmra.mxu0 %v662
        %v712 = vpop.f32.mrf.mxu0
        %v713 = vadd.f32 %v643, %v712
        %v714 = vpop.f32.mrf.mxu0
        %v715 = vpop.f32.mrf.mxu0
        %v716 = vadd.f32 %v643, %v715
        %v717 = vpop.f32.mrf.mxu0
        %718 = vmatprep.mubr.bf16.mxu0 0
        %719 = vmatmul.mubr.bf16.gmra.mxu0 %v665
        %v720 = vpop.f32.mrf.mxu0
        %v721 = vadd.f32 %v643, %v720
        %v722 = vpop.f32.mrf.mxu0
        %v723 = vpop.f32.mrf.mxu0
        %v724 = vadd.f32 %v643, %v723
        %v725 = vpop.f32.mrf.mxu0
        %726 = vmatprep.mubr.bf16.mxu0 0
        %727 = vmatmul.mubr.bf16.gmra.mxu0 %v668
        %v728 = vpop.f32.mrf.mxu0
        %v729 = vadd.f32 %v643, %v728
        %v730 = vpop.f32.mrf.mxu0
        %v731 = vpop.f32.mrf.mxu0
        %v732 = vadd.f32 %v643, %v731
        %v733 = vpop.f32.mrf.mxu0
        %734 = vdwg.mxu0
        %v735 = vld [vmem:[%s3] sm:$0x1]
        %v736 = vld [vmem:[%s4] sm:$0x1]
        %v737 = vsel %vm657, %v705, 0.0
        %738 = vadd.xlane.f32.xlu0 %v737
        %v739 = vpop.xlane.xlu0 %738
        %v740 = vsel %vm657, %v708, 0.0
        %741 = vadd.xlane.f32.xlu0 %v740
        %v742 = vpop.xlane.xlu0 %741
        %v743 = vsel %vm657, %v713, 0.0
        %744 = vadd.xlane.f32.xlu0 %v743
        %v745 = vpop.xlane.xlu0 %744
        %v746 = vsel %vm657, %v716, 0.0
        %747 = vadd.xlane.f32.xlu0 %v746
        %v748 = vpop.xlane.xlu0 %747
        %v749 = vsel %vm657, %v721, 0.0
        %750 = vadd.xlane.f32.xlu0 %v749
        %v751 = vpop.xlane.xlu0 %750
        %v752 = vsel %vm657, %v724, 0.0
        %753 = vadd.xlane.f32.xlu0 %v752
        %v754 = vpop.xlane.xlu0 %753
        %v755 = vsel %vm657, %v729, 0.0
        %756 = vadd.xlane.f32.xlu0 %v755
        %v757 = vpop.xlane.xlu0 %756
        %v758 = vsel %vm657, %v732, 0.0
        %759 = vadd.xlane.f32.xlu0 %v758
        %v760 = vpop.xlane.xlu0 %759
        %v761 = vrcp.pop 32.0
        %v762 = vmul.f32 %v739, %v761
        %v763 = vmul.f32 %v742, %v761
        %v764 = vmul.f32 %v745, %v761
        %v765 = vmul.f32 %v748, %v761
        %v766 = vmul.f32 %v751, %v761
        %v767 = vmul.f32 %v754, %v761
        %v768 = vmul.f32 %v757, %v761
        %v769 = vmul.f32 %v760, %v761
        %v770 = vsub.f32 %v705, %v762
        %v771 = vsub.f32 %v708, %v763
        %v772 = vsub.f32 %v713, %v764
        %v773 = vsub.f32 %v716, %v765
        %v774 = vsub.f32 %v721, %v766
        %v775 = vsub.f32 %v724, %v767
        %v776 = vsub.f32 %v729, %v768
        %v777 = vsub.f32 %v732, %v769
        %v778 = vmul.f32 %v770, %v770
        %v779 = vmul.f32 %v771, %v771
        %v780 = vmul.f32 %v772, %v772
        %v781 = vmul.f32 %v773, %v773
        %v782 = vmul.f32 %v774, %v774
        %v783 = vmul.f32 %v775, %v775
        %v784 = vmul.f32 %v776, %v776
        %v785 = vmul.f32 %v777, %v777
        %v786 = vsel %vm657, %v778, 0.0
        %787 = vadd.xlane.f32.xlu0 %v786
        %v788 = vpop.xlane.xlu0 %787
        %v789 = vsel %vm657, %v779, 0.0
        %790 = vadd.xlane.f32.xlu0 %v789
        %v791 = vpop.xlane.xlu0 %790
        %v792 = vsel %vm657, %v780, 0.0
        %793 = vadd.xlane.f32.xlu0 %v792
        %v794 = vpop.xlane.xlu0 %793
        %v795 = vsel %vm657, %v781, 0.0
        %796 = vadd.xlane.f32.xlu0 %v795
        %v797 = vpop.xlane.xlu0 %796
        %v798 = vsel %vm657, %v782, 0.0
        %799 = vadd.xlane.f32.xlu0 %v798
        %v800 = vpop.xlane.xlu0 %799
        %v801 = vsel %vm657, %v783, 0.0
        %802 = vadd.xlane.f32.xlu0 %v801
        %v803 = vpop.xlane.xlu0 %802
        %v804 = vsel %vm657, %v784, 0.0
        %805 = vadd.xlane.f32.xlu0 %v804
        %v806 = vpop.xlane.xlu0 %805
        %v807 = vsel %vm657, %v785, 0.0
        %808 = vadd.xlane.f32.xlu0 %v807
        %v809 = vpop.xlane.xlu0 %808
        %v810 = vmul.f32 %v788, %v761
        %v811 = vmul.f32 %v791, %v761
        %v812 = vmul.f32 %v794, %v761
        %v813 = vmul.f32 %v797, %v761
        %v814 = vmul.f32 %v800, %v761
        %v815 = vmul.f32 %v803, %v761
        %v816 = vmul.f32 %v806, %v761
        %v817 = vmul.f32 %v809, %v761
        %v818 = vadd.f32 %v810, 1e-05
        %v819 = vadd.f32 %v811, 1e-05
        %v820 = vadd.f32 %v812, 1e-05
        %v821 = vadd.f32 %v813, 1e-05
        %v822 = vadd.f32 %v814, 1e-05
        %v823 = vadd.f32 %v815, 1e-05
        %v824 = vadd.f32 %v816, 1e-05
        %v825 = vadd.f32 %v817, 1e-05
        %v826 = vrsqrt.pop %v818
        %v827 = vrsqrt.pop %v819
        %v828 = vrsqrt.pop %v820
        %v829 = vrsqrt.pop %v821
        %v830 = vrsqrt.pop %v822
        %v831 = vrsqrt.pop %v823
        %v832 = vrsqrt.pop %v824
        %v833 = vrsqrt.pop %v825
        %v834 = vmul.f32 %v770, %v826
        %v835 = vmul.f32 %v771, %v827
        %v836 = vmul.f32 %v772, %v828
        %v837 = vmul.f32 %v773, %v829
        %v838 = vmul.f32 %v774, %v830
        %v839 = vmul.f32 %v775, %v831
        %v840 = vmul.f32 %v776, %v832
        %v841 = vmul.f32 %v777, %v833
        %v843 = vlaneseq
        %v844 = vshrl.u32 %v843, 7
        %v845 = vsub.s32 0, %v844
        %v846 = vrot.slane %v735, %v845
        %v848 = vmul.f32 %v834, %v846
        %v849 = vmul.f32 %v835, %v846
        %v850 = vmul.f32 %v836, %v846
        %v851 = vmul.f32 %v837, %v846
        %v852 = vmul.f32 %v838, %v846
        %v853 = vmul.f32 %v839, %v846
        %v854 = vmul.f32 %v840, %v846
        %v855 = vmul.f32 %v841, %v846
        %v857 = vlaneseq
        %v858 = vshrl.u32 %v857, 7
        %v859 = vsub.s32 0, %v858
        %v860 = vrot.slane %v736, %v859
        %v862 = vadd.f32 %v848, %v860
        %v863 = vadd.f32 %v849, %v860
        %v864 = vadd.f32 %v850, %v860
        %v865 = vadd.f32 %v851, %v860
        %v866 = vadd.f32 %v852, %v860
        %v867 = vadd.f32 %v853, %v860
        %v868 = vadd.f32 %v854, %v860
        %v869 = vadd.f32 %v855, %v860
        %s870 = scalar_lea.vmem [#allocation2], 16
        %871 = vst.msk [vmem:[%s870 + $0x1] sm:$0xff] %vm657, %v862
        %872 = vst.msk [vmem:[%s870 + $0x11] sm:$0xff] %vm657, %v863
        %873 = vst.msk [vmem:[%s870 + $0x21] sm:$0xff] %vm657, %v864
        %874 = vst.msk [vmem:[%s870 + $0x31] sm:$0xff] %vm657, %v865
        %875 = vst.msk [vmem:[%s870 + $0x41] sm:$0xff] %vm657, %v866
        %876 = vst.msk [vmem:[%s870 + $0x51] sm:$0xff] %vm657, %v867
        %877 = vst.msk [vmem:[%s870 + $0x61] sm:$0xff] %vm657, %v868
        %878 = vst.msk [vmem:[%s870 + $0x71] sm:$0xff] %vm657, %v869
        %v879 = vld [vmem:[#allocation2] sm:$0xff]
        %v880 = vld [vmem:[#allocation2 + $0x10] sm:$0xff]
        %v881 = vld [vmem:[#allocation2 + $0x20] sm:$0xff]
        %v882 = vld [vmem:[#allocation2 + $0x30] sm:$0xff]
        %v883 = vld [vmem:[#allocation2 + $0x40] sm:$0xff]
        %v884 = vld [vmem:[#allocation2 + $0x50] sm:$0xff]
        %v885 = vld [vmem:[#allocation2 + $0x60] sm:$0xff]
        %v886 = vld [vmem:[#allocation2 + $0x70] sm:$0xff]
        %v887 = vld [vmem:[#allocation2 + $0x1] sm:$0xff]
        %v888 = vld [vmem:[#allocation2 + $0x11] sm:$0xff]
        %v889 = vld [vmem:[#allocation2 + $0x21] sm:$0xff]
        %v890 = vld [vmem:[#allocation2 + $0x31] sm:$0xff]
        %v891 = vld [vmem:[#allocation2 + $0x41] sm:$0xff]
        %v892 = vld [vmem:[#allocation2 + $0x51] sm:$0xff]
        %v893 = vld [vmem:[#allocation2 + $0x61] sm:$0xff]
        %v894 = vld [vmem:[#allocation2 + $0x71] sm:$0xff]
        %v895 = vld [vmem:[#allocation2 + $0x2] sm:$0xff]
        %v896 = vld [vmem:[#allocation2 + $0x12] sm:$0xff]
        %v897 = vld [vmem:[#allocation2 + $0x22] sm:$0xff]
        %v898 = vld [vmem:[#allocation2 + $0x32] sm:$0xff]
        %v899 = vld [vmem:[#allocation2 + $0x42] sm:$0xff]
        %v900 = vld [vmem:[#allocation2 + $0x52] sm:$0xff]
        %v901 = vld [vmem:[#allocation2 + $0x62] sm:$0xff]
        %v902 = vld [vmem:[#allocation2 + $0x72] sm:$0xff]
        %v903 = vld [vmem:[%s870] sm:$0xff]
        %v904 = vld [vmem:[%s870 + $0x10] sm:$0xff]
        %v905 = vld [vmem:[%s870 + $0x20] sm:$0xff]
        %v906 = vld [vmem:[%s870 + $0x30] sm:$0xff]
        %v907 = vld [vmem:[%s870 + $0x40] sm:$0xff]
        %v908 = vld [vmem:[%s870 + $0x50] sm:$0xff]
        %v909 = vld [vmem:[%s870 + $0x60] sm:$0xff]
        %v910 = vld [vmem:[%s870 + $0x70] sm:$0xff]
        %v911 = vld [vmem:[%s870 + $0x1] sm:$0xff]
        %v912 = vld [vmem:[%s870 + $0x11] sm:$0xff]
        %v913 = vld [vmem:[%s870 + $0x21] sm:$0xff]
        %v914 = vld [vmem:[%s870 + $0x31] sm:$0xff]
        %v915 = vld [vmem:[%s870 + $0x41] sm:$0xff]
        %v916 = vld [vmem:[%s870 + $0x51] sm:$0xff]
        %v917 = vld [vmem:[%s870 + $0x61] sm:$0xff]
        %v918 = vld [vmem:[%s870 + $0x71] sm:$0xff]
        %v919 = vld [vmem:[%s870 + $0x2] sm:$0xff]
        %v920 = vld [vmem:[%s870 + $0x12] sm:$0xff]
        %v921 = vld [vmem:[%s870 + $0x22] sm:$0xff]
        %v922 = vld [vmem:[%s870 + $0x32] sm:$0xff]
        %v923 = vld [vmem:[%s870 + $0x42] sm:$0xff]
        %v924 = vld [vmem:[%s870 + $0x52] sm:$0xff]
        %v925 = vld [vmem:[%s870 + $0x62] sm:$0xff]
        %v926 = vld [vmem:[%s870 + $0x72] sm:$0xff]
        %s927 = scalar_lea.vmem [#allocation2], 32
        %v928 = vld [vmem:[%s927] sm:$0xff]
        %v929 = vld [vmem:[%s927 + $0x10] sm:$0xff]
        %v930 = vld [vmem:[%s927 + $0x20] sm:$0xff]
        %v931 = vld [vmem:[%s927 + $0x30] sm:$0xff]
        %v932 = vld [vmem:[%s927 + $0x40] sm:$0xff]
        %v933 = vld [vmem:[%s927 + $0x50] sm:$0xff]
        %v934 = vld [vmem:[%s927 + $0x60] sm:$0xff]
        %v935 = vld [vmem:[%s927 + $0x70] sm:$0xff]
        %v936 = vld [vmem:[%s927 + $0x1] sm:$0xff]
        %v937 = vld [vmem:[%s927 + $0x11] sm:$0xff]
        %v938 = vld [vmem:[%s927 + $0x21] sm:$0xff]
        %v939 = vld [vmem:[%s927 + $0x31] sm:$0xff]
        %v940 = vld [vmem:[%s927 + $0x41] sm:$0xff]
        %v941 = vld [vmem:[%s927 + $0x51] sm:$0xff]
        %v942 = vld [vmem:[%s927 + $0x61] sm:$0xff]
        %v943 = vld [vmem:[%s927 + $0x71] sm:$0xff]
        %v944 = vld [vmem:[%s927 + $0x2] sm:$0xff]
        %v945 = vld [vmem:[%s927 + $0x12] sm:$0xff]
        %v946 = vld [vmem:[%s927 + $0x22] sm:$0xff]
        %v947 = vld [vmem:[%s927 + $0x32] sm:$0xff]
        %v948 = vld [vmem:[%s927 + $0x42] sm:$0xff]
        %v949 = vld [vmem:[%s927 + $0x52] sm:$0xff]
        %v950 = vld [vmem:[%s927 + $0x62] sm:$0xff]
        %v951 = vld [vmem:[%s927 + $0x72] sm:$0xff]
        %960 = vrot.lane.b32.xlu0 %v887, 32
        %v961 = vpop.permute.xlu0 %960
        %962 = vrot.lane.b32.xlu0 %v888, 32
        %v963 = vpop.permute.xlu0 %962
        %964 = vrot.lane.b32.xlu0 %v889, 32
        %v965 = vpop.permute.xlu0 %964
        %966 = vrot.lane.b32.xlu0 %v890, 32
        %v967 = vpop.permute.xlu0 %966
        %968 = vrot.lane.b32.xlu0 %v891, 32
        %v969 = vpop.permute.xlu0 %968
        %970 = vrot.lane.b32.xlu0 %v892, 32
        %v971 = vpop.permute.xlu0 %970
        %972 = vrot.lane.b32.xlu0 %v893, 32
        %v973 = vpop.permute.xlu0 %972
        %974 = vrot.lane.b32.xlu0 %v894, 32
        %v975 = vpop.permute.xlu0 %974
        %992 = vrot.lane.b32.xlu0 %v895, 64
        %v993 = vpop.permute.xlu0 %992
        %994 = vrot.lane.b32.xlu0 %v896, 64
        %v995 = vpop.permute.xlu0 %994
        %996 = vrot.lane.b32.xlu0 %v897, 64
        %v997 = vpop.permute.xlu0 %996
        %998 = vrot.lane.b32.xlu0 %v898, 64
        %v999 = vpop.permute.xlu0 %998
        %1000 = vrot.lane.b32.xlu0 %v899, 64
        %v1001 = vpop.permute.xlu0 %1000
        %1002 = vrot.lane.b32.xlu0 %v900, 64
        %v1003 = vpop.permute.xlu0 %1002
        %1004 = vrot.lane.b32.xlu0 %v901, 64
        %v1005 = vpop.permute.xlu0 %1004
        %1006 = vrot.lane.b32.xlu0 %v902, 64
        %v1007 = vpop.permute.xlu0 %1006
        %1024 = vrot.lane.b32.xlu0 %v903, 96
        %v1025 = vpop.permute.xlu0 %1024
        %1026 = vrot.lane.b32.xlu0 %v904, 96
        %v1027 = vpop.permute.xlu0 %1026
        %1028 = vrot.lane.b32.xlu0 %v905, 96
        %v1029 = vpop.permute.xlu0 %1028
        %1030 = vrot.lane.b32.xlu0 %v906, 96
        %v1031 = vpop.permute.xlu0 %1030
        %1032 = vrot.lane.b32.xlu0 %v907, 96
        %v1033 = vpop.permute.xlu0 %1032
        %1034 = vrot.lane.b32.xlu0 %v908, 96
        %v1035 = vpop.permute.xlu0 %1034
        %1036 = vrot.lane.b32.xlu0 %v909, 96
        %v1037 = vpop.permute.xlu0 %1036
        %1038 = vrot.lane.b32.xlu0 %v910, 96
        %v1039 = vpop.permute.xlu0 %1038
        %1056 = vrot.lane.b32.xlu0 %v919, 32
        %v1057 = vpop.permute.xlu0 %1056
        %1058 = vrot.lane.b32.xlu0 %v920, 32
        %v1059 = vpop.permute.xlu0 %1058
        %1060 = vrot.lane.b32.xlu0 %v921, 32
        %v1061 = vpop.permute.xlu0 %1060
        %1062 = vrot.lane.b32.xlu0 %v922, 32
        %v1063 = vpop.permute.xlu0 %1062
        %1064 = vrot.lane.b32.xlu0 %v923, 32
        %v1065 = vpop.permute.xlu0 %1064
        %1066 = vrot.lane.b32.xlu0 %v924, 32
        %v1067 = vpop.permute.xlu0 %1066
        %1068 = vrot.lane.b32.xlu0 %v925, 32
        %v1069 = vpop.permute.xlu0 %1068
        %1070 = vrot.lane.b32.xlu0 %v926, 32
        %v1071 = vpop.permute.xlu0 %1070
        %1088 = vrot.lane.b32.xlu0 %v928, 64
        %v1089 = vpop.permute.xlu0 %1088
        %1090 = vrot.lane.b32.xlu0 %v929, 64
        %v1091 = vpop.permute.xlu0 %1090
        %1092 = vrot.lane.b32.xlu0 %v930, 64
        %v1093 = vpop.permute.xlu0 %1092
        %1094 = vrot.lane.b32.xlu0 %v931, 64
        %v1095 = vpop.permute.xlu0 %1094
        %1096 = vrot.lane.b32.xlu0 %v932, 64
        %v1097 = vpop.permute.xlu0 %1096
        %1098 = vrot.lane.b32.xlu0 %v933, 64
        %v1099 = vpop.permute.xlu0 %1098
        %1100 = vrot.lane.b32.xlu0 %v934, 64
        %v1101 = vpop.permute.xlu0 %1100
        %1102 = vrot.lane.b32.xlu0 %v935, 64
        %v1103 = vpop.permute.xlu0 %1102
        %1120 = vrot.lane.b32.xlu0 %v936, 96
        %v1121 = vpop.permute.xlu0 %1120
        %1122 = vrot.lane.b32.xlu0 %v937, 96
        %v1123 = vpop.permute.xlu0 %1122
        %1124 = vrot.lane.b32.xlu0 %v938, 96
        %v1125 = vpop.permute.xlu0 %1124
        %1126 = vrot.lane.b32.xlu0 %v939, 96
        %v1127 = vpop.permute.xlu0 %1126
        %1128 = vrot.lane.b32.xlu0 %v940, 96
        %v1129 = vpop.permute.xlu0 %1128
        %1130 = vrot.lane.b32.xlu0 %v941, 96
        %v1131 = vpop.permute.xlu0 %1130
        %1132 = vrot.lane.b32.xlu0 %v942, 96
        %v1133 = vpop.permute.xlu0 %1132
        %1134 = vrot.lane.b32.xlu0 %v943, 96
        %v1135 = vpop.permute.xlu0 %1134
        %v1144 = vsel %vm657, %v879, %v961
        %v1145 = vsel %vm657, %v880, %v963
        %v1146 = vsel %vm657, %v881, %v965
        %v1147 = vsel %vm657, %v882, %v967
        %v1148 = vsel %vm657, %v883, %v969
        %v1149 = vsel %vm657, %v884, %v971
        %v1150 = vsel %vm657, %v885, %v973
        %v1151 = vsel %vm657, %v886, %v975
        %vm1152 = vcmask 523264
        %v1153 = vsel %vm1152, %v1144, %v993
        %v1154 = vsel %vm1152, %v1145, %v995
        %v1155 = vsel %vm1152, %v1146, %v997
        %v1156 = vsel %vm1152, %v1147, %v999
        %v1157 = vsel %vm1152, %v1148, %v1001
        %v1158 = vsel %vm1152, %v1149, %v1003
        %v1159 = vsel %vm1152, %v1150, %v1005
        %v1160 = vsel %vm1152, %v1151, %v1007
        %vm1161 = vcmask 785408
        %v1162 = vsel %vm1161, %v1153, %v1025
        %v1163 = vsel %vm1161, %v1154, %v1027
        %v1164 = vsel %vm1161, %v1155, %v1029
        %v1165 = vsel %vm1161, %v1156, %v1031
        %v1166 = vsel %vm1161, %v1157, %v1033
        %v1167 = vsel %vm1161, %v1158, %v1035
        %v1168 = vsel %vm1161, %v1159, %v1037
        %v1169 = vsel %vm1161, %v1160, %v1039
        %v1170 = vsel %vm657, %v911, %v1057
        %v1171 = vsel %vm657, %v912, %v1059
        %v1172 = vsel %vm657, %v913, %v1061
        %v1173 = vsel %vm657, %v914, %v1063
        %v1174 = vsel %vm657, %v915, %v1065
        %v1175 = vsel %vm657, %v916, %v1067
        %v1176 = vsel %vm657, %v917, %v1069
        %v1177 = vsel %vm657, %v918, %v1071
        %v1178 = vsel %vm1152, %v1170, %v1089
        %v1179 = vsel %vm1152, %v1171, %v1091
        %v1180 = vsel %vm1152, %v1172, %v1093
        %v1181 = vsel %vm1152, %v1173, %v1095
        %v1182 = vsel %vm1152, %v1174, %v1097
        %v1183 = vsel %vm1152, %v1175, %v1099
        %v1184 = vsel %vm1152, %v1176, %v1101
        %v1185 = vsel %vm1152, %v1177, %v1103
        %v1186 = vsel %vm1161, %v1178, %v1121
        %v1187 = vsel %vm1161, %v1179, %v1123
        %v1188 = vsel %vm1161, %v1180, %v1125
        %v1189 = vsel %vm1161, %v1181, %v1127
        %v1190 = vsel %vm1161, %v1182, %v1129
        %v1191 = vsel %vm1161, %v1183, %v1131
        %v1192 = vsel %vm1161, %v1184, %v1133
        %v1193 = vsel %vm1161, %v1185, %v1135
        %v1194 = vld [vmem:[%s5] sm:$0xf]
        %v1195 = vld [vmem:[%s5 + $0x4] sm:$0xf]
        %v1196 = vld [vmem:[%s5 + $0x8] sm:$0xf]
        %v1197 = vld [vmem:[%s5 + $0xc] sm:$0xf]
        %v1198 = vld [vmem:[%s5 + $0x10] sm:$0xf]
        %v1199 = vld [vmem:[%s5 + $0x14] sm:$0xf]
        %v1200 = vld [vmem:[%s5 + $0x18] sm:$0xf]
        %v1201 = vld [vmem:[%s5 + $0x1c] sm:$0xf]
        %v1202 = vld [vmem:[%s5 + $0x20] sm:$0xf]
        %v1203 = vld [vmem:[%s5 + $0x24] sm:$0xf]
        %v1204 = vld [vmem:[%s5 + $0x28] sm:$0xf]
        %v1205 = vld [vmem:[%s5 + $0x2c] sm:$0xf]
        %v1206 = vld [vmem:[%s5 + $0x30] sm:$0xf]
        %v1207 = vld [vmem:[%s5 + $0x34] sm:$0xf]
        %v1208 = vld [vmem:[%s5 + $0x38] sm:$0xf]
        %v1209 = vld [vmem:[%s5 + $0x3c] sm:$0xf]
        %v1210 = vld [vmem:[%s5 + $0x40] sm:$0xf]
        %v1211 = vld [vmem:[%s5 + $0x44] sm:$0xf]
        %v1212 = vld [vmem:[%s5 + $0x48] sm:$0xf]
        %v1213 = vld [vmem:[%s5 + $0x4c] sm:$0xf]
        %v1214 = vld [vmem:[%s5 + $0x50] sm:$0xf]
        %v1215 = vld [vmem:[%s5 + $0x54] sm:$0xf]
        %v1216 = vld [vmem:[%s5 + $0x58] sm:$0xf]
        %v1217 = vld [vmem:[%s5 + $0x5c] sm:$0xf]
        %v1218 = vld [vmem:[%s5 + $0x60] sm:$0xf]
        %v1219 = vld [vmem:[%s5 + $0x64] sm:$0xf]
        %v1220 = vld [vmem:[%s5 + $0x68] sm:$0xf]
        %v1221 = vld [vmem:[%s5 + $0x6c] sm:$0xf]
        %v1222 = vld [vmem:[%s5 + $0x70] sm:$0xf]
        %v1223 = vld [vmem:[%s5 + $0x74] sm:$0xf]
        %v1224 = vld [vmem:[%s5 + $0x78] sm:$0xf]
        %v1225 = vld [vmem:[%s5 + $0x7c] sm:$0xf]
        %v1226 = vld [vmem:[%s5 + $0x80] sm:$0xf]
        %v1227 = vld [vmem:[%s5 + $0x84] sm:$0xf]
        %v1228 = vld [vmem:[%s5 + $0x88] sm:$0xf]
        %v1229 = vld [vmem:[%s5 + $0x8c] sm:$0xf]
        %v1230 = vpack.c.bf16 %v1163, %v1162
        %v1231 = vpack.c.bf16 %v1187, %v1186
        %v1232 = vpack.c.bf16 %v945, %v944
        %v1233 = vpack.c.bf16 %v1165, %v1164
        %v1234 = vpack.c.bf16 %v1189, %v1188
        %v1235 = vpack.c.bf16 %v947, %v946
        %v1236 = vpack.c.bf16 %v1167, %v1166
        %v1237 = vpack.c.bf16 %v1191, %v1190
        %v1238 = vpack.c.bf16 %v949, %v948
        %v1239 = vpack.c.bf16 %v1169, %v1168
        %v1240 = vpack.c.bf16 %v1193, %v1192
        %v1241 = vpack.c.bf16 %v951, %v950
        %v1278 = vunpack.c.l.b16 %v1194
        %v1279 = vunpack.c.l.b16 %v1195
        %v1280 = vunpack.c.l.b16 %v1196
        %v1281 = vunpack.c.l.b16 %v1197
        %v1282 = vunpack.c.l.b16 %v1198
        %v1283 = vunpack.c.l.b16 %v1199
        %v1284 = vunpack.c.l.b16 %v1200
        %v1285 = vunpack.c.l.b16 %v1201
        %v1286 = vunpack.c.l.b16 %v1202
        %v1287 = vunpack.c.l.b16 %v1203
        %v1288 = vunpack.c.l.b16 %v1204
        %v1289 = vunpack.c.l.b16 %v1205
        %v1290 = vunpack.c.l.b16 %v1206
        %v1291 = vunpack.c.l.b16 %v1207
        %v1292 = vunpack.c.l.b16 %v1208
        %v1293 = vunpack.c.l.b16 %v1209
        %v1294 = vunpack.c.l.b16 %v1210
        %v1295 = vunpack.c.l.b16 %v1211
        %v1296 = vunpack.c.l.b16 %v1212
        %v1297 = vunpack.c.l.b16 %v1213
        %v1298 = vunpack.c.l.b16 %v1214
        %v1299 = vunpack.c.l.b16 %v1215
        %v1300 = vunpack.c.l.b16 %v1216
        %v1301 = vunpack.c.l.b16 %v1217
        %v1302 = vunpack.c.l.b16 %v1218
        %v1303 = vunpack.c.l.b16 %v1219
        %v1304 = vunpack.c.l.b16 %v1220
        %v1305 = vunpack.c.l.b16 %v1221
        %v1306 = vunpack.c.l.b16 %v1222
        %v1307 = vunpack.c.l.b16 %v1223
        %v1308 = vunpack.c.l.b16 %v1224
        %v1309 = vunpack.c.l.b16 %v1225
        %v1310 = vunpack.c.l.b16 %v1226
        %v1311 = vunpack.c.l.b16 %v1227
        %v1312 = vunpack.c.l.b16 %v1228
        %v1313 = vunpack.c.l.b16 %v1229
        %v1314 = vpack.c.b16 %v1279, %v1278
        %v1315 = vpack.c.b16 %v1281, %v1280
        %v1316 = vpack.c.b16 %v1283, %v1282
        %v1317 = vpack.c.b16 %v1285, %v1284
        %v1318 = vpack.c.b16 %v1287, %v1286
        %v1319 = vpack.c.b16 %v1289, %v1288
        %v1320 = vpack.c.b16 %v1291, %v1290
        %v1321 = vpack.c.b16 %v1293, %v1292
        %v1322 = vpack.c.b16 %v1295, %v1294
        %v1323 = vpack.c.b16 %v1297, %v1296
        %v1324 = vpack.c.b16 %v1299, %v1298
        %v1325 = vpack.c.b16 %v1301, %v1300
        %v1326 = vpack.c.b16 %v1303, %v1302
        %v1327 = vpack.c.b16 %v1305, %v1304
        %v1328 = vpack.c.b16 %v1307, %v1306
        %v1329 = vpack.c.b16 %v1309, %v1308
        %v1330 = vpack.c.b16 %v1311, %v1310
        %v1331 = vpack.c.b16 %v1313, %v1312
        %v1351 = vsel %vm657, %v1232, 0
        %v1354 = vsel %vm657, %v1235, 0
        %v1357 = vsel %vm657, %v1238, 0
        %v1360 = vsel %vm657, %v1241, 0
        %1362 = vmatprep.subr.bf16.mxu0 0
        %1363 = vmatpush1.bf16.msra.mxu0 %v1321
        %1364 = vmatprep.subr.bf16.mxu0 0
        %1365 = vmatpush1.bf16.msra.mxu0 %v1320
        %1366 = vmatprep.subr.bf16.mxu0 0
        %1367 = vmatpush1.bf16.msra.mxu0 %v1319
        %1368 = vmatprep.subr.bf16.mxu0 0
        %1369 = vmatpush1.bf16.msra.mxu0 %v1318
        %1370 = vmatprep.subr.bf16.mxu0 0
        %1371 = vmatpush1.bf16.msra.mxu0 %v1317
        %1372 = vmatprep.subr.bf16.mxu0 0
        %1373 = vmatpush1.bf16.msra.mxu0 %v1316
        %1374 = vmatprep.subr.bf16.mxu0 0
        %1375 = vmatpush1.bf16.msra.mxu0 %v1315
        %1376 = vmatprep.subr.bf16.mxu0 0
        %1377 = vmatpush1.bf16.msra.mxu0 %v1314
        %1378 = vmatprep.subr.bf16.mxu0 0
        %1379 = vmatpush2.bf16.msra.mxu0 %v1329
        %1380 = vmatprep.subr.bf16.mxu0 0
        %1381 = vmatpush2.bf16.msra.mxu0 %v1328
        %1382 = vmatprep.subr.bf16.mxu0 0
        %1383 = vmatpush2.bf16.msra.mxu0 %v1327
        %1384 = vmatprep.subr.bf16.mxu0 0
        %1385 = vmatpush2.bf16.msra.mxu0 %v1326
        %1386 = vmatprep.subr.bf16.mxu0 0
        %1387 = vmatpush2.bf16.msra.mxu0 %v1325
        %1388 = vmatprep.subr.bf16.mxu0 0
        %1389 = vmatpush2.bf16.msra.mxu0 %v1324
        %1390 = vmatprep.subr.bf16.mxu0 0
        %1391 = vmatpush2.bf16.msra.mxu0 %v1323
        %1392 = vmatprep.subr.bf16.mxu0 0
        %1393 = vmatpush2.bf16.msra.mxu0 %v1322
        %1394 = vmatprep.mubr.bf16.mxu0 %v1231
        %1395 = vmatmul.mubr.bf16.gmra.mxu0 %v1230
        %v1396 = vpop.f32.mrf.mxu0
        %v1397 = vadd.f32 0.0, %v1396
        %v1398 = vpop.f32.mrf.mxu0
        %v1399 = vpop.f32.mrf.mxu0
        %v1400 = vadd.f32 0.0, %v1399
        %v1401 = vpop.f32.mrf.mxu0
        %1402 = vmatprep.mubr.bf16.mxu0 %v1234
        %1403 = vmatmul.mubr.bf16.gmra.mxu0 %v1233
        %v1404 = vpop.f32.mrf.mxu0
        %v1405 = vadd.f32 0.0, %v1404
        %v1406 = vpop.f32.mrf.mxu0
        %v1407 = vpop.f32.mrf.mxu0
        %v1408 = vadd.f32 0.0, %v1407
        %v1409 = vpop.f32.mrf.mxu0
        %1410 = vmatprep.mubr.bf16.mxu0 %v1237
        %1411 = vmatmul.mubr.bf16.gmra.mxu0 %v1236
        %v1412 = vpop.f32.mrf.mxu0
        %v1413 = vadd.f32 0.0, %v1412
        %v1414 = vpop.f32.mrf.mxu0
        %v1415 = vpop.f32.mrf.mxu0
        %v1416 = vadd.f32 0.0, %v1415
        %v1417 = vpop.f32.mrf.mxu0
        %1418 = vmatprep.mubr.bf16.mxu0 %v1240
        %1419 = vmatmul.mubr.bf16.gmra.mxu0 %v1239
        %v1420 = vpop.f32.mrf.mxu0
        %v1421 = vadd.f32 0.0, %v1420
        %v1422 = vpop.f32.mrf.mxu0
        %v1423 = vpop.f32.mrf.mxu0
        %v1424 = vadd.f32 0.0, %v1423
        %v1425 = vpop.f32.mrf.mxu0
        %1426 = vdwg.mxu0
        %1427 = vmatprep.subr.bf16.mxu0 0
        %1428 = vmatpush1.bf16.msra.mxu0 0
        %1429 = vmatprep.subr.bf16.mxu0 0
        %1430 = vmatpush1.bf16.msra.mxu0 0
        %1431 = vmatprep.subr.bf16.mxu0 0
        %1432 = vmatpush1.bf16.msra.mxu0 0
        %1433 = vmatprep.subr.bf16.mxu0 0
        %1434 = vmatpush1.bf16.msra.mxu0 0
        %1435 = vmatprep.subr.bf16.mxu0 0
        %1436 = vmatpush1.bf16.msra.mxu0 0
        %1437 = vmatprep.subr.bf16.mxu0 0
        %1438 = vmatpush1.bf16.msra.mxu0 0
        %1439 = vmatprep.subr.bf16.mxu0 0
        %1440 = vmatpush1.bf16.msra.mxu0 %v1331
        %1441 = vmatprep.subr.bf16.mxu0 0
        %1442 = vmatpush1.bf16.msra.mxu0 %v1330
        %1443 = vmatprep.subr.bf16.mxu0 0
        %1444 = vmatpush2.bf16.msra.mxu0 0
        %1445 = vmatprep.subr.bf16.mxu0 0
        %1446 = vmatpush2.bf16.msra.mxu0 0
        %1447 = vmatprep.subr.bf16.mxu0 0
        %1448 = vmatpush2.bf16.msra.mxu0 0
        %1449 = vmatprep.subr.bf16.mxu0 0
        %1450 = vmatpush2.bf16.msra.mxu0 0
        %1451 = vmatprep.subr.bf16.mxu0 0
        %1452 = vmatpush2.bf16.msra.mxu0 0
        %1453 = vmatprep.subr.bf16.mxu0 0
        %1454 = vmatpush2.bf16.msra.mxu0 0
        %1455 = vmatprep.subr.bf16.mxu0 0
        %1456 = vmatpush2.bf16.msra.mxu0 0
        %1457 = vmatprep.subr.bf16.mxu0 0
        %1458 = vmatpush2.bf16.msra.mxu0 0
        %1459 = vmatprep.mubr.bf16.mxu0 0
        %1460 = vmatmul.mubr.bf16.gmra.mxu0 %v1351
        %v1461 = vpop.f32.mrf.mxu0
        %v1462 = vadd.f32 %v1397, %v1461
        %v1463 = vpop.f32.mrf.mxu0
        %v1464 = vpop.f32.mrf.mxu0
        %v1465 = vadd.f32 %v1400, %v1464
        %v1466 = vpop.f32.mrf.mxu0
        %1467 = vmatprep.mubr.bf16.mxu0 0
        %1468 = vmatmul.mubr.bf16.gmra.mxu0 %v1354
        %v1469 = vpop.f32.mrf.mxu0
        %v1470 = vadd.f32 %v1405, %v1469
        %v1471 = vpop.f32.mrf.mxu0
        %v1472 = vpop.f32.mrf.mxu0
        %v1473 = vadd.f32 %v1408, %v1472
        %v1474 = vpop.f32.mrf.mxu0
        %1475 = vmatprep.mubr.bf16.mxu0 0
        %1476 = vmatmul.mubr.bf16.gmra.mxu0 %v1357
        %v1477 = vpop.f32.mrf.mxu0
        %v1478 = vadd.f32 %v1413, %v1477
        %v1479 = vpop.f32.mrf.mxu0
        %v1480 = vpop.f32.mrf.mxu0
        %v1481 = vadd.f32 %v1416, %v1480
        %v1482 = vpop.f32.mrf.mxu0
        %1483 = vmatprep.mubr.bf16.mxu0 0
        %1484 = vmatmul.mubr.bf16.gmra.mxu0 %v1360
        %v1485 = vpop.f32.mrf.mxu0
        %v1486 = vadd.f32 %v1421, %v1485
        %v1487 = vpop.f32.mrf.mxu0
        %v1488 = vpop.f32.mrf.mxu0
        %v1489 = vadd.f32 %v1424, %v1488
        %v1490 = vpop.f32.mrf.mxu0
        %1491 = vdwg.mxu0
        %v1492 = vmul.f32 %v1462, 0.058925565
        %v1493 = vmul.f32 %v1465, 0.058925565
        %v1494 = vmul.f32 %v1470, 0.058925565
        %v1495 = vmul.f32 %v1473, 0.058925565
        %v1496 = vmul.f32 %v1478, 0.058925565
        %v1497 = vmul.f32 %v1481, 0.058925565
        %v1498 = vmul.f32 %v1486, 0.058925565
        %v1499 = vmul.f32 %v1489, 0.058925565
        %vm1500 = vcmask 97280
        %v1501 = vsel %vm1500, %v1492, -inf
        %v1502 = vsel %vm1500, %v1493, -inf
        %v1503 = vsel %vm1500, %v1494, -inf
        %v1504 = vsel %vm1500, %v1495, -inf
        %v1505 = vsel %vm1500, %v1496, -inf
        %v1506 = vmax.f32 %v1501, %v1505
        %v1507 = vsel %vm1500, %v1497, -inf
        %v1508 = vmax.f32 %v1502, %v1507
        %v1509 = vsel %vm1500, %v1498, -inf
        %v1510 = vmax.f32 %v1503, %v1509
        %v1511 = vsel %vm1500, %v1499, -inf
        %v1512 = vmax.f32 %v1504, %v1511
        %v1513 = vmax.f32 %v1506, %v1508
        %v1514 = vmax.f32 %v1510, %v1512
        %v1515 = vmax.f32 %v1513, %v1514
        %1516 = vmax.xlane.f32.xlu0 %v1515
        %v1517 = vpop.xlane.xlu0 %1516
        %v1518 = vrot.slane %v1517, 4
        %v1519 = vmax.f32 %v1517, %v1518
        %v1520 = vrot.slane %v1519, 2
        %v1521 = vmax.f32 %v1519, %v1520
        %v1522 = vrot.slane %v1521, 1
        %v1523 = vmax.f32 %v1521, %v1522
        %s1524 = vtos %v1523
        %v1525 = vstv %s1524
        %v1526 = vsub.f32 %v1492, %v1525
        %v1527 = vsub.f32 %v1493, %v1525
        %v1528 = vsub.f32 %v1494, %v1525
        %v1529 = vsub.f32 %v1495, %v1525
        %v1530 = vsub.f32 %v1496, %v1525
        %v1531 = vsub.f32 %v1497, %v1525
        %v1532 = vsub.f32 %v1498, %v1525
        %v1533 = vsub.f32 %v1499, %v1525
        %v1534 = vmul.f32 %v1526, 1.442695
        %v1535 = vpow.pop %v1534
        %v1536 = vmul.f32 %v1527, 1.442695
        %v1537 = vpow.pop %v1536
        %v1538 = vmul.f32 %v1528, 1.442695
        %v1539 = vpow.pop %v1538
        %v1540 = vmul.f32 %v1529, 1.442695
        %v1541 = vpow.pop %v1540
        %v1542 = vmul.f32 %v1530, 1.442695
        %v1543 = vpow.pop %v1542
        %v1544 = vmul.f32 %v1531, 1.442695
        %v1545 = vpow.pop %v1544
        %v1546 = vmul.f32 %v1532, 1.442695
        %v1547 = vpow.pop %v1546
        %v1548 = vmul.f32 %v1533, 1.442695
        %v1549 = vpow.pop %v1548
        %v1550 = vsel %vm1500, %v1535, -inf
        %v1551 = vsel %vm1500, %v1537, -inf
        %v1552 = vsel %vm1500, %v1539, -inf
        %v1553 = vsel %vm1500, %v1541, -inf
        %v1554 = vsel %vm1500, %v1543, -inf
        %v1555 = vmax.f32 %v1550, %v1554
        %v1556 = vsel %vm1500, %v1545, -inf
        %v1557 = vmax.f32 %v1551, %v1556
        %v1558 = vsel %vm1500, %v1547, -inf
        %v1559 = vmax.f32 %v1552, %v1558
        %v1560 = vsel %vm1500, %v1549, -inf
        %v1561 = vmax.f32 %v1553, %v1560
        %v1562 = vmax.f32 %v1555, %v1557
        %v1563 = vmax.f32 %v1559, %v1561
        %v1564 = vmax.f32 %v1562, %v1563
        %v1565 = vrot.slane %v1564, 4
        %v1566 = vmax.f32 %v1564, %v1565
        %v1567 = vrot.slane %v1566, 2
        %v1568 = vmax.f32 %v1566, %v1567
        %v1569 = vrot.slane %v1568, 1
        %v1570 = vmax.f32 %v1568, %v1569
        %v1571 = vld [vmem:[%s6] sm:$0xff]
        %v1572 = vld [vmem:[%s6 + $0x8] sm:$0xf]
        %v1574 = vsel %vm1500, %v1535, 0
        %v1577 = vsel %vm1500, %v1537, 0
        %v1580 = vsel %vm1500, %v1539, 0
        %v1583 = vsel %vm1500, %v1541, 0
        %v1586 = vsel %vm1500, %v1543, 0
        %v1589 = vsel %vm1500, %v1545, 0
        %v1592 = vsel %vm1500, %v1547, 0
        %v1595 = vsel %vm1500, %v1549, 0
        %vm1597 = vcmask 1043456
        %v1599 = vsel %vm1597, %v1572, 0
        %1601 = vmatprep.subr.mxu0 0.0
        %1602 = vmatpush1.msra.mxu0 0.0
        %1603 = vmatprep.subr.mxu0 0.0
        %1604 = vmatpush1.msra.mxu0 0.0
        %1605 = vmatprep.subr.mxu0 0.0
        %1606 = vmatpush1.msra.mxu0 0.0
        %1607 = vmatprep.subr.mxu0 0.0
        %1608 = vmatpush1.msra.mxu0 0.0
        %1609 = vmatprep.subr.mxu0 0.0
        %1610 = vmatpush1.msra.mxu0 0.0
        %1611 = vmatprep.subr.mxu0 0.0
        %1612 = vmatpush1.msra.mxu0 0.0
        %1613 = vmatprep.subr.mxu0 0.0
        %1614 = vmatpush1.msra.mxu0 0.0
        %1615 = vmatprep.subr.mxu0 0.0
        %1616 = vmatpush1.msra.mxu0 0.0
        %1617 = vmatprep.subr.mxu0 0.0
        %1618 = vmatpush1.msra.mxu0 0.0
        %1619 = vmatprep.subr.mxu0 0.0
        %1620 = vmatpush1.msra.mxu0 0.0
        %1621 = vmatprep.subr.mxu0 0.0
        %1622 = vmatpush1.msra.mxu0 0.0
        %1623 = vmatprep.subr.mxu0 0.0
        %1624 = vmatpush1.msra.mxu0 0.0
        %1625 = vmatprep.subr.mxu0 0.0
        %1626 = vmatpush1.msra.mxu0 0.0
        %1627 = vmatprep.subr.mxu0 0.0
        %1628 = vmatpush1.msra.mxu0 0.0
        %1629 = vmatprep.subr.mxu0 0.0
        %1630 = vmatpush1.msra.mxu0 %v1599
        %1631 = vmatprep.subr.mxu0 0.0
        %1632 = vmatpush1.msra.mxu0 %v1571
        %1633 = vmatprep.subr.mxu0 0.0
        %1634 = vmatpush2.msra.mxu0 0.0
        %1635 = vmatprep.subr.mxu0 0.0
        %1636 = vmatpush2.msra.mxu0 0.0
        %1637 = vmatprep.subr.mxu0 0.0
        %1638 = vmatpush2.msra.mxu0 0.0
        %1639 = vmatprep.subr.mxu0 0.0
        %1640 = vmatpush2.msra.mxu0 0.0
        %1641 = vmatprep.subr.mxu0 0.0
        %1642 = vmatpush2.msra.mxu0 0.0
        %1643 = vmatprep.subr.mxu0 0.0
        %1644 = vmatpush2.msra.mxu0 0.0
        %1645 = vmatprep.subr.mxu0 0.0
        %1646 = vmatpush2.msra.mxu0 0.0
        %1647 = vmatprep.subr.mxu0 0.0
        %1648 = vmatpush2.msra.mxu0 0.0
        %1649 = vmatprep.subr.mxu0 0.0
        %1650 = vmatpush2.msra.mxu0 0.0
        %1651 = vmatprep.subr.mxu0 0.0
        %1652 = vmatpush2.msra.mxu0 0.0
        %1653 = vmatprep.subr.mxu0 0.0
        %1654 = vmatpush2.msra.mxu0 0.0
        %1655 = vmatprep.subr.mxu0 0.0
        %1656 = vmatpush2.msra.mxu0 0.0
        %1657 = vmatprep.subr.mxu0 0.0
        %1658 = vmatpush2.msra.mxu0 0.0
        %1659 = vmatprep.subr.mxu0 0.0
        %1660 = vmatpush2.msra.mxu0 0.0
        %1661 = vmatprep.subr.mxu0 0.0
        %1662 = vmatpush2.msra.mxu0 0.0
        %1663 = vmatprep.subr.mxu0 0.0
        %1664 = vmatpush2.msra.mxu0 0.0
        %1665 = vmatprep.mubr.f32.mxu0 0.0
        %1666 = vmatmul.mubr.f32.gmra.mxu0 %v1574
        %v1667 = vpop.f32.mrf.mxu0
        %v1668 = vadd.f32 0.0, %v1667
        %v1669 = vpop.f32.mrf.mxu0
        %1670 = vmatprep.mubr.f32.mxu0 0.0
        %1671 = vmatmul.mubr.f32.gmra.mxu0 %v1577
        %v1672 = vpop.f32.mrf.mxu0
        %v1673 = vadd.f32 0.0, %v1672
        %v1674 = vpop.f32.mrf.mxu0
        %1675 = vmatprep.mubr.f32.mxu0 0.0
        %1676 = vmatmul.mubr.f32.gmra.mxu0 %v1580
        %v1677 = vpop.f32.mrf.mxu0
        %v1678 = vadd.f32 0.0, %v1677
        %v1679 = vpop.f32.mrf.mxu0
        %1680 = vmatprep.mubr.f32.mxu0 0.0
        %1681 = vmatmul.mubr.f32.gmra.mxu0 %v1583
        %v1682 = vpop.f32.mrf.mxu0
        %v1683 = vadd.f32 0.0, %v1682
        %v1684 = vpop.f32.mrf.mxu0
        %1685 = vmatprep.mubr.f32.mxu0 0.0
        %1686 = vmatmul.mubr.f32.gmra.mxu0 %v1586
        %v1687 = vpop.f32.mrf.mxu0
        %v1688 = vadd.f32 0.0, %v1687
        %v1689 = vpop.f32.mrf.mxu0
        %1690 = vmatprep.mubr.f32.mxu0 0.0
        %1691 = vmatmul.mubr.f32.gmra.mxu0 %v1589
        %v1692 = vpop.f32.mrf.mxu0
        %v1693 = vadd.f32 0.0, %v1692
        %v1694 = vpop.f32.mrf.mxu0
        %1695 = vmatprep.mubr.f32.mxu0 0.0
        %1696 = vmatmul.mubr.f32.gmra.mxu0 %v1592
        %v1697 = vpop.f32.mrf.mxu0
        %v1698 = vadd.f32 0.0, %v1697
        %v1699 = vpop.f32.mrf.mxu0
        %1700 = vmatprep.mubr.f32.mxu0 0.0
        %1701 = vmatmul.mubr.f32.gmra.mxu0 %v1595
        %v1702 = vpop.f32.mrf.mxu0
        %v1703 = vadd.f32 0.0, %v1702
        %v1704 = vpop.f32.mrf.mxu0
        %1705 = vdwg.mxu0
        %v1706 = vmul.f32 %v1535, %v1535
        %v1707 = vmul.f32 %v1537, %v1537
        %v1708 = vmul.f32 %v1539, %v1539
        %v1709 = vmul.f32 %v1541, %v1541
        %v1710 = vmul.f32 %v1543, %v1543
        %v1711 = vmul.f32 %v1545, %v1545
        %v1712 = vmul.f32 %v1547, %v1547
        %v1713 = vmul.f32 %v1549, %v1549
        %v1714 = vmul.f32 %v1570, %v1668
        %v1715 = vmul.f32 %v1570, %v1673
        %v1716 = vmul.f32 %v1570, %v1678
        %v1717 = vmul.f32 %v1570, %v1683
        %v1718 = vmul.f32 %v1570, %v1688
        %v1719 = vmul.f32 %v1570, %v1693
        %v1720 = vmul.f32 %v1570, %v1698
        %v1721 = vmul.f32 %v1570, %v1703
        %v1722 = vrcp.pop %v1714
        %v1723 = vmul.f32 %v1706, %v1722
        %v1724 = vrcp.pop %v1715
        %v1725 = vmul.f32 %v1707, %v1724
        %v1726 = vrcp.pop %v1716
        %v1727 = vmul.f32 %v1708, %v1726
        %v1728 = vrcp.pop %v1717
        %v1729 = vmul.f32 %v1709, %v1728
        %v1730 = vrcp.pop %v1718
        %v1731 = vmul.f32 %v1710, %v1730
        %v1732 = vrcp.pop %v1719
        %v1733 = vmul.f32 %v1711, %v1732
        %v1734 = vrcp.pop %v1720
        %v1735 = vmul.f32 %v1712, %v1734
        %v1736 = vrcp.pop %v1721
        %v1737 = vmul.f32 %v1713, %v1736
        %s1738 = scalar_lea.vmem [#allocation3], 16
        %1739 = vst.msk [vmem:[%s1738 + $0x1] sm:$0xff] %vm1500, %v1723
        %1740 = vst.msk [vmem:[%s1738 + $0x11] sm:$0xff] %vm1500, %v1725
        %1741 = vst.msk [vmem:[%s1738 + $0x21] sm:$0xff] %vm1500, %v1727
        %1742 = vst.msk [vmem:[%s1738 + $0x31] sm:$0xff] %vm1500, %v1729
        %1743 = vst.msk [vmem:[%s1738 + $0x41] sm:$0xff] %vm1500, %v1731
        %1744 = vst.msk [vmem:[%s1738 + $0x51] sm:$0xff] %vm1500, %v1733
        %1745 = vst.msk [vmem:[%s1738 + $0x61] sm:$0xff] %vm1500, %v1735
        %1746 = vst.msk [vmem:[%s1738 + $0x71] sm:$0xff] %vm1500, %v1737
        %v1747 = vld [vmem:[#allocation3] sm:$0xff]
        %v1748 = vld [vmem:[#allocation3 + $0x10] sm:$0xff]
        %v1749 = vld [vmem:[#allocation3 + $0x20] sm:$0xff]
        %v1750 = vld [vmem:[#allocation3 + $0x30] sm:$0xff]
        %v1751 = vld [vmem:[#allocation3 + $0x40] sm:$0xff]
        %v1752 = vld [vmem:[#allocation3 + $0x50] sm:$0xff]
        %v1753 = vld [vmem:[#allocation3 + $0x60] sm:$0xff]
        %v1754 = vld [vmem:[#allocation3 + $0x70] sm:$0xff]
        %v1755 = vld [vmem:[#allocation3 + $0x1] sm:$0xff]
        %v1756 = vld [vmem:[#allocation3 + $0x11] sm:$0xff]
        %v1757 = vld [vmem:[#allocation3 + $0x21] sm:$0xff]
        %v1758 = vld [vmem:[#allocation3 + $0x31] sm:$0xff]
        %v1759 = vld [vmem:[#allocation3 + $0x41] sm:$0xff]
        %v1760 = vld [vmem:[#allocation3 + $0x51] sm:$0xff]
        %v1761 = vld [vmem:[#allocation3 + $0x61] sm:$0xff]
        %v1762 = vld [vmem:[#allocation3 + $0x71] sm:$0xff]
        %v1763 = vld [vmem:[#allocation3 + $0x2] sm:$0xff]
        %v1764 = vld [vmem:[#allocation3 + $0x12] sm:$0xff]
        %v1765 = vld [vmem:[#allocation3 + $0x22] sm:$0xff]
        %v1766 = vld [vmem:[#allocation3 + $0x32] sm:$0xff]
        %v1767 = vld [vmem:[#allocation3 + $0x42] sm:$0xff]
        %v1768 = vld [vmem:[#allocation3 + $0x52] sm:$0xff]
        %v1769 = vld [vmem:[#allocation3 + $0x62] sm:$0xff]
        %v1770 = vld [vmem:[#allocation3 + $0x72] sm:$0xff]
        %v1771 = vld [vmem:[%s1738] sm:$0xff]
        %v1772 = vld [vmem:[%s1738 + $0x10] sm:$0xff]
        %v1773 = vld [vmem:[%s1738 + $0x20] sm:$0xff]
        %v1774 = vld [vmem:[%s1738 + $0x30] sm:$0xff]
        %v1775 = vld [vmem:[%s1738 + $0x40] sm:$0xff]
        %v1776 = vld [vmem:[%s1738 + $0x50] sm:$0xff]
        %v1777 = vld [vmem:[%s1738 + $0x60] sm:$0xff]
        %v1778 = vld [vmem:[%s1738 + $0x70] sm:$0xff]
        %v1779 = vld [vmem:[%s1738 + $0x1] sm:$0xff]
        %v1780 = vld [vmem:[%s1738 + $0x11] sm:$0xff]
        %v1781 = vld [vmem:[%s1738 + $0x21] sm:$0xff]
        %v1782 = vld [vmem:[%s1738 + $0x31] sm:$0xff]
        %v1783 = vld [vmem:[%s1738 + $0x41] sm:$0xff]
        %v1784 = vld [vmem:[%s1738 + $0x51] sm:$0xff]
        %v1785 = vld [vmem:[%s1738 + $0x61] sm:$0xff]
        %v1786 = vld [vmem:[%s1738 + $0x71] sm:$0xff]
        %v1787 = vld [vmem:[%s1738 + $0x2] sm:$0xff]
        %v1788 = vld [vmem:[%s1738 + $0x12] sm:$0xff]
        %v1789 = vld [vmem:[%s1738 + $0x22] sm:$0xff]
        %v1790 = vld [vmem:[%s1738 + $0x32] sm:$0xff]
        %v1791 = vld [vmem:[%s1738 + $0x42] sm:$0xff]
        %v1792 = vld [vmem:[%s1738 + $0x52] sm:$0xff]
        %v1793 = vld [vmem:[%s1738 + $0x62] sm:$0xff]
        %v1794 = vld [vmem:[%s1738 + $0x72] sm:$0xff]
        %s1795 = scalar_lea.vmem [#allocation3], 32
        %v1796 = vld [vmem:[%s1795] sm:$0xff]
        %v1797 = vld [vmem:[%s1795 + $0x10] sm:$0xff]
        %v1798 = vld [vmem:[%s1795 + $0x20] sm:$0xff]
        %v1799 = vld [vmem:[%s1795 + $0x30] sm:$0xff]
        %v1800 = vld [vmem:[%s1795 + $0x40] sm:$0xff]
        %v1801 = vld [vmem:[%s1795 + $0x50] sm:$0xff]
        %v1802 = vld [vmem:[%s1795 + $0x60] sm:$0xff]
        %v1803 = vld [vmem:[%s1795 + $0x70] sm:$0xff]
        %v1804 = vld [vmem:[%s1795 + $0x1] sm:$0xff]
        %v1805 = vld [vmem:[%s1795 + $0x11] sm:$0xff]
        %v1806 = vld [vmem:[%s1795 + $0x21] sm:$0xff]
        %v1807 = vld [vmem:[%s1795 + $0x31] sm:$0xff]
        %v1808 = vld [vmem:[%s1795 + $0x41] sm:$0xff]
        %v1809 = vld [vmem:[%s1795 + $0x51] sm:$0xff]
        %v1810 = vld [vmem:[%s1795 + $0x61] sm:$0xff]
        %v1811 = vld [vmem:[%s1795 + $0x71] sm:$0xff]
        %v1812 = vld [vmem:[%s1795 + $0x2] sm:$0xff]
        %v1813 = vld [vmem:[%s1795 + $0x12] sm:$0xff]
        %v1814 = vld [vmem:[%s1795 + $0x22] sm:$0xff]
        %v1815 = vld [vmem:[%s1795 + $0x32] sm:$0xff]
        %v1816 = vld [vmem:[%s1795 + $0x42] sm:$0xff]
        %v1817 = vld [vmem:[%s1795 + $0x52] sm:$0xff]
        %v1818 = vld [vmem:[%s1795 + $0x62] sm:$0xff]
        %v1819 = vld [vmem:[%s1795 + $0x72] sm:$0xff]
        %1828 = vrot.lane.b32.xlu0 %v1755, 12
        %v1829 = vpop.permute.xlu0 %1828
        %1830 = vrot.lane.b32.xlu0 %v1756, 12
        %v1831 = vpop.permute.xlu0 %1830
        %1832 = vrot.lane.b32.xlu0 %v1757, 12
        %v1833 = vpop.permute.xlu0 %1832
        %1834 = vrot.lane.b32.xlu0 %v1758, 12
        %v1835 = vpop.permute.xlu0 %1834
        %1836 = vrot.lane.b32.xlu0 %v1759, 12
        %v1837 = vpop.permute.xlu0 %1836
        %1838 = vrot.lane.b32.xlu0 %v1760, 12
        %v1839 = vpop.permute.xlu0 %1838
        %1840 = vrot.lane.b32.xlu0 %v1761, 12
        %v1841 = vpop.permute.xlu0 %1840
        %1842 = vrot.lane.b32.xlu0 %v1762, 12
        %v1843 = vpop.permute.xlu0 %1842
        %1860 = vrot.lane.b32.xlu0 %v1763, 24
        %v1861 = vpop.permute.xlu0 %1860
        %1862 = vrot.lane.b32.xlu0 %v1764, 24
        %v1863 = vpop.permute.xlu0 %1862
        %1864 = vrot.lane.b32.xlu0 %v1765, 24
        %v1865 = vpop.permute.xlu0 %1864
        %1866 = vrot.lane.b32.xlu0 %v1766, 24
        %v1867 = vpop.permute.xlu0 %1866
        %1868 = vrot.lane.b32.xlu0 %v1767, 24
        %v1869 = vpop.permute.xlu0 %1868
        %1870 = vrot.lane.b32.xlu0 %v1768, 24
        %v1871 = vpop.permute.xlu0 %1870
        %1872 = vrot.lane.b32.xlu0 %v1769, 24
        %v1873 = vpop.permute.xlu0 %1872
        %1874 = vrot.lane.b32.xlu0 %v1770, 24
        %v1875 = vpop.permute.xlu0 %1874
        %1892 = vrot.lane.b32.xlu0 %v1771, 36
        %v1893 = vpop.permute.xlu0 %1892
        %1894 = vrot.lane.b32.xlu0 %v1772, 36
        %v1895 = vpop.permute.xlu0 %1894
        %1896 = vrot.lane.b32.xlu0 %v1773, 36
        %v1897 = vpop.permute.xlu0 %1896
        %1898 = vrot.lane.b32.xlu0 %v1774, 36
        %v1899 = vpop.permute.xlu0 %1898
        %1900 = vrot.lane.b32.xlu0 %v1775, 36
        %v1901 = vpop.permute.xlu0 %1900
        %1902 = vrot.lane.b32.xlu0 %v1776, 36
        %v1903 = vpop.permute.xlu0 %1902
        %1904 = vrot.lane.b32.xlu0 %v1777, 36
        %v1905 = vpop.permute.xlu0 %1904
        %1906 = vrot.lane.b32.xlu0 %v1778, 36
        %v1907 = vpop.permute.xlu0 %1906
        %1924 = vrot.lane.b32.xlu0 %v1779, 48
        %v1925 = vpop.permute.xlu0 %1924
        %1926 = vrot.lane.b32.xlu0 %v1780, 48
        %v1927 = vpop.permute.xlu0 %1926
        %1928 = vrot.lane.b32.xlu0 %v1781, 48
        %v1929 = vpop.permute.xlu0 %1928
        %1930 = vrot.lane.b32.xlu0 %v1782, 48
        %v1931 = vpop.permute.xlu0 %1930
        %1932 = vrot.lane.b32.xlu0 %v1783, 48
        %v1933 = vpop.permute.xlu0 %1932
        %1934 = vrot.lane.b32.xlu0 %v1784, 48
        %v1935 = vpop.permute.xlu0 %1934
        %1936 = vrot.lane.b32.xlu0 %v1785, 48
        %v1937 = vpop.permute.xlu0 %1936
        %1938 = vrot.lane.b32.xlu0 %v1786, 48
        %v1939 = vpop.permute.xlu0 %1938
        %1956 = vrot.lane.b32.xlu0 %v1787, 60
        %v1957 = vpop.permute.xlu0 %1956
        %1958 = vrot.lane.b32.xlu0 %v1788, 60
        %v1959 = vpop.permute.xlu0 %1958
        %1960 = vrot.lane.b32.xlu0 %v1789, 60
        %v1961 = vpop.permute.xlu0 %1960
        %1962 = vrot.lane.b32.xlu0 %v1790, 60
        %v1963 = vpop.permute.xlu0 %1962
        %1964 = vrot.lane.b32.xlu0 %v1791, 60
        %v1965 = vpop.permute.xlu0 %1964
        %1966 = vrot.lane.b32.xlu0 %v1792, 60
        %v1967 = vpop.permute.xlu0 %1966
        %1968 = vrot.lane.b32.xlu0 %v1793, 60
        %v1969 = vpop.permute.xlu0 %1968
        %1970 = vrot.lane.b32.xlu0 %v1794, 60
        %v1971 = vpop.permute.xlu0 %1970
        %1988 = vrot.lane.b32.xlu0 %v1796, 72
        %v1989 = vpop.permute.xlu0 %1988
        %1990 = vrot.lane.b32.xlu0 %v1797, 72
        %v1991 = vpop.permute.xlu0 %1990
        %1992 = vrot.lane.b32.xlu0 %v1798, 72
        %v1993 = vpop.permute.xlu0 %1992
        %1994 = vrot.lane.b32.xlu0 %v1799, 72
        %v1995 = vpop.permute.xlu0 %1994
        %1996 = vrot.lane.b32.xlu0 %v1800, 72
        %v1997 = vpop.permute.xlu0 %1996
        %1998 = vrot.lane.b32.xlu0 %v1801, 72
        %v1999 = vpop.permute.xlu0 %1998
        %2000 = vrot.lane.b32.xlu0 %v1802, 72
        %v2001 = vpop.permute.xlu0 %2000
        %2002 = vrot.lane.b32.xlu0 %v1803, 72
        %v2003 = vpop.permute.xlu0 %2002
        %2020 = vrot.lane.b32.xlu0 %v1804, 84
        %v2021 = vpop.permute.xlu0 %2020
        %2022 = vrot.lane.b32.xlu0 %v1805, 84
        %v2023 = vpop.permute.xlu0 %2022
        %2024 = vrot.lane.b32.xlu0 %v1806, 84
        %v2025 = vpop.permute.xlu0 %2024
        %2026 = vrot.lane.b32.xlu0 %v1807, 84
        %v2027 = vpop.permute.xlu0 %2026
        %2028 = vrot.lane.b32.xlu0 %v1808, 84
        %v2029 = vpop.permute.xlu0 %2028
        %2030 = vrot.lane.b32.xlu0 %v1809, 84
        %v2031 = vpop.permute.xlu0 %2030
        %2032 = vrot.lane.b32.xlu0 %v1810, 84
        %v2033 = vpop.permute.xlu0 %2032
        %2034 = vrot.lane.b32.xlu0 %v1811, 84
        %v2035 = vpop.permute.xlu0 %2034
        %2052 = vrot.lane.b32.xlu0 %v1812, 96
        %v2053 = vpop.permute.xlu0 %2052
        %2054 = vrot.lane.b32.xlu0 %v1813, 96
        %v2055 = vpop.permute.xlu0 %2054
        %2056 = vrot.lane.b32.xlu0 %v1814, 96
        %v2057 = vpop.permute.xlu0 %2056
        %2058 = vrot.lane.b32.xlu0 %v1815, 96
        %v2059 = vpop.permute.xlu0 %2058
        %2060 = vrot.lane.b32.xlu0 %v1816, 96
        %v2061 = vpop.permute.xlu0 %2060
        %2062 = vrot.lane.b32.xlu0 %v1817, 96
        %v2063 = vpop.permute.xlu0 %2062
        %2064 = vrot.lane.b32.xlu0 %v1818, 96
        %v2065 = vpop.permute.xlu0 %2064
        %2066 = vrot.lane.b32.xlu0 %v1819, 96
        %v2067 = vpop.permute.xlu0 %2066
        %v2076 = vsel %vm1500, %v1747, %v1829
        %v2077 = vsel %vm1500, %v1748, %v1831
        %v2078 = vsel %vm1500, %v1749, %v1833
        %v2079 = vsel %vm1500, %v1750, %v1835
        %v2080 = vsel %vm1500, %v1751, %v1837
        %v2081 = vsel %vm1500, %v1752, %v1839
        %v2082 = vsel %vm1500, %v1753, %v1841
        %v2083 = vsel %vm1500, %v1754, %v1843
        %vm2084 = vcmask 195584
        %v2085 = vsel %vm2084, %v2076, %v1861
        %v2086 = vsel %vm2084, %v2077, %v1863
        %v2087 = vsel %vm2084, %v2078, %v1865
        %v2088 = vsel %vm2084, %v2079, %v1867
        %v2089 = vsel %vm2084, %v2080, %v1869
        %v2090 = vsel %vm2084, %v2081, %v1871
        %v2091 = vsel %vm2084, %v2082, %v1873
        %v2092 = vsel %vm2084, %v2083, %v1875
        %vm2093 = vcmask 293888
        %v2094 = vsel %vm2093, %v2085, %v1893
        %v2095 = vsel %vm2093, %v2086, %v1895
        %v2096 = vsel %vm2093, %v2087, %v1897
        %v2097 = vsel %vm2093, %v2088, %v1899
        %v2098 = vsel %vm2093, %v2089, %v1901
        %v2099 = vsel %vm2093, %v2090, %v1903
        %v2100 = vsel %vm2093, %v2091, %v1905
        %v2101 = vsel %vm2093, %v2092, %v1907
        %vm2102 = vcmask 392192
        %v2103 = vsel %vm2102, %v2094, %v1925
        %v2104 = vsel %vm2102, %v2095, %v1927
        %v2105 = vsel %vm2102, %v2096, %v1929
        %v2106 = vsel %vm2102, %v2097, %v1931
        %v2107 = vsel %vm2102, %v2098, %v1933
        %v2108 = vsel %vm2102, %v2099, %v1935
        %v2109 = vsel %vm2102, %v2100, %v1937
        %v2110 = vsel %vm2102, %v2101, %v1939
        %vm2111 = vcmask 490496
        %v2112 = vsel %vm2111, %v2103, %v1957
        %v2113 = vsel %vm2111, %v2104, %v1959
        %v2114 = vsel %vm2111, %v2105, %v1961
        %v2115 = vsel %vm2111, %v2106, %v1963
        %v2116 = vsel %vm2111, %v2107, %v1965
        %v2117 = vsel %vm2111, %v2108, %v1967
        %v2118 = vsel %vm2111, %v2109, %v1969
        %v2119 = vsel %vm2111, %v2110, %v1971
        %vm2120 = vcmask 588800
        %v2121 = vsel %vm2120, %v2112, %v1989
        %v2122 = vsel %vm2120, %v2113, %v1991
        %v2123 = vsel %vm2120, %v2114, %v1993
        %v2124 = vsel %vm2120, %v2115, %v1995
        %v2125 = vsel %vm2120, %v2116, %v1997
        %v2126 = vsel %vm2120, %v2117, %v1999
        %v2127 = vsel %vm2120, %v2118, %v2001
        %v2128 = vsel %vm2120, %v2119, %v2003
        %vm2129 = vcmask 687104
        %v2130 = vsel %vm2129, %v2121, %v2021
        %v2131 = vsel %vm2129, %v2122, %v2023
        %v2132 = vsel %vm2129, %v2123, %v2025
        %v2133 = vsel %vm2129, %v2124, %v2027
        %v2134 = vsel %vm2129, %v2125, %v2029
        %v2135 = vsel %vm2129, %v2126, %v2031
        %v2136 = vsel %vm2129, %v2127, %v2033
        %v2137 = vsel %vm2129, %v2128, %v2035
        %v2138 = vsel %vm1161, %v2130, %v2053
        %v2139 = vsel %vm1161, %v2131, %v2055
        %v2140 = vsel %vm1161, %v2132, %v2057
        %v2141 = vsel %vm1161, %v2133, %v2059
        %v2142 = vsel %vm1161, %v2134, %v2061
        %v2143 = vsel %vm1161, %v2135, %v2063
        %v2144 = vsel %vm1161, %v2136, %v2065
        %v2145 = vsel %vm1161, %v2137, %v2067
        %v2146 = vld [vmem:[%s7] sm:$0xf]
        %v2147 = vld [vmem:[%s7 + $0x4] sm:$0xf]
        %v2148 = vld [vmem:[%s7 + $0x8] sm:$0xf]
        %v2149 = vld [vmem:[%s7 + $0xc] sm:$0xf]
        %v2150 = vld [vmem:[%s7 + $0x10] sm:$0xf]
        %v2151 = vld [vmem:[%s7 + $0x14] sm:$0xf]
        %v2152 = vld [vmem:[%s7 + $0x18] sm:$0xf]
        %v2153 = vld [vmem:[%s7 + $0x1c] sm:$0xf]
        %v2154 = vld [vmem:[%s7 + $0x20] sm:$0xf]
        %v2155 = vld [vmem:[%s7 + $0x24] sm:$0xf]
        %v2156 = vld [vmem:[%s7 + $0x28] sm:$0xf]
        %v2157 = vld [vmem:[%s7 + $0x2c] sm:$0xf]
        %v2158 = vld [vmem:[%s7 + $0x30] sm:$0xf]
        %v2159 = vld [vmem:[%s7 + $0x34] sm:$0x3]
        %v2160 = vpack.c.bf16 %v2139, %v2138
        %v2161 = vpack.c.bf16 %v2141, %v2140
        %v2162 = vpack.c.bf16 %v2143, %v2142
        %v2163 = vpack.c.bf16 %v2145, %v2144
        %v2164 = vld [vmem:[%s8] sm:$0x1]
        %v2166 = vlaneseq
        %v2167 = vshrl.u32 %v2166, 7
        %v2168 = vsub.s32 0, %v2167
        %v2169 = vrot.slane %v2164, %v2168
        %v2185 = vunpack.c.l.b16 %v2146
        %v2186 = vunpack.c.l.b16 %v2147
        %v2187 = vunpack.c.l.b16 %v2148
        %v2188 = vunpack.c.l.b16 %v2149
        %v2189 = vunpack.c.l.b16 %v2150
        %v2190 = vunpack.c.l.b16 %v2151
        %v2191 = vunpack.c.l.b16 %v2152
        %v2192 = vunpack.c.l.b16 %v2153
        %v2193 = vunpack.c.l.b16 %v2154
        %v2194 = vunpack.c.l.b16 %v2155
        %v2195 = vunpack.c.l.b16 %v2156
        %v2196 = vunpack.c.l.b16 %v2157
        %v2197 = vunpack.c.l.b16 %v2158
        %v2198 = vunpack.c.l.b16 %v2159
        %v2199 = vpack.c.b16 %v2186, %v2185
        %v2200 = vpack.c.b16 %v2188, %v2187
        %v2201 = vpack.c.b16 %v2190, %v2189
        %v2202 = vpack.c.b16 %v2192, %v2191
        %v2203 = vpack.c.b16 %v2194, %v2193
        %v2204 = vpack.c.b16 %v2196, %v2195
        %v2205 = vpack.c.b16 %v2198, %v2197
        %vm2212 = vcmask 883712
        %v2214 = vsel %vm2212, %v2160, 0
        %v2217 = vsel %vm2212, %v2161, 0
        %v2220 = vsel %vm2212, %v2162, 0
        %v2223 = vsel %vm2212, %v2163, 0
        %vm2225 = vcmask 1045504
        %v2227 = vsel %vm2225, %v2205, 0
        %2229 = vmatprep.subr.bf16.mxu0 0
        %2230 = vmatpush1.bf16.msra.mxu0 0
        %2231 = vmatprep.subr.bf16.mxu0 0
        %2232 = vmatpush1.bf16.msra.mxu0 %v2227
        %2233 = vmatprep.subr.bf16.mxu0 0
        %2234 = vmatpush1.bf16.msra.mxu0 %v2204
        %2235 = vmatprep.subr.bf16.mxu0 0
        %2236 = vmatpush1.bf16.msra.mxu0 %v2203
        %2237 = vmatprep.subr.bf16.mxu0 0
        %2238 = vmatpush1.bf16.msra.mxu0 %v2202
        %2239 = vmatprep.subr.bf16.mxu0 0
        %2240 = vmatpush1.bf16.msra.mxu0 %v2201
        %2241 = vmatprep.subr.bf16.mxu0 0
        %2242 = vmatpush1.bf16.msra.mxu0 %v2200
        %2243 = vmatprep.subr.bf16.mxu0 0
        %2244 = vmatpush1.bf16.msra.mxu0 %v2199
        %2245 = vmatprep.subr.bf16.mxu0 0
        %2246 = vmatpush2.bf16.msra.mxu0 0
        %2247 = vmatprep.subr.bf16.mxu0 0
        %2248 = vmatpush2.bf16.msra.mxu0 0
        %2249 = vmatprep.subr.bf16.mxu0 0
        %2250 = vmatpush2.bf16.msra.mxu0 0
        %2251 = vmatprep.subr.bf16.mxu0 0
        %2252 = vmatpush2.bf16.msra.mxu0 0
        %2253 = vmatprep.subr.bf16.mxu0 0
        %2254 = vmatpush2.bf16.msra.mxu0 0
        %2255 = vmatprep.subr.bf16.mxu0 0
        %2256 = vmatpush2.bf16.msra.mxu0 0
        %2257 = vmatprep.subr.bf16.mxu0 0
        %2258 = vmatpush2.bf16.msra.mxu0 0
        %2259 = vmatprep.subr.bf16.mxu0 0
        %2260 = vmatpush2.bf16.msra.mxu0 0
        %2261 = vmatprep.mubr.bf16.mxu0 0
        %2262 = vmatmul.mubr.bf16.gmra.mxu0 %v2214
        %v2263 = vpop.f32.mrf.mxu0
        %v2264 = vadd.f32 %v2169, %v2263
        %v2265 = vpop.f32.mrf.mxu0
        %v2266 = vpop.f32.mrf.mxu0
        %v2267 = vadd.f32 %v2169, %v2266
        %v2268 = vpop.f32.mrf.mxu0
        %2269 = vmatprep.mubr.bf16.mxu0 0
        %2270 = vmatmul.mubr.bf16.gmra.mxu0 %v2217
        %v2271 = vpop.f32.mrf.mxu0
        %v2272 = vadd.f32 %v2169, %v2271
        %v2273 = vpop.f32.mrf.mxu0
        %v2274 = vpop.f32.mrf.mxu0
        %v2275 = vadd.f32 %v2169, %v2274
        %v2276 = vpop.f32.mrf.mxu0
        %2277 = vmatprep.mubr.bf16.mxu0 0
        %2278 = vmatmul.mubr.bf16.gmra.mxu0 %v2220
        %v2279 = vpop.f32.mrf.mxu0
        %v2280 = vadd.f32 %v2169, %v2279
        %v2281 = vpop.f32.mrf.mxu0
        %v2282 = vpop.f32.mrf.mxu0
        %v2283 = vadd.f32 %v2169, %v2282
        %v2284 = vpop.f32.mrf.mxu0
        %2285 = vmatprep.mubr.bf16.mxu0 0
        %2286 = vmatmul.mubr.bf16.gmra.mxu0 %v2223
        %v2287 = vpop.f32.mrf.mxu0
        %v2288 = vadd.f32 %v2169, %v2287
        %v2289 = vpop.f32.mrf.mxu0
        %v2290 = vpop.f32.mrf.mxu0
        %v2291 = vadd.f32 %v2169, %v2290
        %v2292 = vpop.f32.mrf.mxu0
        %2293 = vdwg.mxu0
        %v2294 = vadd.f32 %v622, %v2264
        %v2295 = vadd.f32 %v623, %v2267
        %v2296 = vadd.f32 %v624, %v2272
        %v2297 = vadd.f32 %v625, %v2275
        %v2298 = vadd.f32 %v626, %v2280
        %v2299 = vadd.f32 %v627, %v2283
        %v2300 = vadd.f32 %v628, %v2288
        %v2301 = vadd.f32 %v629, %v2291
        %v2302 = vld [vmem:[%s9] sm:$0x1]
        %v2303 = vld [vmem:[%s10] sm:$0x1]
        %v2304 = vsel %vm657, %v2294, 0.0
        %2305 = vadd.xlane.f32.xlu0 %v2304
        %v2306 = vpop.xlane.xlu0 %2305
        %v2307 = vsel %vm657, %v2295, 0.0
        %2308 = vadd.xlane.f32.xlu0 %v2307
        %v2309 = vpop.xlane.xlu0 %2308
        %v2310 = vsel %vm657, %v2296, 0.0
        %2311 = vadd.xlane.f32.xlu0 %v2310
        %v2312 = vpop.xlane.xlu0 %2311
        %v2313 = vsel %vm657, %v2297, 0.0
        %2314 = vadd.xlane.f32.xlu0 %v2313
        %v2315 = vpop.xlane.xlu0 %2314
        %v2316 = vsel %vm657, %v2298, 0.0
        %2317 = vadd.xlane.f32.xlu0 %v2316
        %v2318 = vpop.xlane.xlu0 %2317
        %v2319 = vsel %vm657, %v2299, 0.0
        %2320 = vadd.xlane.f32.xlu0 %v2319
        %v2321 = vpop.xlane.xlu0 %2320
        %v2322 = vsel %vm657, %v2300, 0.0
        %2323 = vadd.xlane.f32.xlu0 %v2322
        %v2324 = vpop.xlane.xlu0 %2323
        %v2325 = vsel %vm657, %v2301, 0.0
        %2326 = vadd.xlane.f32.xlu0 %v2325
        %v2327 = vpop.xlane.xlu0 %2326
        %v2328 = vmul.f32 %v2306, %v761
        %v2329 = vmul.f32 %v2309, %v761
        %v2330 = vmul.f32 %v2312, %v761
        %v2331 = vmul.f32 %v2315, %v761
        %v2332 = vmul.f32 %v2318, %v761
        %v2333 = vmul.f32 %v2321, %v761
        %v2334 = vmul.f32 %v2324, %v761
        %v2335 = vmul.f32 %v2327, %v761
        %v2336 = vsub.f32 %v2294, %v2328
        %v2337 = vsub.f32 %v2295, %v2329
        %v2338 = vsub.f32 %v2296, %v2330
        %v2339 = vsub.f32 %v2297, %v2331
        %v2340 = vsub.f32 %v2298, %v2332
        %v2341 = vsub.f32 %v2299, %v2333
        %v2342 = vsub.f32 %v2300, %v2334
        %v2343 = vsub.f32 %v2301, %v2335
        %v2344 = vmul.f32 %v2336, %v2336
        %v2345 = vmul.f32 %v2337, %v2337
        %v2346 = vmul.f32 %v2338, %v2338
        %v2347 = vmul.f32 %v2339, %v2339
        %v2348 = vmul.f32 %v2340, %v2340
        %v2349 = vmul.f32 %v2341, %v2341
        %v2350 = vmul.f32 %v2342, %v2342
        %v2351 = vmul.f32 %v2343, %v2343
        %v2352 = vsel %vm657, %v2344, 0.0
        %2353 = vadd.xlane.f32.xlu0 %v2352
        %v2354 = vpop.xlane.xlu0 %2353
        %v2355 = vsel %vm657, %v2345, 0.0
        %2356 = vadd.xlane.f32.xlu0 %v2355
        %v2357 = vpop.xlane.xlu0 %2356
        %v2358 = vsel %vm657, %v2346, 0.0
        %2359 = vadd.xlane.f32.xlu0 %v2358
        %v2360 = vpop.xlane.xlu0 %2359
        %v2361 = vsel %vm657, %v2347, 0.0
        %2362 = vadd.xlane.f32.xlu0 %v2361
        %v2363 = vpop.xlane.xlu0 %2362
        %v2364 = vsel %vm657, %v2348, 0.0
        %2365 = vadd.xlane.f32.xlu0 %v2364
        %v2366 = vpop.xlane.xlu0 %2365
        %v2367 = vsel %vm657, %v2349, 0.0
        %2368 = vadd.xlane.f32.xlu0 %v2367
        %v2369 = vpop.xlane.xlu0 %2368
        %v2370 = vsel %vm657, %v2350, 0.0
        %2371 = vadd.xlane.f32.xlu0 %v2370
        %v2372 = vpop.xlane.xlu0 %2371
        %v2373 = vsel %vm657, %v2351, 0.0
        %2374 = vadd.xlane.f32.xlu0 %v2373
        %v2375 = vpop.xlane.xlu0 %2374
        %v2376 = vmul.f32 %v2354, %v761
        %v2377 = vmul.f32 %v2357, %v761
        %v2378 = vmul.f32 %v2360, %v761
        %v2379 = vmul.f32 %v2363, %v761
        %v2380 = vmul.f32 %v2366, %v761
        %v2381 = vmul.f32 %v2369, %v761
        %v2382 = vmul.f32 %v2372, %v761
        %v2383 = vmul.f32 %v2375, %v761
        %v2384 = vadd.f32 %v2376, 1e-05
        %v2385 = vadd.f32 %v2377, 1e-05
        %v2386 = vadd.f32 %v2378, 1e-05
        %v2387 = vadd.f32 %v2379, 1e-05
        %v2388 = vadd.f32 %v2380, 1e-05
        %v2389 = vadd.f32 %v2381, 1e-05
        %v2390 = vadd.f32 %v2382, 1e-05
        %v2391 = vadd.f32 %v2383, 1e-05
        %v2392 = vrsqrt.pop %v2384
        %v2393 = vrsqrt.pop %v2385
        %v2394 = vrsqrt.pop %v2386
        %v2395 = vrsqrt.pop %v2387
        %v2396 = vrsqrt.pop %v2388
        %v2397 = vrsqrt.pop %v2389
        %v2398 = vrsqrt.pop %v2390
        %v2399 = vrsqrt.pop %v2391
        %v2400 = vmul.f32 %v2336, %v2392
        %v2401 = vmul.f32 %v2337, %v2393
        %v2402 = vmul.f32 %v2338, %v2394
        %v2403 = vmul.f32 %v2339, %v2395
        %v2404 = vmul.f32 %v2340, %v2396
        %v2405 = vmul.f32 %v2341, %v2397
        %v2406 = vmul.f32 %v2342, %v2398
        %v2407 = vmul.f32 %v2343, %v2399
        %v2409 = vlaneseq
        %v2410 = vshrl.u32 %v2409, 7
        %v2411 = vsub.s32 0, %v2410
        %v2412 = vrot.slane %v2302, %v2411
        %v2414 = vmul.f32 %v2400, %v2412
        %v2415 = vmul.f32 %v2401, %v2412
        %v2416 = vmul.f32 %v2402, %v2412
        %v2417 = vmul.f32 %v2403, %v2412
        %v2418 = vmul.f32 %v2404, %v2412
        %v2419 = vmul.f32 %v2405, %v2412
        %v2420 = vmul.f32 %v2406, %v2412
        %v2421 = vmul.f32 %v2407, %v2412
        %v2423 = vlaneseq
        %v2424 = vshrl.u32 %v2423, 7
        %v2425 = vsub.s32 0, %v2424
        %v2426 = vrot.slane %v2303, %v2425
        %v2428 = vadd.f32 %v2414, %v2426
        %v2429 = vadd.f32 %v2415, %v2426
        %v2430 = vadd.f32 %v2416, %v2426
        %v2431 = vadd.f32 %v2417, %v2426
        %v2432 = vadd.f32 %v2418, %v2426
        %v2433 = vadd.f32 %v2419, %v2426
        %v2434 = vadd.f32 %v2420, %v2426
        %v2435 = vadd.f32 %v2421, %v2426
        %s2436 = scalar_lea.vmem [#allocation4], 16
        %2437 = vst.msk [vmem:[%s2436 + $0x1] sm:$0xff] %vm657, %v2428
        %2438 = vst.msk [vmem:[%s2436 + $0x11] sm:$0xff] %vm657, %v2429
        %2439 = vst.msk [vmem:[%s2436 + $0x21] sm:$0xff] %vm657, %v2430
        %2440 = vst.msk [vmem:[%s2436 + $0x31] sm:$0xff] %vm657, %v2431
        %2441 = vst.msk [vmem:[%s2436 + $0x41] sm:$0xff] %vm657, %v2432
        %2442 = vst.msk [vmem:[%s2436 + $0x51] sm:$0xff] %vm657, %v2433
        %2443 = vst.msk [vmem:[%s2436 + $0x61] sm:$0xff] %vm657, %v2434
        %2444 = vst.msk [vmem:[%s2436 + $0x71] sm:$0xff] %vm657, %v2435
        %v2445 = vld [vmem:[#allocation4] sm:$0xff]
        %v2446 = vld [vmem:[#allocation4 + $0x10] sm:$0xff]
        %v2447 = vld [vmem:[#allocation4 + $0x20] sm:$0xff]
        %v2448 = vld [vmem:[#allocation4 + $0x30] sm:$0xff]
        %v2449 = vld [vmem:[#allocation4 + $0x40] sm:$0xff]
        %v2450 = vld [vmem:[#allocation4 + $0x50] sm:$0xff]
        %v2451 = vld [vmem:[#allocation4 + $0x60] sm:$0xff]
        %v2452 = vld [vmem:[#allocation4 + $0x70] sm:$0xff]
        %v2453 = vld [vmem:[#allocation4 + $0x1] sm:$0xff]
        %v2454 = vld [vmem:[#allocation4 + $0x11] sm:$0xff]
        %v2455 = vld [vmem:[#allocation4 + $0x21] sm:$0xff]
        %v2456 = vld [vmem:[#allocation4 + $0x31] sm:$0xff]
        %v2457 = vld [vmem:[#allocation4 + $0x41] sm:$0xff]
        %v2458 = vld [vmem:[#allocation4 + $0x51] sm:$0xff]
        %v2459 = vld [vmem:[#allocation4 + $0x61] sm:$0xff]
        %v2460 = vld [vmem:[#allocation4 + $0x71] sm:$0xff]
        %v2461 = vld [vmem:[#allocation4 + $0x2] sm:$0xff]
        %v2462 = vld [vmem:[#allocation4 + $0x12] sm:$0xff]
        %v2463 = vld [vmem:[#allocation4 + $0x22] sm:$0xff]
        %v2464 = vld [vmem:[#allocation4 + $0x32] sm:$0xff]
        %v2465 = vld [vmem:[#allocation4 + $0x42] sm:$0xff]
        %v2466 = vld [vmem:[#allocation4 + $0x52] sm:$0xff]
        %v2467 = vld [vmem:[#allocation4 + $0x62] sm:$0xff]
        %v2468 = vld [vmem:[#allocation4 + $0x72] sm:$0xff]
        %v2469 = vld [vmem:[%s2436] sm:$0xff]
        %v2470 = vld [vmem:[%s2436 + $0x10] sm:$0xff]
        %v2471 = vld [vmem:[%s2436 + $0x20] sm:$0xff]
        %v2472 = vld [vmem:[%s2436 + $0x30] sm:$0xff]
        %v2473 = vld [vmem:[%s2436 + $0x40] sm:$0xff]
        %v2474 = vld [vmem:[%s2436 + $0x50] sm:$0xff]
        %v2475 = vld [vmem:[%s2436 + $0x60] sm:$0xff]
        %v2476 = vld [vmem:[%s2436 + $0x70] sm:$0xff]
        %v2477 = vld [vmem:[%s2436 + $0x1] sm:$0xff]
        %v2478 = vld [vmem:[%s2436 + $0x11] sm:$0xff]
        %v2479 = vld [vmem:[%s2436 + $0x21] sm:$0xff]
        %v2480 = vld [vmem:[%s2436 + $0x31] sm:$0xff]
        %v2481 = vld [vmem:[%s2436 + $0x41] sm:$0xff]
        %v2482 = vld [vmem:[%s2436 + $0x51] sm:$0xff]
        %v2483 = vld [vmem:[%s2436 + $0x61] sm:$0xff]
        %v2484 = vld [vmem:[%s2436 + $0x71] sm:$0xff]
        %v2485 = vld [vmem:[%s2436 + $0x2] sm:$0xff]
        %v2486 = vld [vmem:[%s2436 + $0x12] sm:$0xff]
        %v2487 = vld [vmem:[%s2436 + $0x22] sm:$0xff]
        %v2488 = vld [vmem:[%s2436 + $0x32] sm:$0xff]
        %v2489 = vld [vmem:[%s2436 + $0x42] sm:$0xff]
        %v2490 = vld [vmem:[%s2436 + $0x52] sm:$0xff]
        %v2491 = vld [vmem:[%s2436 + $0x62] sm:$0xff]
        %v2492 = vld [vmem:[%s2436 + $0x72] sm:$0xff]
        %s2493 = scalar_lea.vmem [#allocation4], 32
        %v2494 = vld [vmem:[%s2493] sm:$0xff]
        %v2495 = vld [vmem:[%s2493 + $0x10] sm:$0xff]
        %v2496 = vld [vmem:[%s2493 + $0x20] sm:$0xff]
        %v2497 = vld [vmem:[%s2493 + $0x30] sm:$0xff]
        %v2498 = vld [vmem:[%s2493 + $0x40] sm:$0xff]
        %v2499 = vld [vmem:[%s2493 + $0x50] sm:$0xff]
        %v2500 = vld [vmem:[%s2493 + $0x60] sm:$0xff]
        %v2501 = vld [vmem:[%s2493 + $0x70] sm:$0xff]
        %v2502 = vld [vmem:[%s2493 + $0x1] sm:$0xff]
        %v2503 = vld [vmem:[%s2493 + $0x11] sm:$0xff]
        %v2504 = vld [vmem:[%s2493 + $0x21] sm:$0xff]
        %v2505 = vld [vmem:[%s2493 + $0x31] sm:$0xff]
        %v2506 = vld [vmem:[%s2493 + $0x41] sm:$0xff]
        %v2507 = vld [vmem:[%s2493 + $0x51] sm:$0xff]
        %v2508 = vld [vmem:[%s2493 + $0x61] sm:$0xff]
        %v2509 = vld [vmem:[%s2493 + $0x71] sm:$0xff]
        %v2510 = vld [vmem:[%s2493 + $0x2] sm:$0xff]
        %v2511 = vld [vmem:[%s2493 + $0x12] sm:$0xff]
        %v2512 = vld [vmem:[%s2493 + $0x22] sm:$0xff]
        %v2513 = vld [vmem:[%s2493 + $0x32] sm:$0xff]
        %v2514 = vld [vmem:[%s2493 + $0x42] sm:$0xff]
        %v2515 = vld [vmem:[%s2493 + $0x52] sm:$0xff]
        %v2516 = vld [vmem:[%s2493 + $0x62] sm:$0xff]
        %v2517 = vld [vmem:[%s2493 + $0x72] sm:$0xff]
        %2526 = vrot.lane.b32.xlu0 %v2453, 32
        %v2527 = vpop.permute.xlu0 %2526
        %2528 = vrot.lane.b32.xlu0 %v2454, 32
        %v2529 = vpop.permute.xlu0 %2528
        %2530 = vrot.lane.b32.xlu0 %v2455, 32
        %v2531 = vpop.permute.xlu0 %2530
        %2532 = vrot.lane.b32.xlu0 %v2456, 32
        %v2533 = vpop.permute.xlu0 %2532
        %2534 = vrot.lane.b32.xlu0 %v2457, 32
        %v2535 = vpop.permute.xlu0 %2534
        %2536 = vrot.lane.b32.xlu0 %v2458, 32
        %v2537 = vpop.permute.xlu0 %2536
        %2538 = vrot.lane.b32.xlu0 %v2459, 32
        %v2539 = vpop.permute.xlu0 %2538
        %2540 = vrot.lane.b32.xlu0 %v2460, 32
        %v2541 = vpop.permute.xlu0 %2540
        %2558 = vrot.lane.b32.xlu0 %v2461, 64
        %v2559 = vpop.permute.xlu0 %2558
        %2560 = vrot.lane.b32.xlu0 %v2462, 64
        %v2561 = vpop.permute.xlu0 %2560
        %2562 = vrot.lane.b32.xlu0 %v2463, 64
        %v2563 = vpop.permute.xlu0 %2562
        %2564 = vrot.lane.b32.xlu0 %v2464, 64
        %v2565 = vpop.permute.xlu0 %2564
        %2566 = vrot.lane.b32.xlu0 %v2465, 64
        %v2567 = vpop.permute.xlu0 %2566
        %2568 = vrot.lane.b32.xlu0 %v2466, 64
        %v2569 = vpop.permute.xlu0 %2568
        %2570 = vrot.lane.b32.xlu0 %v2467, 64
        %v2571 = vpop.permute.xlu0 %2570
        %2572 = vrot.lane.b32.xlu0 %v2468, 64
        %v2573 = vpop.permute.xlu0 %2572
        %2590 = vrot.lane.b32.xlu0 %v2469, 96
        %v2591 = vpop.permute.xlu0 %2590
        %2592 = vrot.lane.b32.xlu0 %v2470, 96
        %v2593 = vpop.permute.xlu0 %2592
        %2594 = vrot.lane.b32.xlu0 %v2471, 96
        %v2595 = vpop.permute.xlu0 %2594
        %2596 = vrot.lane.b32.xlu0 %v2472, 96
        %v2597 = vpop.permute.xlu0 %2596
        %2598 = vrot.lane.b32.xlu0 %v2473, 96
        %v2599 = vpop.permute.xlu0 %2598
        %2600 = vrot.lane.b32.xlu0 %v2474, 96
        %v2601 = vpop.permute.xlu0 %2600
        %2602 = vrot.lane.b32.xlu0 %v2475, 96
        %v2603 = vpop.permute.xlu0 %2602
        %2604 = vrot.lane.b32.xlu0 %v2476, 96
        %v2605 = vpop.permute.xlu0 %2604
        %2622 = vrot.lane.b32.xlu0 %v2485, 32
        %v2623 = vpop.permute.xlu0 %2622
        %2624 = vrot.lane.b32.xlu0 %v2486, 32
        %v2625 = vpop.permute.xlu0 %2624
        %2626 = vrot.lane.b32.xlu0 %v2487, 32
        %v2627 = vpop.permute.xlu0 %2626
        %2628 = vrot.lane.b32.xlu0 %v2488, 32
        %v2629 = vpop.permute.xlu0 %2628
        %2630 = vrot.lane.b32.xlu0 %v2489, 32
        %v2631 = vpop.permute.xlu0 %2630
        %2632 = vrot.lane.b32.xlu0 %v2490, 32
        %v2633 = vpop.permute.xlu0 %2632
        %2634 = vrot.lane.b32.xlu0 %v2491, 32
        %v2635 = vpop.permute.xlu0 %2634
        %2636 = vrot.lane.b32.xlu0 %v2492, 32
        %v2637 = vpop.permute.xlu0 %2636
        %2654 = vrot.lane.b32.xlu0 %v2494, 64
        %v2655 = vpop.permute.xlu0 %2654
        %2656 = vrot.lane.b32.xlu0 %v2495, 64
        %v2657 = vpop.permute.xlu0 %2656
        %2658 = vrot.lane.b32.xlu0 %v2496, 64
        %v2659 = vpop.permute.xlu0 %2658
        %2660 = vrot.lane.b32.xlu0 %v2497, 64
        %v2661 = vpop.permute.xlu0 %2660
        %2662 = vrot.lane.b32.xlu0 %v2498, 64
        %v2663 = vpop.permute.xlu0 %2662
        %2664 = vrot.lane.b32.xlu0 %v2499, 64
        %v2665 = vpop.permute.xlu0 %2664
        %2666 = vrot.lane.b32.xlu0 %v2500, 64
        %v2667 = vpop.permute.xlu0 %2666
        %2668 = vrot.lane.b32.xlu0 %v2501, 64
        %v2669 = vpop.permute.xlu0 %2668
        %2686 = vrot.lane.b32.xlu0 %v2502, 96
        %v2687 = vpop.permute.xlu0 %2686
        %2688 = vrot.lane.b32.xlu0 %v2503, 96
        %v2689 = vpop.permute.xlu0 %2688
        %2690 = vrot.lane.b32.xlu0 %v2504, 96
        %v2691 = vpop.permute.xlu0 %2690
        %2692 = vrot.lane.b32.xlu0 %v2505, 96
        %v2693 = vpop.permute.xlu0 %2692
        %2694 = vrot.lane.b32.xlu0 %v2506, 96
        %v2695 = vpop.permute.xlu0 %2694
        %2696 = vrot.lane.b32.xlu0 %v2507, 96
        %v2697 = vpop.permute.xlu0 %2696
        %2698 = vrot.lane.b32.xlu0 %v2508, 96
        %v2699 = vpop.permute.xlu0 %2698
        %2700 = vrot.lane.b32.xlu0 %v2509, 96
        %v2701 = vpop.permute.xlu0 %2700
        %v2710 = vsel %vm657, %v2445, %v2527
        %v2711 = vsel %vm657, %v2446, %v2529
        %v2712 = vsel %vm657, %v2447, %v2531
        %v2713 = vsel %vm657, %v2448, %v2533
        %v2714 = vsel %vm657, %v2449, %v2535
        %v2715 = vsel %vm657, %v2450, %v2537
        %v2716 = vsel %vm657, %v2451, %v2539
        %v2717 = vsel %vm657, %v2452, %v2541
        %v2718 = vsel %vm1152, %v2710, %v2559
        %v2719 = vsel %vm1152, %v2711, %v2561
        %v2720 = vsel %vm1152, %v2712, %v2563
        %v2721 = vsel %vm1152, %v2713, %v2565
        %v2722 = vsel %vm1152, %v2714, %v2567
        %v2723 = vsel %vm1152, %v2715, %v2569
        %v2724 = vsel %vm1152, %v2716, %v2571
        %v2725 = vsel %vm1152, %v2717, %v2573
        %v2726 = vsel %vm1161, %v2718, %v2591
        %v2727 = vsel %vm1161, %v2719, %v2593
        %v2728 = vsel %vm1161, %v2720, %v2595
        %v2729 = vsel %vm1161, %v2721, %v2597
        %v2730 = vsel %vm1161, %v2722, %v2599
        %v2731 = vsel %vm1161, %v2723, %v2601
        %v2732 = vsel %vm1161, %v2724, %v2603
        %v2733 = vsel %vm1161, %v2725, %v2605
        %v2734 = vsel %vm657, %v2477, %v2623
        %v2735 = vsel %vm657, %v2478, %v2625
        %v2736 = vsel %vm657, %v2479, %v2627
        %v2737 = vsel %vm657, %v2480, %v2629
        %v2738 = vsel %vm657, %v2481, %v2631
        %v2739 = vsel %vm657, %v2482, %v2633
        %v2740 = vsel %vm657, %v2483, %v2635
        %v2741 = vsel %vm657, %v2484, %v2637
        %v2742 = vsel %vm1152, %v2734, %v2655
        %v2743 = vsel %vm1152, %v2735, %v2657
        %v2744 = vsel %vm1152, %v2736, %v2659
        %v2745 = vsel %vm1152, %v2737, %v2661
        %v2746 = vsel %vm1152, %v2738, %v2663
        %v2747 = vsel %vm1152, %v2739, %v2665
        %v2748 = vsel %vm1152, %v2740, %v2667
        %v2749 = vsel %vm1152, %v2741, %v2669
        %v2750 = vsel %vm1161, %v2742, %v2687
        %v2751 = vsel %vm1161, %v2743, %v2689
        %v2752 = vsel %vm1161, %v2744, %v2691
        %v2753 = vsel %vm1161, %v2745, %v2693
        %v2754 = vsel %vm1161, %v2746, %v2695
        %v2755 = vsel %vm1161, %v2747, %v2697
        %v2756 = vsel %vm1161, %v2748, %v2699
        %v2757 = vsel %vm1161, %v2749, %v2701
        %v2758 = vld [vmem:[%s11] sm:$0xf]
        %v2759 = vld [vmem:[%s11 + $0x4] sm:$0xf]
        %v2760 = vld [vmem:[%s11 + $0x8] sm:$0xf]
        %v2761 = vld [vmem:[%s11 + $0xc] sm:$0xf]
        %v2762 = vld [vmem:[%s11 + $0x10] sm:$0xf]
        %v2763 = vld [vmem:[%s11 + $0x14] sm:$0xf]
        %v2764 = vld [vmem:[%s11 + $0x18] sm:$0xf]
        %v2765 = vld [vmem:[%s11 + $0x1c] sm:$0xf]
        %v2766 = vld [vmem:[%s11 + $0x20] sm:$0xf]
        %v2767 = vld [vmem:[%s11 + $0x24] sm:$0xf]
        %v2768 = vld [vmem:[%s11 + $0x28] sm:$0xf]
        %v2769 = vld [vmem:[%s11 + $0x2c] sm:$0xf]
        %v2770 = vld [vmem:[%s11 + $0x30] sm:$0xf]
        %v2771 = vld [vmem:[%s11 + $0x34] sm:$0xf]
        %v2772 = vld [vmem:[%s11 + $0x38] sm:$0xf]
        %v2773 = vld [vmem:[%s11 + $0x3c] sm:$0xf]
        %v2774 = vld [vmem:[%s11 + $0x40] sm:$0xf]
        %v2775 = vld [vmem:[%s11 + $0x44] sm:$0xf]
        %v2776 = vld [vmem:[%s11 + $0x48] sm:$0xf]
        %v2777 = vld [vmem:[%s11 + $0x4c] sm:$0xf]
        %v2778 = vld [vmem:[%s11 + $0x50] sm:$0xf]
        %v2779 = vld [vmem:[%s11 + $0x54] sm:$0xf]
        %v2780 = vld [vmem:[%s11 + $0x58] sm:$0xf]
        %v2781 = vld [vmem:[%s11 + $0x5c] sm:$0xf]
        %v2782 = vld [vmem:[%s11 + $0x60] sm:$0xf]
        %v2783 = vld [vmem:[%s11 + $0x64] sm:$0xf]
        %v2784 = vld [vmem:[%s11 + $0x68] sm:$0xf]
        %v2785 = vld [vmem:[%s11 + $0x6c] sm:$0xf]
        %v2786 = vld [vmem:[%s11 + $0x70] sm:$0xf]
        %v2787 = vld [vmem:[%s11 + $0x74] sm:$0xf]
        %v2788 = vld [vmem:[%s11 + $0x78] sm:$0xf]
        %v2789 = vld [vmem:[%s11 + $0x7c] sm:$0xf]
        %v2790 = vld [vmem:[%s11 + $0x80] sm:$0xf]
        %v2791 = vld [vmem:[%s11 + $0x84] sm:$0xf]
        %v2792 = vld [vmem:[%s11 + $0x88] sm:$0xf]
        %v2793 = vld [vmem:[%s11 + $0x8c] sm:$0xf]
        %v2794 = vpack.c.bf16 %v2727, %v2726
        %v2795 = vpack.c.bf16 %v2751, %v2750
        %v2796 = vpack.c.bf16 %v2511, %v2510
        %v2797 = vpack.c.bf16 %v2729, %v2728
        %v2798 = vpack.c.bf16 %v2753, %v2752
        %v2799 = vpack.c.bf16 %v2513, %v2512
        %v2800 = vpack.c.bf16 %v2731, %v2730
        %v2801 = vpack.c.bf16 %v2755, %v2754
        %v2802 = vpack.c.bf16 %v2515, %v2514
        %v2803 = vpack.c.bf16 %v2733, %v2732
        %v2804 = vpack.c.bf16 %v2757, %v2756
        %v2805 = vpack.c.bf16 %v2517, %v2516
        %v2806 = vld [vmem:[%s12] sm:$0x1]
        %v2808 = vlaneseq
        %v2809 = vshrl.u32 %v2808, 7
        %v2810 = vsub.s32 0, %v2809
        %v2811 = vrot.slane %v2806, %v2810
        %v2849 = vunpack.c.l.b16 %v2758
        %v2850 = vunpack.c.l.b16 %v2759
        %v2851 = vunpack.c.l.b16 %v2760
        %v2852 = vunpack.c.l.b16 %v2761
        %v2853 = vunpack.c.l.b16 %v2762
        %v2854 = vunpack.c.l.b16 %v2763
        %v2855 = vunpack.c.l.b16 %v2764
        %v2856 = vunpack.c.l.b16 %v2765
        %v2857 = vunpack.c.l.b16 %v2766
        %v2858 = vunpack.c.l.b16 %v2767
        %v2859 = vunpack.c.l.b16 %v2768
        %v2860 = vunpack.c.l.b16 %v2769
        %v2861 = vunpack.c.l.b16 %v2770
        %v2862 = vunpack.c.l.b16 %v2771
        %v2863 = vunpack.c.l.b16 %v2772
        %v2864 = vunpack.c.l.b16 %v2773
        %v2865 = vunpack.c.l.b16 %v2774
        %v2866 = vunpack.c.l.b16 %v2775
        %v2867 = vunpack.c.l.b16 %v2776
        %v2868 = vunpack.c.l.b16 %v2777
        %v2869 = vunpack.c.l.b16 %v2778
        %v2870 = vunpack.c.l.b16 %v2779
        %v2871 = vunpack.c.l.b16 %v2780
        %v2872 = vunpack.c.l.b16 %v2781
        %v2873 = vunpack.c.l.b16 %v2782
        %v2874 = vunpack.c.l.b16 %v2783
        %v2875 = vunpack.c.l.b16 %v2784
        %v2876 = vunpack.c.l.b16 %v2785
        %v2877 = vunpack.c.l.b16 %v2786
        %v2878 = vunpack.c.l.b16 %v2787
        %v2879 = vunpack.c.l.b16 %v2788
        %v2880 = vunpack.c.l.b16 %v2789
        %v2881 = vunpack.c.l.b16 %v2790
        %v2882 = vunpack.c.l.b16 %v2791
        %v2883 = vunpack.c.l.b16 %v2792
        %v2884 = vunpack.c.l.b16 %v2793
        %v2885 = vpack.c.b16 %v2850, %v2849
        %v2886 = vpack.c.b16 %v2852, %v2851
        %v2887 = vpack.c.b16 %v2854, %v2853
        %v2888 = vpack.c.b16 %v2856, %v2855
        %v2889 = vpack.c.b16 %v2858, %v2857
        %v2890 = vpack.c.b16 %v2860, %v2859
        %v2891 = vpack.c.b16 %v2862, %v2861
        %v2892 = vpack.c.b16 %v2864, %v2863
        %v2893 = vpack.c.b16 %v2866, %v2865
        %v2894 = vpack.c.b16 %v2868, %v2867
        %v2895 = vpack.c.b16 %v2870, %v2869
        %v2896 = vpack.c.b16 %v2872, %v2871
        %v2897 = vpack.c.b16 %v2874, %v2873
        %v2898 = vpack.c.b16 %v2876, %v2875
        %v2899 = vpack.c.b16 %v2878, %v2877
        %v2900 = vpack.c.b16 %v2880, %v2879
        %v2901 = vpack.c.b16 %v2882, %v2881
        %v2902 = vpack.c.b16 %v2884, %v2883
        %v2922 = vsel %vm657, %v2796, 0
        %v2925 = vsel %vm657, %v2799, 0
        %v2928 = vsel %vm657, %v2802, 0
        %v2931 = vsel %vm657, %v2805, 0
        %2933 = vmatprep.subr.bf16.mxu0 0
        %2934 = vmatpush1.bf16.msra.mxu0 %v2892
        %2935 = vmatprep.subr.bf16.mxu0 0
        %2936 = vmatpush1.bf16.msra.mxu0 %v2891
        %2937 = vmatprep.subr.bf16.mxu0 0
        %2938 = vmatpush1.bf16.msra.mxu0 %v2890
        %2939 = vmatprep.subr.bf16.mxu0 0
        %2940 = vmatpush1.bf16.msra.mxu0 %v2889
        %2941 = vmatprep.subr.bf16.mxu0 0
        %2942 = vmatpush1.bf16.msra.mxu0 %v2888
        %2943 = vmatprep.subr.bf16.mxu0 0
        %2944 = vmatpush1.bf16.msra.mxu0 %v2887
        %2945 = vmatprep.subr.bf16.mxu0 0
        %2946 = vmatpush1.bf16.msra.mxu0 %v2886
        %2947 = vmatprep.subr.bf16.mxu0 0
        %2948 = vmatpush1.bf16.msra.mxu0 %v2885
        %2949 = vmatprep.subr.bf16.mxu0 0
        %2950 = vmatpush2.bf16.msra.mxu0 %v2900
        %2951 = vmatprep.subr.bf16.mxu0 0
        %2952 = vmatpush2.bf16.msra.mxu0 %v2899
        %2953 = vmatprep.subr.bf16.mxu0 0
        %2954 = vmatpush2.bf16.msra.mxu0 %v2898
        %2955 = vmatprep.subr.bf16.mxu0 0
        %2956 = vmatpush2.bf16.msra.mxu0 %v2897
        %2957 = vmatprep.subr.bf16.mxu0 0
        %2958 = vmatpush2.bf16.msra.mxu0 %v2896
        %2959 = vmatprep.subr.bf16.mxu0 0
        %2960 = vmatpush2.bf16.msra.mxu0 %v2895
        %2961 = vmatprep.subr.bf16.mxu0 0
        %2962 = vmatpush2.bf16.msra.mxu0 %v2894
        %2963 = vmatprep.subr.bf16.mxu0 0
        %2964 = vmatpush2.bf16.msra.mxu0 %v2893
        %2965 = vmatprep.mubr.bf16.mxu0 %v2795
        %2966 = vmatmul.mubr.bf16.gmra.mxu0 %v2794
        %v2967 = vpop.f32.mrf.mxu0
        %v2968 = vadd.f32 %v2811, %v2967
        %v2969 = vpop.f32.mrf.mxu0
        %v2970 = vpop.f32.mrf.mxu0
        %v2971 = vadd.f32 %v2811, %v2970
        %v2972 = vpop.f32.mrf.mxu0
        %2973 = vmatprep.mubr.bf16.mxu0 %v2798
        %2974 = vmatmul.mubr.bf16.gmra.mxu0 %v2797
        %v2975 = vpop.f32.mrf.mxu0
        %v2976 = vadd.f32 %v2811, %v2975
        %v2977 = vpop.f32.mrf.mxu0
        %v2978 = vpop.f32.mrf.mxu0
        %v2979 = vadd.f32 %v2811, %v2978
        %v2980 = vpop.f32.mrf.mxu0
        %2981 = vmatprep.mubr.bf16.mxu0 %v2801
        %2982 = vmatmul.mubr.bf16.gmra.mxu0 %v2800
        %v2983 = vpop.f32.mrf.mxu0
        %v2984 = vadd.f32 %v2811, %v2983
        %v2985 = vpop.f32.mrf.mxu0
        %v2986 = vpop.f32.mrf.mxu0
        %v2987 = vadd.f32 %v2811, %v2986
        %v2988 = vpop.f32.mrf.mxu0
        %2989 = vmatprep.mubr.bf16.mxu0 %v2804
        %2990 = vmatmul.mubr.bf16.gmra.mxu0 %v2803
        %v2991 = vpop.f32.mrf.mxu0
        %v2992 = vadd.f32 %v2811, %v2991
        %v2993 = vpop.f32.mrf.mxu0
        %v2994 = vpop.f32.mrf.mxu0
        %v2995 = vadd.f32 %v2811, %v2994
        %v2996 = vpop.f32.mrf.mxu0
        %2997 = vdwg.mxu0
        %2998 = vmatprep.subr.bf16.mxu0 0
        %2999 = vmatpush1.bf16.msra.mxu0 0
        %3000 = vmatprep.subr.bf16.mxu0 0
        %3001 = vmatpush1.bf16.msra.mxu0 0
        %3002 = vmatprep.subr.bf16.mxu0 0
        %3003 = vmatpush1.bf16.msra.mxu0 0
        %3004 = vmatprep.subr.bf16.mxu0 0
        %3005 = vmatpush1.bf16.msra.mxu0 0
        %3006 = vmatprep.subr.bf16.mxu0 0
        %3007 = vmatpush1.bf16.msra.mxu0 0
        %3008 = vmatprep.subr.bf16.mxu0 0
        %3009 = vmatpush1.bf16.msra.mxu0 0
        %3010 = vmatprep.subr.bf16.mxu0 0
        %3011 = vmatpush1.bf16.msra.mxu0 %v2902
        %3012 = vmatprep.subr.bf16.mxu0 0
        %3013 = vmatpush1.bf16.msra.mxu0 %v2901
        %3014 = vmatprep.subr.bf16.mxu0 0
        %3015 = vmatpush2.bf16.msra.mxu0 0
        %3016 = vmatprep.subr.bf16.mxu0 0
        %3017 = vmatpush2.bf16.msra.mxu0 0
        %3018 = vmatprep.subr.bf16.mxu0 0
        %3019 = vmatpush2.bf16.msra.mxu0 0
        %3020 = vmatprep.subr.bf16.mxu0 0
        %3021 = vmatpush2.bf16.msra.mxu0 0
        %3022 = vmatprep.subr.bf16.mxu0 0
        %3023 = vmatpush2.bf16.msra.mxu0 0
        %3024 = vmatprep.subr.bf16.mxu0 0
        %3025 = vmatpush2.bf16.msra.mxu0 0
        %3026 = vmatprep.subr.bf16.mxu0 0
        %3027 = vmatpush2.bf16.msra.mxu0 0
        %3028 = vmatprep.subr.bf16.mxu0 0
        %3029 = vmatpush2.bf16.msra.mxu0 0
        %3030 = vmatprep.mubr.bf16.mxu0 0
        %3031 = vmatmul.mubr.bf16.gmra.mxu0 %v2922
        %v3032 = vpop.f32.mrf.mxu0
        %v3033 = vadd.f32 %v2968, %v3032
        %v3034 = vpop.f32.mrf.mxu0
        %v3035 = vpop.f32.mrf.mxu0
        %v3036 = vadd.f32 %v2971, %v3035
        %v3037 = vpop.f32.mrf.mxu0
        %3038 = vmatprep.mubr.bf16.mxu0 0
        %3039 = vmatmul.mubr.bf16.gmra.mxu0 %v2925
        %v3040 = vpop.f32.mrf.mxu0
        %v3041 = vadd.f32 %v2976, %v3040
        %v3042 = vpop.f32.mrf.mxu0
        %v3043 = vpop.f32.mrf.mxu0
        %v3044 = vadd.f32 %v2979, %v3043
        %v3045 = vpop.f32.mrf.mxu0
        %3046 = vmatprep.mubr.bf16.mxu0 0
        %3047 = vmatmul.mubr.bf16.gmra.mxu0 %v2928
        %v3048 = vpop.f32.mrf.mxu0
        %v3049 = vadd.f32 %v2984, %v3048
        %v3050 = vpop.f32.mrf.mxu0
        %v3051 = vpop.f32.mrf.mxu0
        %v3052 = vadd.f32 %v2987, %v3051
        %v3053 = vpop.f32.mrf.mxu0
        %3054 = vmatprep.mubr.bf16.mxu0 0
        %3055 = vmatmul.mubr.bf16.gmra.mxu0 %v2931
        %v3056 = vpop.f32.mrf.mxu0
        %v3057 = vadd.f32 %v2992, %v3056
        %v3058 = vpop.f32.mrf.mxu0
        %v3059 = vpop.f32.mrf.mxu0
        %v3060 = vadd.f32 %v2995, %v3059
        %v3061 = vpop.f32.mrf.mxu0
        %3062 = vdwg.mxu0
        %v3063 = vmax.f32 %v3033, 0.0
        %v3064 = vmax.f32 %v3036, 0.0
        %v3065 = vmax.f32 %v3041, 0.0
        %v3066 = vmax.f32 %v3044, 0.0
        %v3067 = vmax.f32 %v3049, 0.0
        %v3068 = vmax.f32 %v3052, 0.0
        %v3069 = vmax.f32 %v3057, 0.0
        %v3070 = vmax.f32 %v3060, 0.0
        %s3071 = scalar_lea.vmem [#allocation5], 16
        %vm3072 = vcmask 130048
        %3073 = vst.msk [vmem:[%s3071 + $0x1] sm:$0xff] %vm3072, %v3063
        %3074 = vst.msk [vmem:[%s3071 + $0x11] sm:$0xff] %vm3072, %v3064
        %3075 = vst.msk [vmem:[%s3071 + $0x21] sm:$0xff] %vm3072, %v3065
        %3076 = vst.msk [vmem:[%s3071 + $0x31] sm:$0xff] %vm3072, %v3066
        %3077 = vst.msk [vmem:[%s3071 + $0x41] sm:$0xff] %vm3072, %v3067
        %3078 = vst.msk [vmem:[%s3071 + $0x51] sm:$0xff] %vm3072, %v3068
        %3079 = vst.msk [vmem:[%s3071 + $0x61] sm:$0xff] %vm3072, %v3069
        %3080 = vst.msk [vmem:[%s3071 + $0x71] sm:$0xff] %vm3072, %v3070
        %v3081 = vld [vmem:[#allocation5] sm:$0xff]
        %v3082 = vld [vmem:[#allocation5 + $0x10] sm:$0xff]
        %v3083 = vld [vmem:[#allocation5 + $0x20] sm:$0xff]
        %v3084 = vld [vmem:[#allocation5 + $0x30] sm:$0xff]
        %v3085 = vld [vmem:[#allocation5 + $0x40] sm:$0xff]
        %v3086 = vld [vmem:[#allocation5 + $0x50] sm:$0xff]
        %v3087 = vld [vmem:[#allocation5 + $0x60] sm:$0xff]
        %v3088 = vld [vmem:[#allocation5 + $0x70] sm:$0xff]
        %v3089 = vld [vmem:[#allocation5 + $0x1] sm:$0xff]
        %v3090 = vld [vmem:[#allocation5 + $0x11] sm:$0xff]
        %v3091 = vld [vmem:[#allocation5 + $0x21] sm:$0xff]
        %v3092 = vld [vmem:[#allocation5 + $0x31] sm:$0xff]
        %v3093 = vld [vmem:[#allocation5 + $0x41] sm:$0xff]
        %v3094 = vld [vmem:[#allocation5 + $0x51] sm:$0xff]
        %v3095 = vld [vmem:[#allocation5 + $0x61] sm:$0xff]
        %v3096 = vld [vmem:[#allocation5 + $0x71] sm:$0xff]
        %v3097 = vld [vmem:[#allocation5 + $0x2] sm:$0xff]
        %v3098 = vld [vmem:[#allocation5 + $0x12] sm:$0xff]
        %v3099 = vld [vmem:[#allocation5 + $0x22] sm:$0xff]
        %v3100 = vld [vmem:[#allocation5 + $0x32] sm:$0xff]
        %v3101 = vld [vmem:[#allocation5 + $0x42] sm:$0xff]
        %v3102 = vld [vmem:[#allocation5 + $0x52] sm:$0xff]
        %v3103 = vld [vmem:[#allocation5 + $0x62] sm:$0xff]
        %v3104 = vld [vmem:[#allocation5 + $0x72] sm:$0xff]
        %v3105 = vld [vmem:[%s3071] sm:$0xff]
        %v3106 = vld [vmem:[%s3071 + $0x10] sm:$0xff]
        %v3107 = vld [vmem:[%s3071 + $0x20] sm:$0xff]
        %v3108 = vld [vmem:[%s3071 + $0x30] sm:$0xff]
        %v3109 = vld [vmem:[%s3071 + $0x40] sm:$0xff]
        %v3110 = vld [vmem:[%s3071 + $0x50] sm:$0xff]
        %v3111 = vld [vmem:[%s3071 + $0x60] sm:$0xff]
        %v3112 = vld [vmem:[%s3071 + $0x70] sm:$0xff]
        %v3113 = vld [vmem:[%s3071 + $0x1] sm:$0xff]
        %v3114 = vld [vmem:[%s3071 + $0x11] sm:$0xff]
        %v3115 = vld [vmem:[%s3071 + $0x21] sm:$0xff]
        %v3116 = vld [vmem:[%s3071 + $0x31] sm:$0xff]
        %v3117 = vld [vmem:[%s3071 + $0x41] sm:$0xff]
        %v3118 = vld [vmem:[%s3071 + $0x51] sm:$0xff]
        %v3119 = vld [vmem:[%s3071 + $0x61] sm:$0xff]
        %v3120 = vld [vmem:[%s3071 + $0x71] sm:$0xff]
        %v3121 = vld [vmem:[%s3071 + $0x2] sm:$0xff]
        %v3122 = vld [vmem:[%s3071 + $0x12] sm:$0xff]
        %v3123 = vld [vmem:[%s3071 + $0x22] sm:$0xff]
        %v3124 = vld [vmem:[%s3071 + $0x32] sm:$0xff]
        %v3125 = vld [vmem:[%s3071 + $0x42] sm:$0xff]
        %v3126 = vld [vmem:[%s3071 + $0x52] sm:$0xff]
        %v3127 = vld [vmem:[%s3071 + $0x62] sm:$0xff]
        %v3128 = vld [vmem:[%s3071 + $0x72] sm:$0xff]
        %s3129 = scalar_lea.vmem [#allocation5], 32
        %v3130 = vld [vmem:[%s3129] sm:$0xff]
        %v3131 = vld [vmem:[%s3129 + $0x10] sm:$0xff]
        %v3132 = vld [vmem:[%s3129 + $0x20] sm:$0xff]
        %v3133 = vld [vmem:[%s3129 + $0x30] sm:$0xff]
        %v3134 = vld [vmem:[%s3129 + $0x40] sm:$0xff]
        %v3135 = vld [vmem:[%s3129 + $0x50] sm:$0xff]
        %v3136 = vld [vmem:[%s3129 + $0x60] sm:$0xff]
        %v3137 = vld [vmem:[%s3129 + $0x70] sm:$0xff]
        %v3138 = vld [vmem:[%s3129 + $0x1] sm:$0xff]
        %v3139 = vld [vmem:[%s3129 + $0x11] sm:$0xff]
        %v3140 = vld [vmem:[%s3129 + $0x21] sm:$0xff]
        %v3141 = vld [vmem:[%s3129 + $0x31] sm:$0xff]
        %v3142 = vld [vmem:[%s3129 + $0x41] sm:$0xff]
        %v3143 = vld [vmem:[%s3129 + $0x51] sm:$0xff]
        %v3144 = vld [vmem:[%s3129 + $0x61] sm:$0xff]
        %v3145 = vld [vmem:[%s3129 + $0x71] sm:$0xff]
        %v3146 = vld [vmem:[%s3129 + $0x2] sm:$0xff]
        %v3147 = vld [vmem:[%s3129 + $0x12] sm:$0xff]
        %v3148 = vld [vmem:[%s3129 + $0x22] sm:$0xff]
        %v3149 = vld [vmem:[%s3129 + $0x32] sm:$0xff]
        %v3150 = vld [vmem:[%s3129 + $0x42] sm:$0xff]
        %v3151 = vld [vmem:[%s3129 + $0x52] sm:$0xff]
        %v3152 = vld [vmem:[%s3129 + $0x62] sm:$0xff]
        %v3153 = vld [vmem:[%s3129 + $0x72] sm:$0xff]
        %3162 = vrot.lane.b32.xlu0 %v3089, 16
        %v3163 = vpop.permute.xlu0 %3162
        %3164 = vrot.lane.b32.xlu0 %v3090, 16
        %v3165 = vpop.permute.xlu0 %3164
        %3166 = vrot.lane.b32.xlu0 %v3091, 16
        %v3167 = vpop.permute.xlu0 %3166
        %3168 = vrot.lane.b32.xlu0 %v3092, 16
        %v3169 = vpop.permute.xlu0 %3168
        %3170 = vrot.lane.b32.xlu0 %v3093, 16
        %v3171 = vpop.permute.xlu0 %3170
        %3172 = vrot.lane.b32.xlu0 %v3094, 16
        %v3173 = vpop.permute.xlu0 %3172
        %3174 = vrot.lane.b32.xlu0 %v3095, 16
        %v3175 = vpop.permute.xlu0 %3174
        %3176 = vrot.lane.b32.xlu0 %v3096, 16
        %v3177 = vpop.permute.xlu0 %3176
        %3194 = vrot.lane.b32.xlu0 %v3097, 32
        %v3195 = vpop.permute.xlu0 %3194
        %3196 = vrot.lane.b32.xlu0 %v3098, 32
        %v3197 = vpop.permute.xlu0 %3196
        %3198 = vrot.lane.b32.xlu0 %v3099, 32
        %v3199 = vpop.permute.xlu0 %3198
        %3200 = vrot.lane.b32.xlu0 %v3100, 32
        %v3201 = vpop.permute.xlu0 %3200
        %3202 = vrot.lane.b32.xlu0 %v3101, 32
        %v3203 = vpop.permute.xlu0 %3202
        %3204 = vrot.lane.b32.xlu0 %v3102, 32
        %v3205 = vpop.permute.xlu0 %3204
        %3206 = vrot.lane.b32.xlu0 %v3103, 32
        %v3207 = vpop.permute.xlu0 %3206
        %3208 = vrot.lane.b32.xlu0 %v3104, 32
        %v3209 = vpop.permute.xlu0 %3208
        %3226 = vrot.lane.b32.xlu0 %v3105, 48
        %v3227 = vpop.permute.xlu0 %3226
        %3228 = vrot.lane.b32.xlu0 %v3106, 48
        %v3229 = vpop.permute.xlu0 %3228
        %3230 = vrot.lane.b32.xlu0 %v3107, 48
        %v3231 = vpop.permute.xlu0 %3230
        %3232 = vrot.lane.b32.xlu0 %v3108, 48
        %v3233 = vpop.permute.xlu0 %3232
        %3234 = vrot.lane.b32.xlu0 %v3109, 48
        %v3235 = vpop.permute.xlu0 %3234
        %3236 = vrot.lane.b32.xlu0 %v3110, 48
        %v3237 = vpop.permute.xlu0 %3236
        %3238 = vrot.lane.b32.xlu0 %v3111, 48
        %v3239 = vpop.permute.xlu0 %3238
        %3240 = vrot.lane.b32.xlu0 %v3112, 48
        %v3241 = vpop.permute.xlu0 %3240
        %3258 = vrot.lane.b32.xlu0 %v3113, 64
        %v3259 = vpop.permute.xlu0 %3258
        %3260 = vrot.lane.b32.xlu0 %v3114, 64
        %v3261 = vpop.permute.xlu0 %3260
        %3262 = vrot.lane.b32.xlu0 %v3115, 64
        %v3263 = vpop.permute.xlu0 %3262
        %3264 = vrot.lane.b32.xlu0 %v3116, 64
        %v3265 = vpop.permute.xlu0 %3264
        %3266 = vrot.lane.b32.xlu0 %v3117, 64
        %v3267 = vpop.permute.xlu0 %3266
        %3268 = vrot.lane.b32.xlu0 %v3118, 64
        %v3269 = vpop.permute.xlu0 %3268
        %3270 = vrot.lane.b32.xlu0 %v3119, 64
        %v3271 = vpop.permute.xlu0 %3270
        %3272 = vrot.lane.b32.xlu0 %v3120, 64
        %v3273 = vpop.permute.xlu0 %3272
        %3290 = vrot.lane.b32.xlu0 %v3121, 80
        %v3291 = vpop.permute.xlu0 %3290
        %3292 = vrot.lane.b32.xlu0 %v3122, 80
        %v3293 = vpop.permute.xlu0 %3292
        %3294 = vrot.lane.b32.xlu0 %v3123, 80
        %v3295 = vpop.permute.xlu0 %3294
        %3296 = vrot.lane.b32.xlu0 %v3124, 80
        %v3297 = vpop.permute.xlu0 %3296
        %3298 = vrot.lane.b32.xlu0 %v3125, 80
        %v3299 = vpop.permute.xlu0 %3298
        %3300 = vrot.lane.b32.xlu0 %v3126, 80
        %v3301 = vpop.permute.xlu0 %3300
        %3302 = vrot.lane.b32.xlu0 %v3127, 80
        %v3303 = vpop.permute.xlu0 %3302
        %3304 = vrot.lane.b32.xlu0 %v3128, 80
        %v3305 = vpop.permute.xlu0 %3304
        %3322 = vrot.lane.b32.xlu0 %v3130, 96
        %v3323 = vpop.permute.xlu0 %3322
        %3324 = vrot.lane.b32.xlu0 %v3131, 96
        %v3325 = vpop.permute.xlu0 %3324
        %3326 = vrot.lane.b32.xlu0 %v3132, 96
        %v3327 = vpop.permute.xlu0 %3326
        %3328 = vrot.lane.b32.xlu0 %v3133, 96
        %v3329 = vpop.permute.xlu0 %3328
        %3330 = vrot.lane.b32.xlu0 %v3134, 96
        %v3331 = vpop.permute.xlu0 %3330
        %3332 = vrot.lane.b32.xlu0 %v3135, 96
        %v3333 = vpop.permute.xlu0 %3332
        %3334 = vrot.lane.b32.xlu0 %v3136, 96
        %v3335 = vpop.permute.xlu0 %3334
        %3336 = vrot.lane.b32.xlu0 %v3137, 96
        %v3337 = vpop.permute.xlu0 %3336
        %3354 = vrot.lane.b32.xlu0 %v3138, 112
        %v3355 = vpop.permute.xlu0 %3354
        %3356 = vrot.lane.b32.xlu0 %v3139, 112
        %v3357 = vpop.permute.xlu0 %3356
        %3358 = vrot.lane.b32.xlu0 %v3140, 112
        %v3359 = vpop.permute.xlu0 %3358
        %3360 = vrot.lane.b32.xlu0 %v3141, 112
        %v3361 = vpop.permute.xlu0 %3360
        %3362 = vrot.lane.b32.xlu0 %v3142, 112
        %v3363 = vpop.permute.xlu0 %3362
        %3364 = vrot.lane.b32.xlu0 %v3143, 112
        %v3365 = vpop.permute.xlu0 %3364
        %3366 = vrot.lane.b32.xlu0 %v3144, 112
        %v3367 = vpop.permute.xlu0 %3366
        %3368 = vrot.lane.b32.xlu0 %v3145, 112
        %v3369 = vpop.permute.xlu0 %3368
        %v3378 = vsel %vm3072, %v3081, %v3163
        %v3379 = vsel %vm3072, %v3082, %v3165
        %v3380 = vsel %vm3072, %v3083, %v3167
        %v3381 = vsel %vm3072, %v3084, %v3169
        %v3382 = vsel %vm3072, %v3085, %v3171
        %v3383 = vsel %vm3072, %v3086, %v3173
        %v3384 = vsel %vm3072, %v3087, %v3175
        %v3385 = vsel %vm3072, %v3088, %v3177
        %v3386 = vsel %vm657, %v3378, %v3195
        %v3387 = vsel %vm657, %v3379, %v3197
        %v3388 = vsel %vm657, %v3380, %v3199
        %v3389 = vsel %vm657, %v3381, %v3201
        %v3390 = vsel %vm657, %v3382, %v3203
        %v3391 = vsel %vm657, %v3383, %v3205
        %v3392 = vsel %vm657, %v3384, %v3207
        %v3393 = vsel %vm657, %v3385, %v3209
        %v3394 = vsel %vm2102, %v3386, %v3227
        %v3395 = vsel %vm2102, %v3387, %v3229
        %v3396 = vsel %vm2102, %v3388, %v3231
        %v3397 = vsel %vm2102, %v3389, %v3233
        %v3398 = vsel %vm2102, %v3390, %v3235
        %v3399 = vsel %vm2102, %v3391, %v3237
        %v3400 = vsel %vm2102, %v3392, %v3239
        %v3401 = vsel %vm2102, %v3393, %v3241
        %v3402 = vsel %vm1152, %v3394, %v3259
        %v3403 = vsel %vm1152, %v3395, %v3261
        %v3404 = vsel %vm1152, %v3396, %v3263
        %v3405 = vsel %vm1152, %v3397, %v3265
        %v3406 = vsel %vm1152, %v3398, %v3267
        %v3407 = vsel %vm1152, %v3399, %v3269
        %v3408 = vsel %vm1152, %v3400, %v3271
        %v3409 = vsel %vm1152, %v3401, %v3273
        %vm3410 = vcmask 654336
        %v3411 = vsel %vm3410, %v3402, %v3291
        %v3412 = vsel %vm3410, %v3403, %v3293
        %v3413 = vsel %vm3410, %v3404, %v3295
        %v3414 = vsel %vm3410, %v3405, %v3297
        %v3415 = vsel %vm3410, %v3406, %v3299
        %v3416 = vsel %vm3410, %v3407, %v3301
        %v3417 = vsel %vm3410, %v3408, %v3303
        %v3418 = vsel %vm3410, %v3409, %v3305
        %v3419 = vsel %vm1161, %v3411, %v3323
        %v3420 = vsel %vm1161, %v3412, %v3325
        %v3421 = vsel %vm1161, %v3413, %v3327
        %v3422 = vsel %vm1161, %v3414, %v3329
        %v3423 = vsel %vm1161, %v3415, %v3331
        %v3424 = vsel %vm1161, %v3416, %v3333
        %v3425 = vsel %vm1161, %v3417, %v3335
        %v3426 = vsel %vm1161, %v3418, %v3337
        %vm3427 = vcmask 916480
        %v3428 = vsel %vm3427, %v3419, %v3355
        %v3429 = vsel %vm3427, %v3420, %v3357
        %v3430 = vsel %vm3427, %v3421, %v3359
        %v3431 = vsel %vm3427, %v3422, %v3361
        %v3432 = vsel %vm3427, %v3423, %v3363
        %v3433 = vsel %vm3427, %v3424, %v3365
        %v3434 = vsel %vm3427, %v3425, %v3367
        %v3435 = vsel %vm3427, %v3426, %v3369
        %v3436 = vld [vmem:[%s13] sm:$0xf]
        %v3437 = vld [vmem:[%s13 + $0x4] sm:$0xf]
        %v3438 = vld [vmem:[%s13 + $0x8] sm:$0xf]
        %v3439 = vld [vmem:[%s13 + $0xc] sm:$0xf]
        %v3440 = vld [vmem:[%s13 + $0x10] sm:$0xf]
        %v3441 = vld [vmem:[%s13 + $0x14] sm:$0xf]
        %v3442 = vld [vmem:[%s13 + $0x18] sm:$0xf]
        %v3443 = vld [vmem:[%s13 + $0x1c] sm:$0xf]
        %v3444 = vld [vmem:[%s13 + $0x20] sm:$0xf]
        %v3445 = vld [vmem:[%s13 + $0x24] sm:$0xf]
        %v3446 = vld [vmem:[%s13 + $0x28] sm:$0xf]
        %v3447 = vld [vmem:[%s13 + $0x2c] sm:$0xf]
        %v3448 = vld [vmem:[%s13 + $0x30] sm:$0xf]
        %v3449 = vld [vmem:[%s13 + $0x34] sm:$0xf]
        %v3450 = vld [vmem:[%s13 + $0x38] sm:$0xf]
        %v3451 = vld [vmem:[%s13 + $0x3c] sm:$0xf]
        %v3452 = vld [vmem:[%s13 + $0x40] sm:$0xf]
        %v3453 = vld [vmem:[%s13 + $0x44] sm:$0xf]
        %v3454 = vpack.c.bf16 %v3429, %v3428
        %v3455 = vpack.c.bf16 %v3147, %v3146
        %v3456 = vpack.c.bf16 %v3431, %v3430
        %v3457 = vpack.c.bf16 %v3149, %v3148
        %v3458 = vpack.c.bf16 %v3433, %v3432
        %v3459 = vpack.c.bf16 %v3151, %v3150
        %v3460 = vpack.c.bf16 %v3435, %v3434
        %v3461 = vpack.c.bf16 %v3153, %v3152
        %v3462 = vld [vmem:[%s14] sm:$0x1]
        %v3464 = vlaneseq
        %v3465 = vshrl.u32 %v3464, 7
        %v3466 = vsub.s32 0, %v3465
        %v3467 = vrot.slane %v3462, %v3466
        %v3487 = vunpack.c.l.b16 %v3436
        %v3488 = vunpack.c.l.b16 %v3437
        %v3489 = vunpack.c.l.b16 %v3438
        %v3490 = vunpack.c.l.b16 %v3439
        %v3491 = vunpack.c.l.b16 %v3440
        %v3492 = vunpack.c.l.b16 %v3441
        %v3493 = vunpack.c.l.b16 %v3442
        %v3494 = vunpack.c.l.b16 %v3443
        %v3495 = vunpack.c.l.b16 %v3444
        %v3496 = vunpack.c.l.b16 %v3445
        %v3497 = vunpack.c.l.b16 %v3446
        %v3498 = vunpack.c.l.b16 %v3447
        %v3499 = vunpack.c.l.b16 %v3448
        %v3500 = vunpack.c.l.b16 %v3449
        %v3501 = vunpack.c.l.b16 %v3450
        %v3502 = vunpack.c.l.b16 %v3451
        %v3503 = vunpack.c.l.b16 %v3452
        %v3504 = vunpack.c.l.b16 %v3453
        %v3505 = vpack.c.b16 %v3488, %v3487
        %v3506 = vpack.c.b16 %v3490, %v3489
        %v3507 = vpack.c.b16 %v3492, %v3491
        %v3508 = vpack.c.b16 %v3494, %v3493
        %v3509 = vpack.c.b16 %v3496, %v3495
        %v3510 = vpack.c.b16 %v3498, %v3497
        %v3511 = vpack.c.b16 %v3500, %v3499
        %v3512 = vpack.c.b16 %v3502, %v3501
        %v3513 = vpack.c.b16 %v3504, %v3503
        %v3524 = vsel %vm3072, %v3455, 0
        %v3527 = vsel %vm3072, %v3457, 0
        %v3530 = vsel %vm3072, %v3459, 0
        %v3533 = vsel %vm3072, %v3461, 0
        %3535 = vmatprep.subr.bf16.mxu0 0
        %3536 = vmatpush1.bf16.msra.mxu0 %v3512
        %3537 = vmatprep.subr.bf16.mxu0 0
        %3538 = vmatpush1.bf16.msra.mxu0 %v3511
        %3539 = vmatprep.subr.bf16.mxu0 0
        %3540 = vmatpush1.bf16.msra.mxu0 %v3510
        %3541 = vmatprep.subr.bf16.mxu0 0
        %3542 = vmatpush1.bf16.msra.mxu0 %v3509
        %3543 = vmatprep.subr.bf16.mxu0 0
        %3544 = vmatpush1.bf16.msra.mxu0 %v3508
        %3545 = vmatprep.subr.bf16.mxu0 0
        %3546 = vmatpush1.bf16.msra.mxu0 %v3507
        %3547 = vmatprep.subr.bf16.mxu0 0
        %3548 = vmatpush1.bf16.msra.mxu0 %v3506
        %3549 = vmatprep.subr.bf16.mxu0 0
        %3550 = vmatpush1.bf16.msra.mxu0 %v3505
        %3551 = vmatprep.subr.bf16.mxu0 0
        %3552 = vmatpush2.bf16.msra.mxu0 0
        %3553 = vmatprep.subr.bf16.mxu0 0
        %3554 = vmatpush2.bf16.msra.mxu0 0
        %3555 = vmatprep.subr.bf16.mxu0 0
        %3556 = vmatpush2.bf16.msra.mxu0 0
        %3557 = vmatprep.subr.bf16.mxu0 0
        %3558 = vmatpush2.bf16.msra.mxu0 0
        %3559 = vmatprep.subr.bf16.mxu0 0
        %3560 = vmatpush2.bf16.msra.mxu0 0
        %3561 = vmatprep.subr.bf16.mxu0 0
        %3562 = vmatpush2.bf16.msra.mxu0 0
        %3563 = vmatprep.subr.bf16.mxu0 0
        %3564 = vmatpush2.bf16.msra.mxu0 0
        %3565 = vmatprep.subr.bf16.mxu0 0
        %3566 = vmatpush2.bf16.msra.mxu0 %v3513
        %3567 = vmatprep.mubr.bf16.mxu0 %v3524
        %3568 = vmatmul.mubr.bf16.gmra.mxu0 %v3454
        %v3569 = vpop.f32.mrf.mxu0
        %v3570 = vadd.f32 %v3467, %v3569
        %v3571 = vpop.f32.mrf.mxu0
        %v3572 = vpop.f32.mrf.mxu0
        %v3573 = vadd.f32 %v3467, %v3572
        %v3574 = vpop.f32.mrf.mxu0
        %3575 = vmatprep.mubr.bf16.mxu0 %v3527
        %3576 = vmatmul.mubr.bf16.gmra.mxu0 %v3456
        %v3577 = vpop.f32.mrf.mxu0
        %v3578 = vadd.f32 %v3467, %v3577
        %v3579 = vpop.f32.mrf.mxu0
        %v3580 = vpop.f32.mrf.mxu0
        %v3581 = vadd.f32 %v3467, %v3580
        %v3582 = vpop.f32.mrf.mxu0
        %3583 = vmatprep.mubr.bf16.mxu0 %v3530
        %3584 = vmatmul.mubr.bf16.gmra.mxu0 %v3458
        %v3585 = vpop.f32.mrf.mxu0
        %v3586 = vadd.f32 %v3467, %v3585
        %v3587 = vpop.f32.mrf.mxu0
        %v3588 = vpop.f32.mrf.mxu0
        %v3589 = vadd.f32 %v3467, %v3588
        %v3590 = vpop.f32.mrf.mxu0
        %3591 = vmatprep.mubr.bf16.mxu0 %v3533
        %3592 = vmatmul.mubr.bf16.gmra.mxu0 %v3460
        %v3593 = vpop.f32.mrf.mxu0
        %v3594 = vadd.f32 %v3467, %v3593
        %v3595 = vpop.f32.mrf.mxu0
        %v3596 = vpop.f32.mrf.mxu0
        %v3597 = vadd.f32 %v3467, %v3596
        %v3598 = vpop.f32.mrf.mxu0
        %3599 = vdwg.mxu0
        %v3600 = vadd.f32 %v2428, %v3570
        %v3601 = vadd.f32 %v2429, %v3573
        %v3602 = vadd.f32 %v2430, %v3578
        %v3603 = vadd.f32 %v2431, %v3581
        %v3604 = vadd.f32 %v2432, %v3586
        %v3605 = vadd.f32 %v2433, %v3589
        %v3606 = vadd.f32 %v2434, %v3594
        %v3607 = vadd.f32 %v2435, %v3597
        %v3608 = vld [vmem:[%s15] sm:$0x1]
        %v3609 = vld [vmem:[%s16] sm:$0x1]
        %v3610 = vsel %vm657, %v3600, 0.0
        %3611 = vadd.xlane.f32.xlu0 %v3610
        %v3612 = vpop.xlane.xlu0 %3611
        %v3613 = vsel %vm657, %v3601, 0.0
        %3614 = vadd.xlane.f32.xlu0 %v3613
        %v3615 = vpop.xlane.xlu0 %3614
        %v3616 = vsel %vm657, %v3602, 0.0
        %3617 = vadd.xlane.f32.xlu0 %v3616
        %v3618 = vpop.xlane.xlu0 %3617
        %v3619 = vsel %vm657, %v3603, 0.0
        %3620 = vadd.xlane.f32.xlu0 %v3619
        %v3621 = vpop.xlane.xlu0 %3620
        %v3622 = vsel %vm657, %v3604, 0.0
        %3623 = vadd.xlane.f32.xlu0 %v3622
        %v3624 = vpop.xlane.xlu0 %3623
        %v3625 = vsel %vm657, %v3605, 0.0
        %3626 = vadd.xlane.f32.xlu0 %v3625
        %v3627 = vpop.xlane.xlu0 %3626
        %v3628 = vsel %vm657, %v3606, 0.0
        %3629 = vadd.xlane.f32.xlu0 %v3628
        %v3630 = vpop.xlane.xlu0 %3629
        %v3631 = vsel %vm657, %v3607, 0.0
        %3632 = vadd.xlane.f32.xlu0 %v3631
        %v3633 = vpop.xlane.xlu0 %3632
        %v3634 = vmul.f32 %v3612, %v761
        %v3635 = vmul.f32 %v3615, %v761
        %v3636 = vmul.f32 %v3618, %v761
        %v3637 = vmul.f32 %v3621, %v761
        %v3638 = vmul.f32 %v3624, %v761
        %v3639 = vmul.f32 %v3627, %v761
        %v3640 = vmul.f32 %v3630, %v761
        %v3641 = vmul.f32 %v3633, %v761
        %v3642 = vsub.f32 %v3600, %v3634
        %v3643 = vsub.f32 %v3601, %v3635
        %v3644 = vsub.f32 %v3602, %v3636
        %v3645 = vsub.f32 %v3603, %v3637
        %v3646 = vsub.f32 %v3604, %v3638
        %v3647 = vsub.f32 %v3605, %v3639
        %v3648 = vsub.f32 %v3606, %v3640
        %v3649 = vsub.f32 %v3607, %v3641
        %v3650 = vmul.f32 %v3642, %v3642
        %v3651 = vmul.f32 %v3643, %v3643
        %v3652 = vmul.f32 %v3644, %v3644
        %v3653 = vmul.f32 %v3645, %v3645
        %v3654 = vmul.f32 %v3646, %v3646
        %v3655 = vmul.f32 %v3647, %v3647
        %v3656 = vmul.f32 %v3648, %v3648
        %v3657 = vmul.f32 %v3649, %v3649
        %v3658 = vsel %vm657, %v3650, 0.0
        %3659 = vadd.xlane.f32.xlu0 %v3658
        %v3660 = vpop.xlane.xlu0 %3659
        %v3661 = vsel %vm657, %v3651, 0.0
        %3662 = vadd.xlane.f32.xlu0 %v3661
        %v3663 = vpop.xlane.xlu0 %3662
        %v3664 = vsel %vm657, %v3652, 0.0
        %3665 = vadd.xlane.f32.xlu0 %v3664
        %v3666 = vpop.xlane.xlu0 %3665
        %v3667 = vsel %vm657, %v3653, 0.0
        %3668 = vadd.xlane.f32.xlu0 %v3667
        %v3669 = vpop.xlane.xlu0 %3668
        %v3670 = vsel %vm657, %v3654, 0.0
        %3671 = vadd.xlane.f32.xlu0 %v3670
        %v3672 = vpop.xlane.xlu0 %3671
        %v3673 = vsel %vm657, %v3655, 0.0
        %3674 = vadd.xlane.f32.xlu0 %v3673
        %v3675 = vpop.xlane.xlu0 %3674
        %v3676 = vsel %vm657, %v3656, 0.0
        %3677 = vadd.xlane.f32.xlu0 %v3676
        %v3678 = vpop.xlane.xlu0 %3677
        %v3679 = vsel %vm657, %v3657, 0.0
        %3680 = vadd.xlane.f32.xlu0 %v3679
        %v3681 = vpop.xlane.xlu0 %3680
        %v3682 = vmul.f32 %v3660, %v761
        %v3683 = vmul.f32 %v3663, %v761
        %v3684 = vmul.f32 %v3666, %v761
        %v3685 = vmul.f32 %v3669, %v761
        %v3686 = vmul.f32 %v3672, %v761
        %v3687 = vmul.f32 %v3675, %v761
        %v3688 = vmul.f32 %v3678, %v761
        %v3689 = vmul.f32 %v3681, %v761
        %v3690 = vadd.f32 %v3682, 1e-05
        %v3691 = vadd.f32 %v3683, 1e-05
        %v3692 = vadd.f32 %v3684, 1e-05
        %v3693 = vadd.f32 %v3685, 1e-05
        %v3694 = vadd.f32 %v3686, 1e-05
        %v3695 = vadd.f32 %v3687, 1e-05
        %v3696 = vadd.f32 %v3688, 1e-05
        %v3697 = vadd.f32 %v3689, 1e-05
        %v3698 = vrsqrt.pop %v3690
        %v3699 = vrsqrt.pop %v3691
        %v3700 = vrsqrt.pop %v3692
        %v3701 = vrsqrt.pop %v3693
        %v3702 = vrsqrt.pop %v3694
        %v3703 = vrsqrt.pop %v3695
        %v3704 = vrsqrt.pop %v3696
        %v3705 = vrsqrt.pop %v3697
        %v3706 = vmul.f32 %v3642, %v3698
        %v3707 = vmul.f32 %v3643, %v3699
        %v3708 = vmul.f32 %v3644, %v3700
        %v3709 = vmul.f32 %v3645, %v3701
        %v3710 = vmul.f32 %v3646, %v3702
        %v3711 = vmul.f32 %v3647, %v3703
        %v3712 = vmul.f32 %v3648, %v3704
        %v3713 = vmul.f32 %v3649, %v3705
        %v3715 = vlaneseq
        %v3716 = vshrl.u32 %v3715, 7
        %v3717 = vsub.s32 0, %v3716
        %v3718 = vrot.slane %v3608, %v3717
        %v3720 = vmul.f32 %v3706, %v3718
        %v3721 = vmul.f32 %v3707, %v3718
        %v3722 = vmul.f32 %v3708, %v3718
        %v3723 = vmul.f32 %v3709, %v3718
        %v3724 = vmul.f32 %v3710, %v3718
        %v3725 = vmul.f32 %v3711, %v3718
        %v3726 = vmul.f32 %v3712, %v3718
        %v3727 = vmul.f32 %v3713, %v3718
        %v3729 = vlaneseq
        %v3730 = vshrl.u32 %v3729, 7
        %v3731 = vsub.s32 0, %v3730
        %v3732 = vrot.slane %v3609, %v3731
        %v3734 = vadd.f32 %v3720, %v3732
        %v3735 = vadd.f32 %v3721, %v3732
        %v3736 = vadd.f32 %v3722, %v3732
        %v3737 = vadd.f32 %v3723, %v3732
        %v3738 = vadd.f32 %v3724, %v3732
        %v3739 = vadd.f32 %v3725, %v3732
        %v3740 = vadd.f32 %v3726, %v3732
        %v3741 = vadd.f32 %v3727, %v3732
        %3742 = vst.msk [vmem:[#allocation6] sm:$0xff] %vm657, %v3734
        %3743 = vst.msk [vmem:[#allocation6 + $0x8] sm:$0xff] %vm657, %v3735
        %3744 = vst.msk [vmem:[#allocation6 + $0x10] sm:$0xff] %vm657, %v3736
        %3745 = vst.msk [vmem:[#allocation6 + $0x18] sm:$0xff] %vm657, %v3737
        %3746 = vst.msk [vmem:[#allocation6 + $0x20] sm:$0xff] %vm657, %v3738
        %3747 = vst.msk [vmem:[#allocation6 + $0x28] sm:$0xff] %vm657, %v3739
        %3748 = vst.msk [vmem:[#allocation6 + $0x30] sm:$0xff] %vm657, %v3740
        %3749 = vst.msk [vmem:[#allocation6 + $0x38] sm:$0xff] %vm657, %v3741
        // Predicated region
        $region93: #{safecount_multiblock_forward.1} parent=87 // pred_check
          %p3750 = pneg %p399
        $region94: #{safecount_multiblock_forward.1} parent=87 // pred_check_branch
          %3752 = sbr.rel (%p3750) target = $region96
        $region95: #{safecount_multiblock_forward.1} parent=87 // pred_region
          %s3754 = ssub.s32 1024, 1024
          %3755 = vsyncadd [#allocation7], %s3754
          %s3756 = sshll.u32 [#allocation6], 4
          %s3757 = int_to_ptr.vmem [resolvable:$true] %s3756
          %3762 = dma.vmem_to_hbm [thread:$0]  %s3757, 1024, %s17, [#allocation7], 128, 128, 8
        $region96: #{safecount_multiblock_forward.1} parent=87 // pred_fallthru
          _
        // Predicated region
        $region97: #{safecount_multiblock_forward.1} parent=87 // pred_check
          %p3763 = pneg %p399
        $region98: #{safecount_multiblock_forward.1} parent=87 // pred_check_branch
          %3765 = sbr.rel (%p3763) target = $region100
        $region99: #{safecount_multiblock_forward.1} parent=87 // pred_region
          %3766 = dma.done [#allocation7], 1024
        $region100: #{safecount_multiblock_forward.1} parent=87 // pred_fallthru
          _
      $region88: #{safecount_multiblock_forward.1} parent=5 // pred_fallthru
        _
      %p3767 = scmp.le.s32.totalorder 2, %s24
      // Predicated region
      $region101: #{safecount_multiblock_forward.1} parent=5 // pred_check
        %p3768 = pneg %p3767
      $region102: #{safecount_multiblock_forward.1} parent=5 // pred_check_branch
        %3770 = sbr.rel (%p3768) target = $region104
      $region103: #{safecount_multiblock_forward.1} parent=5 // pred_region
        %s3771 = ssub.s32 %s24, 2
      $region104: #{safecount_multiblock_forward.1} parent=5 // pred_fallthru
        _
    $region6: #{safecount_multiblock_forward.1} parent=1 // loop_footer
      %s28 = sadd.s32 1, %s24
    $region7: #{safecount_multiblock_forward.1} parent=1 // loop_footer_branch
      %23 = sbr.rel target = $region3
    $region8: #{safecount_multiblock_forward.1} parent=1 // loop_exit
      _
    %3772 = vsyncpa [#allocation7], 1
    %s3773 = scalar_lea.sflag [#allocation7], 1
    %3774 = vsyncpa %s3773, 1

</llo_original>
